<compile_context>
chip_gen: v5e
topology: v5e:2x2
jax: 0.10.0
libtpu: 0.0.40
codegen_flags: <defaults>
</compile_context>

<pallas_src>
import functools

import numpy as np
import jax
import jax.numpy as jnp
from jax.experimental import pallas as pl
from jax.experimental.pallas import tpu as pltpu


# Architecture constants fixed by the reference nn.Module.
K1, ST1 = 8, 4     # conv1: Conv2d(C, 32, kernel_size=8, stride=4)
K2, ST2 = 4, 2     # conv2: Conv2d(32, 64, kernel_size=4, stride=2)
K3, ST3 = 3, 1     # conv3: Conv2d(64, 64, kernel_size=3, stride=1)


# ----------------------------- fused Pallas kernel ---------------------------

def _dueling_fused_kernel(p1_ref, w1_ref, b1_ref, w2_ref, b2_ref,
                          w3_ref, b3_ref, wh_ref, bh_ref, wo_ref, bo_ref,
                          o_ref, y2_scr, *, bp, b_real, num_actions,
                          n_k2, n_p2):
    """Whole Dueling_DQN forward on one VMEM-resident working set.

    p1_ref: (n_k2, n_p2*bp, K1*K1*C) bf16 composite conv1 patches.  For conv2
    kernel position k, p1_ref[k] is conv1's patch matrix at exactly the conv1
    output positions feeding k, rows ordered (conv2-output-position, batch).
    """
    rows2 = n_p2 * bp
    w1 = w1_ref[...]                       # (K1*K1*C, 32) bf16, hoisted
    b1 = b1_ref[...]                       # (1, 32) f32

    # conv1 + conv2 fused: accumulate over the n_k2 conv2 kernel positions.
    acc2 = jnp.zeros((rows2, w2_ref.shape[2]), jnp.float32)
    for k in range(n_k2):
        y1 = jnp.dot(p1_ref[k], w1, preferred_element_type=jnp.float32) + b1
        y1 = jnp.maximum(y1, 0.0).astype(jnp.bfloat16)          # conv1 ReLU
        acc2 = acc2 + jnp.dot(y1, w2_ref[k],
                              preferred_element_type=jnp.float32)
    # conv2 bias + ReLU, staged in f32 VMEM scratch (rows ordered (pos, batch))
    y2_scr[...] = jnp.maximum(acc2 + b2_ref[...], 0.0)

    # conv3 (spatial output 1x1): accumulate over the n_p2 input positions;
    # each 8-aligned block of bp rows is one position, all batch rows.
    acc3 = jnp.zeros((bp, w3_ref.shape[2]), jnp.float32)
    for p in range(n_p2):
        y2p = y2_scr[p * bp:(p + 1) * bp, :].astype(jnp.bfloat16)
        acc3 = acc3 + jnp.dot(y2p, w3_ref[p],
                              preferred_element_type=jnp.float32)
    feat = jnp.maximum(acc3 + b3_ref[...], 0.0).astype(jnp.bfloat16)  # (bp, 64)

    # Both head hidden layers as one GEMM (advantage | value concatenated).
    h = jnp.dot(feat, wh_ref[...], preferred_element_type=jnp.float32)
    h = jnp.maximum(h + bh_ref[...], 0.0).astype(jnp.bfloat16)        # (bp, 2H)

    # Block-diagonal output GEMM: cols [0:A) = advantage, col A = value.
    out = (jnp.dot(h, wo_ref[...], preferred_element_type=jnp.float32)
           + bo_ref[...])                                             # (bp, A+1)
    adv = out[:, :num_actions]
    val = out[:, num_actions:num_actions + 1]

    # Global advantage mean (torch `advantage.mean()` with no dim), restricted
    # to the real (unpadded) batch rows.
    row = jax.lax.broadcasted_iota(jnp.int32, adv.shape, 0)
    adv_sum = jnp.sum(jnp.where(row < b_real, adv, 0.0))
    mean = adv_sum * (1.0 / float(b_real * num_actions))
    o_ref[...] = val + adv - mean


def _fused_forward_pallas(patches, prep, *, bp, b_real, num_actions,
                          n_k2, n_p2):
    w1, b1 = prep["w1"], prep["b1"]
    w2, b2 = prep["w2"], prep["b2"]
    w3, b3 = prep["w3"], prep["b3"]
    wh, bh = prep["wh"], prep["bh"]
    wo, bo = prep["wo"], prep["bo"]

    rows2 = n_p2 * bp
    kd = patches.shape[2]
    c1, c2, c3 = w1.shape[1], w2.shape[2], w3.shape[2]
    hid2, no = wh.shape[1], wo.shape[1]

    flops = (2 * n_k2 * rows2 * (kd * c1 + c1 * c2)
             + 2 * n_p2 * bp * c2 * c3
             + 2 * bp * (c3 * hid2 + hid2 * no))
    args = (patches, w1, b1, w2, b2, w3, b3, wh, bh, wo, bo)
    bytes_accessed = (sum(int(a.size) * a.dtype.itemsize for a in args)
                      + bp * num_actions * 4)

    in_specs = [
        pl.BlockSpec(patches.shape, lambda i: (0, 0, 0)),
        pl.BlockSpec(w1.shape, lambda i: (0, 0)),
        pl.BlockSpec(b1.shape, lambda i: (0, 0)),
        pl.BlockSpec(w2.shape, lambda i: (0, 0, 0)),
        pl.BlockSpec(b2.shape, lambda i: (0, 0)),
        pl.BlockSpec(w3.shape, lambda i: (0, 0, 0)),
        pl.BlockSpec(b3.shape, lambda i: (0, 0)),
        pl.BlockSpec(wh.shape, lambda i: (0, 0)),
        pl.BlockSpec(bh.shape, lambda i: (0, 0)),
        pl.BlockSpec(wo.shape, lambda i: (0, 0)),
        pl.BlockSpec(bo.shape, lambda i: (0, 0)),
    ]

    kernel = functools.partial(
        _dueling_fused_kernel, bp=bp, b_real=b_real,
        num_actions=num_actions, n_k2=n_k2, n_p2=n_p2)

    return pl.pallas_call(
        kernel,
        out_shape=jax.ShapeDtypeStruct((bp, num_actions), jnp.float32),
        grid=(1,),
        in_specs=in_specs,
        out_specs=pl.BlockSpec((bp, num_actions), lambda i: (0, 0)),
        scratch_shapes=[pltpu.VMEM((rows2, c2), jnp.float32)],
        compiler_params=pltpu.CompilerParams(
            dimension_semantics=("arbitrary",)),
        cost_estimate=pl.CostEstimate(
            flops=flops, transcendentals=0, bytes_accessed=bytes_accessed),
    )(*args)


# ------------------------------- JAX glue ------------------------------------

def _composite_patch_indices(S, C):
    """int32[(K2*K2, P2*P2, K1*K1*C)] flat NCHW indices of the composite
    conv1 patches, indexed by (conv2 kernel pos, conv2 output pos, (ki,kj,c))."""
    H1 = (S - K1) // ST1 + 1
    P2 = (H1 - K2) // ST2 + 1
    i = np.arange(K2).reshape(K2, 1, 1, 1, 1, 1, 1)
    j = np.arange(K2).reshape(1, K2, 1, 1, 1, 1, 1)
    oh = np.arange(P2).reshape(1, 1, P2, 1, 1, 1, 1)
    ow = np.arange(P2).reshape(1, 1, 1, P2, 1, 1, 1)
    ki = np.arange(K1).reshape(1, 1, 1, 1, K1, 1, 1)
    kj = np.arange(K1).reshape(1, 1, 1, 1, 1, K1, 1)
    c = np.arange(C).reshape(1, 1, 1, 1, 1, 1, C)
    h0 = (oh * ST2 + i) * ST1 + ki          # input row
    w0 = (ow * ST2 + j) * ST1 + kj          # input col
    flat = (c * S + h0) * S + w0            # (K2, K2, P2, P2, K1, K1, C)
    return flat.reshape(K2 * K2, P2 * P2, K1 * K1 * C).astype(np.int32)


def prepare_params(p):
    """One-time parameter re-layout + bf16 cast (hoisted out of the forward)."""
    O1, C1, kh1, kw1 = p["c1_w"].shape
    O2, C2, kh2, kw2 = p["c2_w"].shape
    O3, C3, kh3, kw3 = p["c3_w"].shape
    hid = p["a1_w"].shape[1]
    A = p["a2_w"].shape[1]

    w1 = p["c1_w"].transpose(2, 3, 1, 0).reshape(kh1 * kw1 * C1, O1)
    w2 = p["c2_w"].transpose(2, 3, 1, 0).reshape(kh2 * kw2, C2, O2)
    w3 = p["c3_w"].transpose(2, 3, 1, 0).reshape(kh3 * kw3, C3, O3)
    wh = jnp.concatenate([p["a1_w"], p["v1_w"]], axis=1)      # (feat, 2*hid)
    bh = jnp.concatenate([p["a1_b"], p["v1_b"]], axis=0)
    wo = jnp.zeros((2 * hid, A + 1), jnp.float32)             # block-diagonal
    wo = wo.at[:hid, :A].set(p["a2_w"]).at[hid:, A:].set(p["v2_w"])
    bo = jnp.concatenate([p["a2_b"], p["v2_b"]], axis=0)

    rowf32 = lambda a: a.reshape(1, -1).astype(jnp.float32)
    return {
        "w1": w1.astype(jnp.bfloat16), "b1": rowf32(p["c1_b"]),
        "w2": w2.astype(jnp.bfloat16), "b2": rowf32(p["c2_b"]),
        "w3": w3.astype(jnp.bfloat16), "b3": rowf32(p["c3_b"]),
        "wh": wh.astype(jnp.bfloat16), "bh": rowf32(bh),
        "wo": wo.astype(jnp.bfloat16), "bo": rowf32(bo),
    }


def dueling_dqn_forward(prep, x):
    """x: (B, C, S, S) NCHW float32 -> Q-values (B, num_actions) float32."""
    B, C, S, S2 = x.shape
    assert S == S2
    H1 = (S - K1) // ST1 + 1
    H2 = (H1 - K2) // ST2 + 1
    H3 = (H2 - K3) // ST3 + 1
    # TODO(synk): the fused kernel assumes conv3's spatial output is 1x1 (true
    # for 36x36 inputs); other resolutions (e.g. 84x84 Atari) would need a
    # spatial loop / real im2col for conv3 instead of per-position accumulation.
    assert H3 == 1 and H2 == K3, "fused head requires conv3 output of 1x1"

    n_k2 = K2 * K2
    n_p2 = H2 * H2
    num_actions = prep["bo"].shape[1] - 1
    bp = max(8, ((B + 7) // 8) * 8)        # pad batch to a sublane multiple

    # Composite im2col: one gather (constant indices) builds conv1 patches
    # pre-arranged so that the conv1 GEMM output is conv2's patch matrix.
    idx = jnp.asarray(_composite_patch_indices(S, C))       # (n_k2, n_p2, 256)
    xf = x.reshape(B, C * S * S).astype(jnp.bfloat16)
    if bp != B:
        xf = jnp.pad(xf, ((0, bp - B), (0, 0)))
    patches = jnp.take(xf, idx, axis=1)                     # (bp, n_k2, n_p2, kd)
    patches = patches.transpose(1, 2, 0, 3).reshape(n_k2, n_p2 * bp, -1)

    q = _fused_forward_pallas(patches, prep, bp=bp, b_real=B,
                              num_actions=num_actions, n_k2=n_k2, n_p2=n_p2)
    return q[:B]


# ---------------------------------- main -------------------------------------

if __name__ == "__main__":
    B, C, S = 2, 4, 36          # conv stack: 36 -> 8 -> 3 -> 1
    num_actions = 6

    H1 = (S - K1) // ST1 + 1
    H2 = (H1 - K2) // ST2 + 1
    H3 = (H2 - K3) // ST3 + 1
    feat_size = 64 * H3 * H3     # == Dueling_DQN.feature_size()

    key = jax.random.PRNGKey(0)
    keys = jax.random.split(key, 16)

    def init(k, shape, scale=0.05):
        return (scale * jax.random.normal(k, shape)).astype(jnp.float32)

    params = {
        # conv weights in PyTorch layout (O, C, kh, kw)
        "c1_w": init(keys[0], (32, C, 8, 8)),     "c1_b": init(keys[1], (32,)),
        "c2_w": init(keys[2], (64, 32, 4, 4)),    "c2_b": init(keys[3], (64,)),
        "c3_w": init(keys[4], (64, 64, 3, 3)),    "c3_b": init(keys[5], (64,)),
        # dense weights stored (in, out)
        "a1_w": init(keys[6], (feat_size, 512)),  "a1_b": init(keys[7], (512,)),
        "a2_w": init(keys[8], (512, num_actions)),
        "a2_b": init(keys[9], (num_actions,)),
        "v1_w": init(keys[10], (feat_size, 512)), "v1_b": init(keys[11], (512,)),
        "v2_w": init(keys[12], (512, 1)),         "v2_b": init(keys[13], (1,)),
    }

    prep = prepare_params(params)               # one-time re-layout / bf16 cast
    x = jax.random.normal(keys[14], (B, C, S, S), dtype=jnp.float32)

    fwd = jax.jit(dueling_dqn_forward)
    out = jax.block_until_ready(fwd(prep, x))
    assert out.shape == (B, num_actions) and out.dtype == jnp.float32
    print("KERNEL_OK")
</pallas_src>

<mosaic_0001>
module attributes {stable_mosaic.version = 11 : i64} {
  func.func @_dueling_fused_kernel(%arg0: i32, %arg1: memref<16x72x256xbf16, #tpu.memory_space<vmem>>, %arg2: memref<256x32xbf16, #tpu.memory_space<vmem>>, %arg3: memref<1x32xf32, #tpu.memory_space<vmem>>, %arg4: memref<16x32x64xbf16, #tpu.memory_space<vmem>>, %arg5: memref<1x64xf32, #tpu.memory_space<vmem>>, %arg6: memref<9x64x64xbf16, #tpu.memory_space<vmem>>, %arg7: memref<1x64xf32, #tpu.memory_space<vmem>>, %arg8: memref<64x1024xbf16, #tpu.memory_space<vmem>>, %arg9: memref<1x1024xf32, #tpu.memory_space<vmem>>, %arg10: memref<1024x7xbf16, #tpu.memory_space<vmem>>, %arg11: memref<1x7xf32, #tpu.memory_space<vmem>>, %arg12: memref<8x6xf32, #tpu.memory_space<vmem>>, %arg13: memref<72x64xf32, #tpu.memory_space<vmem>>) attributes {dimension_semantics = [#tpu.dimension_semantics<arbitrary>], iteration_bounds = array<i64: 1>, scalar_prefetch = 0 : i64, scratch_operands = 1 : i64, tpu.core_type = #tpu.core_type<tc>, window_params = [{pipeline_mode = #tpu.pipeline_mode<synchronous>, transform_indices = @transform_0, window_bounds = array<i64: 16, 72, 256>}, {pipeline_mode = #tpu.pipeline_mode<synchronous>, transform_indices = @transform_1, window_bounds = array<i64: 256, 32>}, {pipeline_mode = #tpu.pipeline_mode<synchronous>, transform_indices = @transform_2, window_bounds = array<i64: 1, 32>}, {pipeline_mode = #tpu.pipeline_mode<synchronous>, transform_indices = @transform_3, window_bounds = array<i64: 16, 32, 64>}, {pipeline_mode = #tpu.pipeline_mode<synchronous>, transform_indices = @transform_4, window_bounds = array<i64: 1, 64>}, {pipeline_mode = #tpu.pipeline_mode<synchronous>, transform_indices = @transform_5, window_bounds = array<i64: 9, 64, 64>}, {pipeline_mode = #tpu.pipeline_mode<synchronous>, transform_indices = @transform_6, window_bounds = array<i64: 1, 64>}, {pipeline_mode = #tpu.pipeline_mode<synchronous>, transform_indices = @transform_7, window_bounds = array<i64: 64, 1024>}, {pipeline_mode = #tpu.pipeline_mode<synchronous>, transform_indices = @transform_8, window_bounds = array<i64: 1, 1024>}, {pipeline_mode = #tpu.pipeline_mode<synchronous>, transform_indices = @transform_9, window_bounds = array<i64: 1024, 7>}, {pipeline_mode = #tpu.pipeline_mode<synchronous>, transform_indices = @transform_10, window_bounds = array<i64: 1, 7>}, {pipeline_mode = #tpu.pipeline_mode<synchronous>, transform_indices = @transform_11, window_bounds = array<i64: 8, 6>}]} {
    %c0 = arith.constant 0 : index
    %c0_0 = arith.constant 0 : index
    %0 = vector.load %arg2[%c0, %c0_0] : memref<256x32xbf16, #tpu.memory_space<vmem>>, vector<256x32xbf16>
    %c0_1 = arith.constant 0 : index
    %c0_2 = arith.constant 0 : index
    %1 = vector.load %arg3[%c0_1, %c0_2] : memref<1x32xf32, #tpu.memory_space<vmem>>, vector<1x32xf32>
    %cst = arith.constant 0.000000e+00 : f32
    %2 = vector.broadcast %cst : f32 to vector<72x64xf32>
    %c0_3 = arith.constant 0 : index
    %c0_4 = arith.constant 0 : index
    %c0_5 = arith.constant 0 : index
    %3 = vector.load %arg1[%c0_3, %c0_4, %c0_5] : memref<16x72x256xbf16, #tpu.memory_space<vmem>>, vector<1x72x256xbf16>
    %4 = vector.shape_cast %3 : vector<1x72x256xbf16> to vector<72x256xbf16>
    %cst_6 = arith.constant dense<0.000000e+00> : vector<72x32xf32>
    %5 = tpu.matmul %4, %0, %cst_6 {dimension_numbers = #tpu.dot_dimension_numbers<[1], [0], [0], [1], [0, 0, 1, 1], [], []>} : vector<72x256xbf16>, vector<256x32xbf16>, vector<72x32xf32> -> vector<72x32xf32>
    %6 = vector.broadcast %1 : vector<1x32xf32> to vector<72x32xf32>
    %7 = arith.addf %5, %6 : vector<72x32xf32>
    %cst_7 = arith.constant 0.000000e+00 : f32
    %8 = vector.broadcast %cst_7 : f32 to vector<72x32xf32>
    %9 = arith.maximumf %7, %8 : vector<72x32xf32>
    %10 = arith.truncf %9 : vector<72x32xf32> to vector<72x32xbf16>
    %c0_8 = arith.constant 0 : index
    %c0_9 = arith.constant 0 : index
    %c0_10 = arith.constant 0 : index
    %11 = vector.load %arg4[%c0_8, %c0_9, %c0_10] : memref<16x32x64xbf16, #tpu.memory_space<vmem>>, vector<1x32x64xbf16>
    %12 = vector.shape_cast %11 : vector<1x32x64xbf16> to vector<32x64xbf16>
    %cst_11 = arith.constant dense<0.000000e+00> : vector<72x64xf32>
    %13 = tpu.matmul %10, %12, %cst_11 {dimension_numbers = #tpu.dot_dimension_numbers<[1], [0], [0], [1], [0, 0, 1, 1], [], []>} : vector<72x32xbf16>, vector<32x64xbf16>, vector<72x64xf32> -> vector<72x64xf32>
    %14 = arith.addf %2, %13 : vector<72x64xf32>
    %c1 = arith.constant 1 : index
    %c0_12 = arith.constant 0 : index
    %c0_13 = arith.constant 0 : index
    %15 = vector.load %arg1[%c1, %c0_12, %c0_13] : memref<16x72x256xbf16, #tpu.memory_space<vmem>>, vector<1x72x256xbf16>
    %16 = vector.shape_cast %15 : vector<1x72x256xbf16> to vector<72x256xbf16>
    %cst_14 = arith.constant dense<0.000000e+00> : vector<72x32xf32>
    %17 = tpu.matmul %16, %0, %cst_14 {dimension_numbers = #tpu.dot_dimension_numbers<[1], [0], [0], [1], [0, 0, 1, 1], [], []>} : vector<72x256xbf16>, vector<256x32xbf16>, vector<72x32xf32> -> vector<72x32xf32>
    %18 = vector.broadcast %1 : vector<1x32xf32> to vector<72x32xf32>
    %19 = arith.addf %17, %18 : vector<72x32xf32>
    %cst_15 = arith.constant 0.000000e+00 : f32
    %20 = vector.broadcast %cst_15 : f32 to vector<72x32xf32>
    %21 = arith.maximumf %19, %20 : vector<72x32xf32>
    %22 = arith.truncf %21 : vector<72x32xf32> to vector<72x32xbf16>
    %c1_16 = arith.constant 1 : index
    %c0_17 = arith.constant 0 : index
    %c0_18 = arith.constant 0 : index
    %23 = vector.load %arg4[%c1_16, %c0_17, %c0_18] : memref<16x32x64xbf16, #tpu.memory_space<vmem>>, vector<1x32x64xbf16>
    %24 = vector.shape_cast %23 : vector<1x32x64xbf16> to vector<32x64xbf16>
    %cst_19 = arith.constant dense<0.000000e+00> : vector<72x64xf32>
    %25 = tpu.matmul %22, %24, %cst_19 {dimension_numbers = #tpu.dot_dimension_numbers<[1], [0], [0], [1], [0, 0, 1, 1], [], []>} : vector<72x32xbf16>, vector<32x64xbf16>, vector<72x64xf32> -> vector<72x64xf32>
    %26 = arith.addf %14, %25 : vector<72x64xf32>
    %c2 = arith.constant 2 : index
    %c0_20 = arith.constant 0 : index
    %c0_21 = arith.constant 0 : index
    %27 = vector.load %arg1[%c2, %c0_20, %c0_21] : memref<16x72x256xbf16, #tpu.memory_space<vmem>>, vector<1x72x256xbf16>
    %28 = vector.shape_cast %27 : vector<1x72x256xbf16> to vector<72x256xbf16>
    %cst_22 = arith.constant dense<0.000000e+00> : vector<72x32xf32>
    %29 = tpu.matmul %28, %0, %cst_22 {dimension_numbers = #tpu.dot_dimension_numbers<[1], [0], [0], [1], [0, 0, 1, 1], [], []>} : vector<72x256xbf16>, vector<256x32xbf16>, vector<72x32xf32> -> vector<72x32xf32>
    %30 = vector.broadcast %1 : vector<1x32xf32> to vector<72x32xf32>
    %31 = arith.addf %29, %30 : vector<72x32xf32>
    %cst_23 = arith.constant 0.000000e+00 : f32
    %32 = vector.broadcast %cst_23 : f32 to vector<72x32xf32>
    %33 = arith.maximumf %31, %32 : vector<72x32xf32>
    %34 = arith.truncf %33 : vector<72x32xf32> to vector<72x32xbf16>
    %c2_24 = arith.constant 2 : index
    %c0_25 = arith.constant 0 : index
    %c0_26 = arith.constant 0 : index
    %35 = vector.load %arg4[%c2_24, %c0_25, %c0_26] : memref<16x32x64xbf16, #tpu.memory_space<vmem>>, vector<1x32x64xbf16>
    %36 = vector.shape_cast %35 : vector<1x32x64xbf16> to vector<32x64xbf16>
    %cst_27 = arith.constant dense<0.000000e+00> : vector<72x64xf32>
    %37 = tpu.matmul %34, %36, %cst_27 {dimension_numbers = #tpu.dot_dimension_numbers<[1], [0], [0], [1], [0, 0, 1, 1], [], []>} : vector<72x32xbf16>, vector<32x64xbf16>, vector<72x64xf32> -> vector<72x64xf32>
    %38 = arith.addf %26, %37 : vector<72x64xf32>
    %c3 = arith.constant 3 : index
    %c0_28 = arith.constant 0 : index
    %c0_29 = arith.constant 0 : index
    %39 = vector.load %arg1[%c3, %c0_28, %c0_29] : memref<16x72x256xbf16, #tpu.memory_space<vmem>>, vector<1x72x256xbf16>
    %40 = vector.shape_cast %39 : vector<1x72x256xbf16> to vector<72x256xbf16>
    %cst_30 = arith.constant dense<0.000000e+00> : vector<72x32xf32>
    %41 = tpu.matmul %40, %0, %cst_30 {dimension_numbers = #tpu.dot_dimension_numbers<[1], [0], [0], [1], [0, 0, 1, 1], [], []>} : vector<72x256xbf16>, vector<256x32xbf16>, vector<72x32xf32> -> vector<72x32xf32>
    %42 = vector.broadcast %1 : vector<1x32xf32> to vector<72x32xf32>
    %43 = arith.addf %41, %42 : vector<72x32xf32>
    %cst_31 = arith.constant 0.000000e+00 : f32
    %44 = vector.broadcast %cst_31 : f32 to vector<72x32xf32>
    %45 = arith.maximumf %43, %44 : vector<72x32xf32>
    %46 = arith.truncf %45 : vector<72x32xf32> to vector<72x32xbf16>
    %c3_32 = arith.constant 3 : index
    %c0_33 = arith.constant 0 : index
    %c0_34 = arith.constant 0 : index
    %47 = vector.load %arg4[%c3_32, %c0_33, %c0_34] : memref<16x32x64xbf16, #tpu.memory_space<vmem>>, vector<1x32x64xbf16>
    %48 = vector.shape_cast %47 : vector<1x32x64xbf16> to vector<32x64xbf16>
    %cst_35 = arith.constant dense<0.000000e+00> : vector<72x64xf32>
    %49 = tpu.matmul %46, %48, %cst_35 {dimension_numbers = #tpu.dot_dimension_numbers<[1], [0], [0], [1], [0, 0, 1, 1], [], []>} : vector<72x32xbf16>, vector<32x64xbf16>, vector<72x64xf32> -> vector<72x64xf32>
    %50 = arith.addf %38, %49 : vector<72x64xf32>
    %c4 = arith.constant 4 : index
    %c0_36 = arith.constant 0 : index
    %c0_37 = arith.constant 0 : index
    %51 = vector.load %arg1[%c4, %c0_36, %c0_37] : memref<16x72x256xbf16, #tpu.memory_space<vmem>>, vector<1x72x256xbf16>
    %52 = vector.shape_cast %51 : vector<1x72x256xbf16> to vector<72x256xbf16>
    %cst_38 = arith.constant dense<0.000000e+00> : vector<72x32xf32>
    %53 = tpu.matmul %52, %0, %cst_38 {dimension_numbers = #tpu.dot_dimension_numbers<[1], [0], [0], [1], [0, 0, 1, 1], [], []>} : vector<72x256xbf16>, vector<256x32xbf16>, vector<72x32xf32> -> vector<72x32xf32>
    %54 = vector.broadcast %1 : vector<1x32xf32> to vector<72x32xf32>
    %55 = arith.addf %53, %54 : vector<72x32xf32>
    %cst_39 = arith.constant 0.000000e+00 : f32
    %56 = vector.broadcast %cst_39 : f32 to vector<72x32xf32>
    %57 = arith.maximumf %55, %56 : vector<72x32xf32>
    %58 = arith.truncf %57 : vector<72x32xf32> to vector<72x32xbf16>
    %c4_40 = arith.constant 4 : index
    %c0_41 = arith.constant 0 : index
    %c0_42 = arith.constant 0 : index
    %59 = vector.load %arg4[%c4_40, %c0_41, %c0_42] : memref<16x32x64xbf16, #tpu.memory_space<vmem>>, vector<1x32x64xbf16>
    %60 = vector.shape_cast %59 : vector<1x32x64xbf16> to vector<32x64xbf16>
    %cst_43 = arith.constant dense<0.000000e+00> : vector<72x64xf32>
    %61 = tpu.matmul %58, %60, %cst_43 {dimension_numbers = #tpu.dot_dimension_numbers<[1], [0], [0], [1], [0, 0, 1, 1], [], []>} : vector<72x32xbf16>, vector<32x64xbf16>, vector<72x64xf32> -> vector<72x64xf32>
    %62 = arith.addf %50, %61 : vector<72x64xf32>
    %c5 = arith.constant 5 : index
    %c0_44 = arith.constant 0 : index
    %c0_45 = arith.constant 0 : index
    %63 = vector.load %arg1[%c5, %c0_44, %c0_45] : memref<16x72x256xbf16, #tpu.memory_space<vmem>>, vector<1x72x256xbf16>
    %64 = vector.shape_cast %63 : vector<1x72x256xbf16> to vector<72x256xbf16>
    %cst_46 = arith.constant dense<0.000000e+00> : vector<72x32xf32>
    %65 = tpu.matmul %64, %0, %cst_46 {dimension_numbers = #tpu.dot_dimension_numbers<[1], [0], [0], [1], [0, 0, 1, 1], [], []>} : vector<72x256xbf16>, vector<256x32xbf16>, vector<72x32xf32> -> vector<72x32xf32>
    %66 = vector.broadcast %1 : vector<1x32xf32> to vector<72x32xf32>
    %67 = arith.addf %65, %66 : vector<72x32xf32>
    %cst_47 = arith.constant 0.000000e+00 : f32
    %68 = vector.broadcast %cst_47 : f32 to vector<72x32xf32>
    %69 = arith.maximumf %67, %68 : vector<72x32xf32>
    %70 = arith.truncf %69 : vector<72x32xf32> to vector<72x32xbf16>
    %c5_48 = arith.constant 5 : index
    %c0_49 = arith.constant 0 : index
    %c0_50 = arith.constant 0 : index
    %71 = vector.load %arg4[%c5_48, %c0_49, %c0_50] : memref<16x32x64xbf16, #tpu.memory_space<vmem>>, vector<1x32x64xbf16>
    %72 = vector.shape_cast %71 : vector<1x32x64xbf16> to vector<32x64xbf16>
    %cst_51 = arith.constant dense<0.000000e+00> : vector<72x64xf32>
    %73 = tpu.matmul %70, %72, %cst_51 {dimension_numbers = #tpu.dot_dimension_numbers<[1], [0], [0], [1], [0, 0, 1, 1], [], []>} : vector<72x32xbf16>, vector<32x64xbf16>, vector<72x64xf32> -> vector<72x64xf32>
    %74 = arith.addf %62, %73 : vector<72x64xf32>
    %c6 = arith.constant 6 : index
    %c0_52 = arith.constant 0 : index
    %c0_53 = arith.constant 0 : index
    %75 = vector.load %arg1[%c6, %c0_52, %c0_53] : memref<16x72x256xbf16, #tpu.memory_space<vmem>>, vector<1x72x256xbf16>
    %76 = vector.shape_cast %75 : vector<1x72x256xbf16> to vector<72x256xbf16>
    %cst_54 = arith.constant dense<0.000000e+00> : vector<72x32xf32>
    %77 = tpu.matmul %76, %0, %cst_54 {dimension_numbers = #tpu.dot_dimension_numbers<[1], [0], [0], [1], [0, 0, 1, 1], [], []>} : vector<72x256xbf16>, vector<256x32xbf16>, vector<72x32xf32> -> vector<72x32xf32>
    %78 = vector.broadcast %1 : vector<1x32xf32> to vector<72x32xf32>
    %79 = arith.addf %77, %78 : vector<72x32xf32>
    %cst_55 = arith.constant 0.000000e+00 : f32
    %80 = vector.broadcast %cst_55 : f32 to vector<72x32xf32>
    %81 = arith.maximumf %79, %80 : vector<72x32xf32>
    %82 = arith.truncf %81 : vector<72x32xf32> to vector<72x32xbf16>
    %c6_56 = arith.constant 6 : index
    %c0_57 = arith.constant 0 : index
    %c0_58 = arith.constant 0 : index
    %83 = vector.load %arg4[%c6_56, %c0_57, %c0_58] : memref<16x32x64xbf16, #tpu.memory_space<vmem>>, vector<1x32x64xbf16>
    %84 = vector.shape_cast %83 : vector<1x32x64xbf16> to vector<32x64xbf16>
    %cst_59 = arith.constant dense<0.000000e+00> : vector<72x64xf32>
    %85 = tpu.matmul %82, %84, %cst_59 {dimension_numbers = #tpu.dot_dimension_numbers<[1], [0], [0], [1], [0, 0, 1, 1], [], []>} : vector<72x32xbf16>, vector<32x64xbf16>, vector<72x64xf32> -> vector<72x64xf32>
    %86 = arith.addf %74, %85 : vector<72x64xf32>
    %c7 = arith.constant 7 : index
    %c0_60 = arith.constant 0 : index
    %c0_61 = arith.constant 0 : index
    %87 = vector.load %arg1[%c7, %c0_60, %c0_61] : memref<16x72x256xbf16, #tpu.memory_space<vmem>>, vector<1x72x256xbf16>
    %88 = vector.shape_cast %87 : vector<1x72x256xbf16> to vector<72x256xbf16>
    %cst_62 = arith.constant dense<0.000000e+00> : vector<72x32xf32>
    %89 = tpu.matmul %88, %0, %cst_62 {dimension_numbers = #tpu.dot_dimension_numbers<[1], [0], [0], [1], [0, 0, 1, 1], [], []>} : vector<72x256xbf16>, vector<256x32xbf16>, vector<72x32xf32> -> vector<72x32xf32>
    %90 = vector.broadcast %1 : vector<1x32xf32> to vector<72x32xf32>
    %91 = arith.addf %89, %90 : vector<72x32xf32>
    %cst_63 = arith.constant 0.000000e+00 : f32
    %92 = vector.broadcast %cst_63 : f32 to vector<72x32xf32>
    %93 = arith.maximumf %91, %92 : vector<72x32xf32>
    %94 = arith.truncf %93 : vector<72x32xf32> to vector<72x32xbf16>
    %c7_64 = arith.constant 7 : index
    %c0_65 = arith.constant 0 : index
    %c0_66 = arith.constant 0 : index
    %95 = vector.load %arg4[%c7_64, %c0_65, %c0_66] : memref<16x32x64xbf16, #tpu.memory_space<vmem>>, vector<1x32x64xbf16>
    %96 = vector.shape_cast %95 : vector<1x32x64xbf16> to vector<32x64xbf16>
    %cst_67 = arith.constant dense<0.000000e+00> : vector<72x64xf32>
    %97 = tpu.matmul %94, %96, %cst_67 {dimension_numbers = #tpu.dot_dimension_numbers<[1], [0], [0], [1], [0, 0, 1, 1], [], []>} : vector<72x32xbf16>, vector<32x64xbf16>, vector<72x64xf32> -> vector<72x64xf32>
    %98 = arith.addf %86, %97 : vector<72x64xf32>
    %c8 = arith.constant 8 : index
    %c0_68 = arith.constant 0 : index
    %c0_69 = arith.constant 0 : index
    %99 = vector.load %arg1[%c8, %c0_68, %c0_69] : memref<16x72x256xbf16, #tpu.memory_space<vmem>>, vector<1x72x256xbf16>
    %100 = vector.shape_cast %99 : vector<1x72x256xbf16> to vector<72x256xbf16>
    %cst_70 = arith.constant dense<0.000000e+00> : vector<72x32xf32>
    %101 = tpu.matmul %100, %0, %cst_70 {dimension_numbers = #tpu.dot_dimension_numbers<[1], [0], [0], [1], [0, 0, 1, 1], [], []>} : vector<72x256xbf16>, vector<256x32xbf16>, vector<72x32xf32> -> vector<72x32xf32>
    %102 = vector.broadcast %1 : vector<1x32xf32> to vector<72x32xf32>
    %103 = arith.addf %101, %102 : vector<72x32xf32>
    %cst_71 = arith.constant 0.000000e+00 : f32
    %104 = vector.broadcast %cst_71 : f32 to vector<72x32xf32>
    %105 = arith.maximumf %103, %104 : vector<72x32xf32>
    %106 = arith.truncf %105 : vector<72x32xf32> to vector<72x32xbf16>
    %c8_72 = arith.constant 8 : index
    %c0_73 = arith.constant 0 : index
    %c0_74 = arith.constant 0 : index
    %107 = vector.load %arg4[%c8_72, %c0_73, %c0_74] : memref<16x32x64xbf16, #tpu.memory_space<vmem>>, vector<1x32x64xbf16>
    %108 = vector.shape_cast %107 : vector<1x32x64xbf16> to vector<32x64xbf16>
    %cst_75 = arith.constant dense<0.000000e+00> : vector<72x64xf32>
    %109 = tpu.matmul %106, %108, %cst_75 {dimension_numbers = #tpu.dot_dimension_numbers<[1], [0], [0], [1], [0, 0, 1, 1], [], []>} : vector<72x32xbf16>, vector<32x64xbf16>, vector<72x64xf32> -> vector<72x64xf32>
    %110 = arith.addf %98, %109 : vector<72x64xf32>
    %c9 = arith.constant 9 : index
    %c0_76 = arith.constant 0 : index
    %c0_77 = arith.constant 0 : index
    %111 = vector.load %arg1[%c9, %c0_76, %c0_77] : memref<16x72x256xbf16, #tpu.memory_space<vmem>>, vector<1x72x256xbf16>
    %112 = vector.shape_cast %111 : vector<1x72x256xbf16> to vector<72x256xbf16>
    %cst_78 = arith.constant dense<0.000000e+00> : vector<72x32xf32>
    %113 = tpu.matmul %112, %0, %cst_78 {dimension_numbers = #tpu.dot_dimension_numbers<[1], [0], [0], [1], [0, 0, 1, 1], [], []>} : vector<72x256xbf16>, vector<256x32xbf16>, vector<72x32xf32> -> vector<72x32xf32>
    %114 = vector.broadcast %1 : vector<1x32xf32> to vector<72x32xf32>
    %115 = arith.addf %113, %114 : vector<72x32xf32>
    %cst_79 = arith.constant 0.000000e+00 : f32
    %116 = vector.broadcast %cst_79 : f32 to vector<72x32xf32>
    %117 = arith.maximumf %115, %116 : vector<72x32xf32>
    %118 = arith.truncf %117 : vector<72x32xf32> to vector<72x32xbf16>
    %c9_80 = arith.constant 9 : index
    %c0_81 = arith.constant 0 : index
    %c0_82 = arith.constant 0 : index
    %119 = vector.load %arg4[%c9_80, %c0_81, %c0_82] : memref<16x32x64xbf16, #tpu.memory_space<vmem>>, vector<1x32x64xbf16>
    %120 = vector.shape_cast %119 : vector<1x32x64xbf16> to vector<32x64xbf16>
    %cst_83 = arith.constant dense<0.000000e+00> : vector<72x64xf32>
    %121 = tpu.matmul %118, %120, %cst_83 {dimension_numbers = #tpu.dot_dimension_numbers<[1], [0], [0], [1], [0, 0, 1, 1], [], []>} : vector<72x32xbf16>, vector<32x64xbf16>, vector<72x64xf32> -> vector<72x64xf32>
    %122 = arith.addf %110, %121 : vector<72x64xf32>
    %c10 = arith.constant 10 : index
    %c0_84 = arith.constant 0 : index
    %c0_85 = arith.constant 0 : index
    %123 = vector.load %arg1[%c10, %c0_84, %c0_85] : memref<16x72x256xbf16, #tpu.memory_space<vmem>>, vector<1x72x256xbf16>
    %124 = vector.shape_cast %123 : vector<1x72x256xbf16> to vector<72x256xbf16>
    %cst_86 = arith.constant dense<0.000000e+00> : vector<72x32xf32>
    %125 = tpu.matmul %124, %0, %cst_86 {dimension_numbers = #tpu.dot_dimension_numbers<[1], [0], [0], [1], [0, 0, 1, 1], [], []>} : vector<72x256xbf16>, vector<256x32xbf16>, vector<72x32xf32> -> vector<72x32xf32>
    %126 = vector.broadcast %1 : vector<1x32xf32> to vector<72x32xf32>
    %127 = arith.addf %125, %126 : vector<72x32xf32>
    %cst_87 = arith.constant 0.000000e+00 : f32
    %128 = vector.broadcast %cst_87 : f32 to vector<72x32xf32>
    %129 = arith.maximumf %127, %128 : vector<72x32xf32>
    %130 = arith.truncf %129 : vector<72x32xf32> to vector<72x32xbf16>
    %c10_88 = arith.constant 10 : index
    %c0_89 = arith.constant 0 : index
    %c0_90 = arith.constant 0 : index
    %131 = vector.load %arg4[%c10_88, %c0_89, %c0_90] : memref<16x32x64xbf16, #tpu.memory_space<vmem>>, vector<1x32x64xbf16>
    %132 = vector.shape_cast %131 : vector<1x32x64xbf16> to vector<32x64xbf16>
    %cst_91 = arith.constant dense<0.000000e+00> : vector<72x64xf32>
    %133 = tpu.matmul %130, %132, %cst_91 {dimension_numbers = #tpu.dot_dimension_numbers<[1], [0], [0], [1], [0, 0, 1, 1], [], []>} : vector<72x32xbf16>, vector<32x64xbf16>, vector<72x64xf32> -> vector<72x64xf32>
    %134 = arith.addf %122, %133 : vector<72x64xf32>
    %c11 = arith.constant 11 : index
    %c0_92 = arith.constant 0 : index
    %c0_93 = arith.constant 0 : index
    %135 = vector.load %arg1[%c11, %c0_92, %c0_93] : memref<16x72x256xbf16, #tpu.memory_space<vmem>>, vector<1x72x256xbf16>
    %136 = vector.shape_cast %135 : vector<1x72x256xbf16> to vector<72x256xbf16>
    %cst_94 = arith.constant dense<0.000000e+00> : vector<72x32xf32>
    %137 = tpu.matmul %136, %0, %cst_94 {dimension_numbers = #tpu.dot_dimension_numbers<[1], [0], [0], [1], [0, 0, 1, 1], [], []>} : vector<72x256xbf16>, vector<256x32xbf16>, vector<72x32xf32> -> vector<72x32xf32>
    %138 = vector.broadcast %1 : vector<1x32xf32> to vector<72x32xf32>
    %139 = arith.addf %137, %138 : vector<72x32xf32>
    %cst_95 = arith.constant 0.000000e+00 : f32
    %140 = vector.broadcast %cst_95 : f32 to vector<72x32xf32>
    %141 = arith.maximumf %139, %140 : vector<72x32xf32>
    %142 = arith.truncf %141 : vector<72x32xf32> to vector<72x32xbf16>
    %c11_96 = arith.constant 11 : index
    %c0_97 = arith.constant 0 : index
    %c0_98 = arith.constant 0 : index
    %143 = vector.load %arg4[%c11_96, %c0_97, %c0_98] : memref<16x32x64xbf16, #tpu.memory_space<vmem>>, vector<1x32x64xbf16>
    %144 = vector.shape_cast %143 : vector<1x32x64xbf16> to vector<32x64xbf16>
    %cst_99 = arith.constant dense<0.000000e+00> : vector<72x64xf32>
    %145 = tpu.matmul %142, %144, %cst_99 {dimension_numbers = #tpu.dot_dimension_numbers<[1], [0], [0], [1], [0, 0, 1, 1], [], []>} : vector<72x32xbf16>, vector<32x64xbf16>, vector<72x64xf32> -> vector<72x64xf32>
    %146 = arith.addf %134, %145 : vector<72x64xf32>
    %c12 = arith.constant 12 : index
    %c0_100 = arith.constant 0 : index
    %c0_101 = arith.constant 0 : index
    %147 = vector.load %arg1[%c12, %c0_100, %c0_101] : memref<16x72x256xbf16, #tpu.memory_space<vmem>>, vector<1x72x256xbf16>
    %148 = vector.shape_cast %147 : vector<1x72x256xbf16> to vector<72x256xbf16>
    %cst_102 = arith.constant dense<0.000000e+00> : vector<72x32xf32>
    %149 = tpu.matmul %148, %0, %cst_102 {dimension_numbers = #tpu.dot_dimension_numbers<[1], [0], [0], [1], [0, 0, 1, 1], [], []>} : vector<72x256xbf16>, vector<256x32xbf16>, vector<72x32xf32> -> vector<72x32xf32>
    %150 = vector.broadcast %1 : vector<1x32xf32> to vector<72x32xf32>
    %151 = arith.addf %149, %150 : vector<72x32xf32>
    %cst_103 = arith.constant 0.000000e+00 : f32
    %152 = vector.broadcast %cst_103 : f32 to vector<72x32xf32>
    %153 = arith.maximumf %151, %152 : vector<72x32xf32>
    %154 = arith.truncf %153 : vector<72x32xf32> to vector<72x32xbf16>
    %c12_104 = arith.constant 12 : index
    %c0_105 = arith.constant 0 : index
    %c0_106 = arith.constant 0 : index
    %155 = vector.load %arg4[%c12_104, %c0_105, %c0_106] : memref<16x32x64xbf16, #tpu.memory_space<vmem>>, vector<1x32x64xbf16>
    %156 = vector.shape_cast %155 : vector<1x32x64xbf16> to vector<32x64xbf16>
    %cst_107 = arith.constant dense<0.000000e+00> : vector<72x64xf32>
    %157 = tpu.matmul %154, %156, %cst_107 {dimension_numbers = #tpu.dot_dimension_numbers<[1], [0], [0], [1], [0, 0, 1, 1], [], []>} : vector<72x32xbf16>, vector<32x64xbf16>, vector<72x64xf32> -> vector<72x64xf32>
    %158 = arith.addf %146, %157 : vector<72x64xf32>
    %c13 = arith.constant 13 : index
    %c0_108 = arith.constant 0 : index
    %c0_109 = arith.constant 0 : index
    %159 = vector.load %arg1[%c13, %c0_108, %c0_109] : memref<16x72x256xbf16, #tpu.memory_space<vmem>>, vector<1x72x256xbf16>
    %160 = vector.shape_cast %159 : vector<1x72x256xbf16> to vector<72x256xbf16>
    %cst_110 = arith.constant dense<0.000000e+00> : vector<72x32xf32>
    %161 = tpu.matmul %160, %0, %cst_110 {dimension_numbers = #tpu.dot_dimension_numbers<[1], [0], [0], [1], [0, 0, 1, 1], [], []>} : vector<72x256xbf16>, vector<256x32xbf16>, vector<72x32xf32> -> vector<72x32xf32>
    %162 = vector.broadcast %1 : vector<1x32xf32> to vector<72x32xf32>
    %163 = arith.addf %161, %162 : vector<72x32xf32>
    %cst_111 = arith.constant 0.000000e+00 : f32
    %164 = vector.broadcast %cst_111 : f32 to vector<72x32xf32>
    %165 = arith.maximumf %163, %164 : vector<72x32xf32>
    %166 = arith.truncf %165 : vector<72x32xf32> to vector<72x32xbf16>
    %c13_112 = arith.constant 13 : index
    %c0_113 = arith.constant 0 : index
    %c0_114 = arith.constant 0 : index
    %167 = vector.load %arg4[%c13_112, %c0_113, %c0_114] : memref<16x32x64xbf16, #tpu.memory_space<vmem>>, vector<1x32x64xbf16>
    %168 = vector.shape_cast %167 : vector<1x32x64xbf16> to vector<32x64xbf16>
    %cst_115 = arith.constant dense<0.000000e+00> : vector<72x64xf32>
    %169 = tpu.matmul %166, %168, %cst_115 {dimension_numbers = #tpu.dot_dimension_numbers<[1], [0], [0], [1], [0, 0, 1, 1], [], []>} : vector<72x32xbf16>, vector<32x64xbf16>, vector<72x64xf32> -> vector<72x64xf32>
    %170 = arith.addf %158, %169 : vector<72x64xf32>
    %c14 = arith.constant 14 : index
    %c0_116 = arith.constant 0 : index
    %c0_117 = arith.constant 0 : index
    %171 = vector.load %arg1[%c14, %c0_116, %c0_117] : memref<16x72x256xbf16, #tpu.memory_space<vmem>>, vector<1x72x256xbf16>
    %172 = vector.shape_cast %171 : vector<1x72x256xbf16> to vector<72x256xbf16>
    %cst_118 = arith.constant dense<0.000000e+00> : vector<72x32xf32>
    %173 = tpu.matmul %172, %0, %cst_118 {dimension_numbers = #tpu.dot_dimension_numbers<[1], [0], [0], [1], [0, 0, 1, 1], [], []>} : vector<72x256xbf16>, vector<256x32xbf16>, vector<72x32xf32> -> vector<72x32xf32>
    %174 = vector.broadcast %1 : vector<1x32xf32> to vector<72x32xf32>
    %175 = arith.addf %173, %174 : vector<72x32xf32>
    %cst_119 = arith.constant 0.000000e+00 : f32
    %176 = vector.broadcast %cst_119 : f32 to vector<72x32xf32>
    %177 = arith.maximumf %175, %176 : vector<72x32xf32>
    %178 = arith.truncf %177 : vector<72x32xf32> to vector<72x32xbf16>
    %c14_120 = arith.constant 14 : index
    %c0_121 = arith.constant 0 : index
    %c0_122 = arith.constant 0 : index
    %179 = vector.load %arg4[%c14_120, %c0_121, %c0_122] : memref<16x32x64xbf16, #tpu.memory_space<vmem>>, vector<1x32x64xbf16>
    %180 = vector.shape_cast %179 : vector<1x32x64xbf16> to vector<32x64xbf16>
    %cst_123 = arith.constant dense<0.000000e+00> : vector<72x64xf32>
    %181 = tpu.matmul %178, %180, %cst_123 {dimension_numbers = #tpu.dot_dimension_numbers<[1], [0], [0], [1], [0, 0, 1, 1], [], []>} : vector<72x32xbf16>, vector<32x64xbf16>, vector<72x64xf32> -> vector<72x64xf32>
    %182 = arith.addf %170, %181 : vector<72x64xf32>
    %c15 = arith.constant 15 : index
    %c0_124 = arith.constant 0 : index
    %c0_125 = arith.constant 0 : index
    %183 = vector.load %arg1[%c15, %c0_124, %c0_125] : memref<16x72x256xbf16, #tpu.memory_space<vmem>>, vector<1x72x256xbf16>
    %184 = vector.shape_cast %183 : vector<1x72x256xbf16> to vector<72x256xbf16>
    %cst_126 = arith.constant dense<0.000000e+00> : vector<72x32xf32>
    %185 = tpu.matmul %184, %0, %cst_126 {dimension_numbers = #tpu.dot_dimension_numbers<[1], [0], [0], [1], [0, 0, 1, 1], [], []>} : vector<72x256xbf16>, vector<256x32xbf16>, vector<72x32xf32> -> vector<72x32xf32>
    %186 = vector.broadcast %1 : vector<1x32xf32> to vector<72x32xf32>
    %187 = arith.addf %185, %186 : vector<72x32xf32>
    %cst_127 = arith.constant 0.000000e+00 : f32
    %188 = vector.broadcast %cst_127 : f32 to vector<72x32xf32>
    %189 = arith.maximumf %187, %188 : vector<72x32xf32>
    %190 = arith.truncf %189 : vector<72x32xf32> to vector<72x32xbf16>
    %c15_128 = arith.constant 15 : index
    %c0_129 = arith.constant 0 : index
    %c0_130 = arith.constant 0 : index
    %191 = vector.load %arg4[%c15_128, %c0_129, %c0_130] : memref<16x32x64xbf16, #tpu.memory_space<vmem>>, vector<1x32x64xbf16>
    %192 = vector.shape_cast %191 : vector<1x32x64xbf16> to vector<32x64xbf16>
    %cst_131 = arith.constant dense<0.000000e+00> : vector<72x64xf32>
    %193 = tpu.matmul %190, %192, %cst_131 {dimension_numbers = #tpu.dot_dimension_numbers<[1], [0], [0], [1], [0, 0, 1, 1], [], []>} : vector<72x32xbf16>, vector<32x64xbf16>, vector<72x64xf32> -> vector<72x64xf32>
    %194 = arith.addf %182, %193 : vector<72x64xf32>
    %c0_132 = arith.constant 0 : index
    %c0_133 = arith.constant 0 : index
    %195 = vector.load %arg5[%c0_132, %c0_133] : memref<1x64xf32, #tpu.memory_space<vmem>>, vector<1x64xf32>
    %196 = vector.broadcast %195 : vector<1x64xf32> to vector<72x64xf32>
    %197 = arith.addf %194, %196 : vector<72x64xf32>
    %cst_134 = arith.constant 0.000000e+00 : f32
    %198 = vector.broadcast %cst_134 : f32 to vector<72x64xf32>
    %199 = arith.maximumf %197, %198 : vector<72x64xf32>
    %c0_135 = arith.constant 0 : index
    %c0_136 = arith.constant 0 : index
    %200 = vector.load %arg13[%c0_135, %c0_136] : memref<72x64xf32, #tpu.memory_space<vmem>>, vector<72x64xf32>
    tpu.vector_store %arg13[%c0_135, %c0_136], %199 {strides = array<i32>} : memref<72x64xf32, #tpu.memory_space<vmem>>, vector<72x64xf32>,
    %cst_137 = arith.constant 0.000000e+00 : f32
    %201 = vector.broadcast %cst_137 : f32 to vector<8x64xf32>
    %c0_138 = arith.constant 0 : index
    %c0_139 = arith.constant 0 : index
    %202 = vector.load %arg13[%c0_138, %c0_139] : memref<72x64xf32, #tpu.memory_space<vmem>>, vector<8x64xf32>
    %203 = arith.truncf %202 : vector<8x64xf32> to vector<8x64xbf16>
    %c0_140 = arith.constant 0 : index
    %c0_141 = arith.constant 0 : index
    %c0_142 = arith.constant 0 : index
    %204 = vector.load %arg6[%c0_140, %c0_141, %c0_142] : memref<9x64x64xbf16, #tpu.memory_space<vmem>>, vector<1x64x64xbf16>
    %205 = vector.shape_cast %204 : vector<1x64x64xbf16> to vector<64x64xbf16>
    %cst_143 = arith.constant dense<0.000000e+00> : vector<8x64xf32>
    %206 = tpu.matmul %203, %205, %cst_143 {dimension_numbers = #tpu.dot_dimension_numbers<[1], [0], [0], [1], [0, 0, 1, 1], [], []>} : vector<8x64xbf16>, vector<64x64xbf16>, vector<8x64xf32> -> vector<8x64xf32>
    %207 = arith.addf %201, %206 : vector<8x64xf32>
    %c8_144 = arith.constant 8 : index
    %c0_145 = arith.constant 0 : index
    %208 = vector.load %arg13[%c8_144, %c0_145] : memref<72x64xf32, #tpu.memory_space<vmem>>, vector<8x64xf32>
    %209 = arith.truncf %208 : vector<8x64xf32> to vector<8x64xbf16>
    %c1_146 = arith.constant 1 : index
    %c0_147 = arith.constant 0 : index
    %c0_148 = arith.constant 0 : index
    %210 = vector.load %arg6[%c1_146, %c0_147, %c0_148] : memref<9x64x64xbf16, #tpu.memory_space<vmem>>, vector<1x64x64xbf16>
    %211 = vector.shape_cast %210 : vector<1x64x64xbf16> to vector<64x64xbf16>
    %cst_149 = arith.constant dense<0.000000e+00> : vector<8x64xf32>
    %212 = tpu.matmul %209, %211, %cst_149 {dimension_numbers = #tpu.dot_dimension_numbers<[1], [0], [0], [1], [0, 0, 1, 1], [], []>} : vector<8x64xbf16>, vector<64x64xbf16>, vector<8x64xf32> -> vector<8x64xf32>
    %213 = arith.addf %207, %212 : vector<8x64xf32>
    %c16 = arith.constant 16 : index
    %c0_150 = arith.constant 0 : index
    %214 = vector.load %arg13[%c16, %c0_150] : memref<72x64xf32, #tpu.memory_space<vmem>>, vector<8x64xf32>
    %215 = arith.truncf %214 : vector<8x64xf32> to vector<8x64xbf16>
    %c2_151 = arith.constant 2 : index
    %c0_152 = arith.constant 0 : index
    %c0_153 = arith.constant 0 : index
    %216 = vector.load %arg6[%c2_151, %c0_152, %c0_153] : memref<9x64x64xbf16, #tpu.memory_space<vmem>>, vector<1x64x64xbf16>
    %217 = vector.shape_cast %216 : vector<1x64x64xbf16> to vector<64x64xbf16>
    %cst_154 = arith.constant dense<0.000000e+00> : vector<8x64xf32>
    %218 = tpu.matmul %215, %217, %cst_154 {dimension_numbers = #tpu.dot_dimension_numbers<[1], [0], [0], [1], [0, 0, 1, 1], [], []>} : vector<8x64xbf16>, vector<64x64xbf16>, vector<8x64xf32> -> vector<8x64xf32>
    %219 = arith.addf %213, %218 : vector<8x64xf32>
    %c24 = arith.constant 24 : index
    %c0_155 = arith.constant 0 : index
    %220 = vector.load %arg13[%c24, %c0_155] : memref<72x64xf32, #tpu.memory_space<vmem>>, vector<8x64xf32>
    %221 = arith.truncf %220 : vector<8x64xf32> to vector<8x64xbf16>
    %c3_156 = arith.constant 3 : index
    %c0_157 = arith.constant 0 : index
    %c0_158 = arith.constant 0 : index
    %222 = vector.load %arg6[%c3_156, %c0_157, %c0_158] : memref<9x64x64xbf16, #tpu.memory_space<vmem>>, vector<1x64x64xbf16>
    %223 = vector.shape_cast %222 : vector<1x64x64xbf16> to vector<64x64xbf16>
    %cst_159 = arith.constant dense<0.000000e+00> : vector<8x64xf32>
    %224 = tpu.matmul %221, %223, %cst_159 {dimension_numbers = #tpu.dot_dimension_numbers<[1], [0], [0], [1], [0, 0, 1, 1], [], []>} : vector<8x64xbf16>, vector<64x64xbf16>, vector<8x64xf32> -> vector<8x64xf32>
    %225 = arith.addf %219, %224 : vector<8x64xf32>
    %c32 = arith.constant 32 : index
    %c0_160 = arith.constant 0 : index
    %226 = vector.load %arg13[%c32, %c0_160] : memref<72x64xf32, #tpu.memory_space<vmem>>, vector<8x64xf32>
    %227 = arith.truncf %226 : vector<8x64xf32> to vector<8x64xbf16>
    %c4_161 = arith.constant 4 : index
    %c0_162 = arith.constant 0 : index
    %c0_163 = arith.constant 0 : index
    %228 = vector.load %arg6[%c4_161, %c0_162, %c0_163] : memref<9x64x64xbf16, #tpu.memory_space<vmem>>, vector<1x64x64xbf16>
    %229 = vector.shape_cast %228 : vector<1x64x64xbf16> to vector<64x64xbf16>
    %cst_164 = arith.constant dense<0.000000e+00> : vector<8x64xf32>
    %230 = tpu.matmul %227, %229, %cst_164 {dimension_numbers = #tpu.dot_dimension_numbers<[1], [0], [0], [1], [0, 0, 1, 1], [], []>} : vector<8x64xbf16>, vector<64x64xbf16>, vector<8x64xf32> -> vector<8x64xf32>
    %231 = arith.addf %225, %230 : vector<8x64xf32>
    %c40 = arith.constant 40 : index
    %c0_165 = arith.constant 0 : index
    %232 = vector.load %arg13[%c40, %c0_165] : memref<72x64xf32, #tpu.memory_space<vmem>>, vector<8x64xf32>
    %233 = arith.truncf %232 : vector<8x64xf32> to vector<8x64xbf16>
    %c5_166 = arith.constant 5 : index
    %c0_167 = arith.constant 0 : index
    %c0_168 = arith.constant 0 : index
    %234 = vector.load %arg6[%c5_166, %c0_167, %c0_168] : memref<9x64x64xbf16, #tpu.memory_space<vmem>>, vector<1x64x64xbf16>
    %235 = vector.shape_cast %234 : vector<1x64x64xbf16> to vector<64x64xbf16>
    %cst_169 = arith.constant dense<0.000000e+00> : vector<8x64xf32>
    %236 = tpu.matmul %233, %235, %cst_169 {dimension_numbers = #tpu.dot_dimension_numbers<[1], [0], [0], [1], [0, 0, 1, 1], [], []>} : vector<8x64xbf16>, vector<64x64xbf16>, vector<8x64xf32> -> vector<8x64xf32>
    %237 = arith.addf %231, %236 : vector<8x64xf32>
    %c48 = arith.constant 48 : index
    %c0_170 = arith.constant 0 : index
    %238 = vector.load %arg13[%c48, %c0_170] : memref<72x64xf32, #tpu.memory_space<vmem>>, vector<8x64xf32>
    %239 = arith.truncf %238 : vector<8x64xf32> to vector<8x64xbf16>
    %c6_171 = arith.constant 6 : index
    %c0_172 = arith.constant 0 : index
    %c0_173 = arith.constant 0 : index
    %240 = vector.load %arg6[%c6_171, %c0_172, %c0_173] : memref<9x64x64xbf16, #tpu.memory_space<vmem>>, vector<1x64x64xbf16>
    %241 = vector.shape_cast %240 : vector<1x64x64xbf16> to vector<64x64xbf16>
    %cst_174 = arith.constant dense<0.000000e+00> : vector<8x64xf32>
    %242 = tpu.matmul %239, %241, %cst_174 {dimension_numbers = #tpu.dot_dimension_numbers<[1], [0], [0], [1], [0, 0, 1, 1], [], []>} : vector<8x64xbf16>, vector<64x64xbf16>, vector<8x64xf32> -> vector<8x64xf32>
    %243 = arith.addf %237, %242 : vector<8x64xf32>
    %c56 = arith.constant 56 : index
    %c0_175 = arith.constant 0 : index
    %244 = vector.load %arg13[%c56, %c0_175] : memref<72x64xf32, #tpu.memory_space<vmem>>, vector<8x64xf32>
    %245 = arith.truncf %244 : vector<8x64xf32> to vector<8x64xbf16>
    %c7_176 = arith.constant 7 : index
    %c0_177 = arith.constant 0 : index
    %c0_178 = arith.constant 0 : index
    %246 = vector.load %arg6[%c7_176, %c0_177, %c0_178] : memref<9x64x64xbf16, #tpu.memory_space<vmem>>, vector<1x64x64xbf16>
    %247 = vector.shape_cast %246 : vector<1x64x64xbf16> to vector<64x64xbf16>
    %cst_179 = arith.constant dense<0.000000e+00> : vector<8x64xf32>
    %248 = tpu.matmul %245, %247, %cst_179 {dimension_numbers = #tpu.dot_dimension_numbers<[1], [0], [0], [1], [0, 0, 1, 1], [], []>} : vector<8x64xbf16>, vector<64x64xbf16>, vector<8x64xf32> -> vector<8x64xf32>
    %249 = arith.addf %243, %248 : vector<8x64xf32>
    %c64 = arith.constant 64 : index
    %c0_180 = arith.constant 0 : index
    %250 = vector.load %arg13[%c64, %c0_180] : memref<72x64xf32, #tpu.memory_space<vmem>>, vector<8x64xf32>
    %251 = arith.truncf %250 : vector<8x64xf32> to vector<8x64xbf16>
    %c8_181 = arith.constant 8 : index
    %c0_182 = arith.constant 0 : index
    %c0_183 = arith.constant 0 : index
    %252 = vector.load %arg6[%c8_181, %c0_182, %c0_183] : memref<9x64x64xbf16, #tpu.memory_space<vmem>>, vector<1x64x64xbf16>
    %253 = vector.shape_cast %252 : vector<1x64x64xbf16> to vector<64x64xbf16>
    %cst_184 = arith.constant dense<0.000000e+00> : vector<8x64xf32>
    %254 = tpu.matmul %251, %253, %cst_184 {dimension_numbers = #tpu.dot_dimension_numbers<[1], [0], [0], [1], [0, 0, 1, 1], [], []>} : vector<8x64xbf16>, vector<64x64xbf16>, vector<8x64xf32> -> vector<8x64xf32>
    %255 = arith.addf %249, %254 : vector<8x64xf32>
    %c0_185 = arith.constant 0 : index
    %c0_186 = arith.constant 0 : index
    %256 = vector.load %arg7[%c0_185, %c0_186] : memref<1x64xf32, #tpu.memory_space<vmem>>, vector<1x64xf32>
    %257 = vector.broadcast %256 : vector<1x64xf32> to vector<8x64xf32>
    %258 = arith.addf %255, %257 : vector<8x64xf32>
    %cst_187 = arith.constant 0.000000e+00 : f32
    %259 = vector.broadcast %cst_187 : f32 to vector<8x64xf32>
    %260 = arith.maximumf %258, %259 : vector<8x64xf32>
    %261 = arith.truncf %260 : vector<8x64xf32> to vector<8x64xbf16>
    %c0_188 = arith.constant 0 : index
    %c0_189 = arith.constant 0 : index
    %262 = vector.load %arg8[%c0_188, %c0_189] : memref<64x1024xbf16, #tpu.memory_space<vmem>>, vector<64x1024xbf16>
    %cst_190 = arith.constant dense<0.000000e+00> : vector<8x1024xf32>
    %263 = tpu.matmul %261, %262, %cst_190 {dimension_numbers = #tpu.dot_dimension_numbers<[1], [0], [0], [1], [0, 0, 1, 1], [], []>} : vector<8x64xbf16>, vector<64x1024xbf16>, vector<8x1024xf32> -> vector<8x1024xf32>
    %c0_191 = arith.constant 0 : index
    %c0_192 = arith.constant 0 : index
    %264 = vector.load %arg9[%c0_191, %c0_192] : memref<1x1024xf32, #tpu.memory_space<vmem>>, vector<1x1024xf32>
    %265 = vector.broadcast %264 : vector<1x1024xf32> to vector<8x1024xf32>
    %266 = arith.addf %263, %265 : vector<8x1024xf32>
    %cst_193 = arith.constant 0.000000e+00 : f32
    %267 = vector.broadcast %cst_193 : f32 to vector<8x1024xf32>
    %268 = arith.maximumf %266, %267 : vector<8x1024xf32>
    %269 = arith.truncf %268 : vector<8x1024xf32> to vector<8x1024xbf16>
    %c0_194 = arith.constant 0 : index
    %c0_195 = arith.constant 0 : index
    %270 = vector.load %arg10[%c0_194, %c0_195] : memref<1024x7xbf16, #tpu.memory_space<vmem>>, vector<1024x7xbf16>
    %cst_196 = arith.constant dense<0.000000e+00> : vector<8x7xf32>
    %271 = tpu.matmul %269, %270, %cst_196 {dimension_numbers = #tpu.dot_dimension_numbers<[1], [0], [0], [1], [0, 0, 1, 1], [], []>} : vector<8x1024xbf16>, vector<1024x7xbf16>, vector<8x7xf32> -> vector<8x7xf32>
    %c0_197 = arith.constant 0 : index
    %c0_198 = arith.constant 0 : index
    %272 = vector.load %arg11[%c0_197, %c0_198] : memref<1x7xf32, #tpu.memory_space<vmem>>, vector<1x7xf32>
    %273 = vector.broadcast %272 : vector<1x7xf32> to vector<8x7xf32>
    %274 = arith.addf %271, %273 : vector<8x7xf32>
    %275 = vector.extract_strided_slice %274 {offsets = [0, 0], sizes = [8, 6], strides = [1, 1]} : vector<8x7xf32> to vector<8x6xf32>
    %276 = vector.extract_strided_slice %274 {offsets = [0, 6], sizes = [8, 1], strides = [1, 1]} : vector<8x7xf32> to vector<8x1xf32>
    %277 = tpu.iota {dimensions = array<i32: 0>} : vector<8x6xi32>
    %c2_i32 = arith.constant 2 : i32
    %278 = vector.broadcast %c2_i32 : i32 to vector<8x6xi32>
    %279 = arith.cmpi slt, %277, %278 : vector<8x6xi32>
    %cst_199 = arith.constant 0.000000e+00 : f32
    %280 = vector.broadcast %cst_199 : f32 to vector<8x6xf32>
    %281 = arith.select %279, %275, %280 : vector<8x6xi1>, vector<8x6xf32>
    %282 = vector.shape_cast %281 : vector<8x6xf32> to vector<1x8x6xf32>
    %cst_200 = arith.constant dense<0.000000e+00> : vector<1xf32>
    %283 = vector.multi_reduction <add>, %282, %cst_200 [1, 2] : vector<1x8x6xf32> to vector<1xf32>
    %284 = vector.shape_cast %283 : vector<1xf32> to vector<1x1x1xf32>
    %285 = vector.extract %284[0, 0, 0] : f32 from vector<1x1x1xf32>
    %cst_201 = arith.constant 0.0833333358 : f32
    %286 = arith.mulf %285, %cst_201 : f32
    %287 = vector.broadcast %276 : vector<8x1xf32> to vector<8x6xf32>
    %288 = arith.addf %287, %275 : vector<8x6xf32>
    %289 = vector.broadcast %286 : f32 to vector<8x6xf32>
    %290 = arith.subf %288, %289 : vector<8x6xf32>
    %c0_202 = arith.constant 0 : index
    %c0_203 = arith.constant 0 : index
    %291 = vector.load %arg12[%c0_202, %c0_203] : memref<8x6xf32, #tpu.memory_space<vmem>>, vector<8x6xf32>
    tpu.vector_store %arg12[%c0_202, %c0_203], %290 {strides = array<i32>} : memref<8x6xf32, #tpu.memory_space<vmem>>, vector<8x6xf32>,
    return
  }
  func.func @transform_0(%arg0: i32) -> (i32, i32, i32) {
    %c0_i32 = arith.constant 0 : i32
    %c0_i32_0 = arith.constant 0 : i32
    %c0_i32_1 = arith.constant 0 : i32
    %c0_i32_2 = arith.constant 0 : i32
    return %c0_i32, %c0_i32_0, %c0_i32_1 : i32, i32, i32
  }
  func.func @transform_1(%arg0: i32) -> (i32, i32) {
    %c0_i32 = arith.constant 0 : i32
    %c0_i32_0 = arith.constant 0 : i32
    %c0_i32_1 = arith.constant 0 : i32
    return %c0_i32, %c0_i32_0 : i32, i32
  }
  func.func @transform_2(%arg0: i32) -> (i32, i32) {
    %c0_i32 = arith.constant 0 : i32
    %c0_i32_0 = arith.constant 0 : i32
    %c0_i32_1 = arith.constant 0 : i32
    return %c0_i32, %c0_i32_0 : i32, i32
  }
  func.func @transform_3(%arg0: i32) -> (i32, i32, i32) {
    %c0_i32 = arith.constant 0 : i32
    %c0_i32_0 = arith.constant 0 : i32
    %c0_i32_1 = arith.constant 0 : i32
    %c0_i32_2 = arith.constant 0 : i32
    return %c0_i32, %c0_i32_0, %c0_i32_1 : i32, i32, i32
  }
  func.func @transform_4(%arg0: i32) -> (i32, i32) {
    %c0_i32 = arith.constant 0 : i32
    %c0_i32_0 = arith.constant 0 : i32
    %c0_i32_1 = arith.constant 0 : i32
    return %c0_i32, %c0_i32_0 : i32, i32
  }
  func.func @transform_5(%arg0: i32) -> (i32, i32, i32) {
    %c0_i32 = arith.constant 0 : i32
    %c0_i32_0 = arith.constant 0 : i32
    %c0_i32_1 = arith.constant 0 : i32
    %c0_i32_2 = arith.constant 0 : i32
    return %c0_i32, %c0_i32_0, %c0_i32_1 : i32, i32, i32
  }
  func.func @transform_6(%arg0: i32) -> (i32, i32) {
    %c0_i32 = arith.constant 0 : i32
    %c0_i32_0 = arith.constant 0 : i32
    %c0_i32_1 = arith.constant 0 : i32
    return %c0_i32, %c0_i32_0 : i32, i32
  }
  func.func @transform_7(%arg0: i32) -> (i32, i32) {
    %c0_i32 = arith.constant 0 : i32
    %c0_i32_0 = arith.constant 0 : i32
    %c0_i32_1 = arith.constant 0 : i32
    return %c0_i32, %c0_i32_0 : i32, i32
  }
  func.func @transform_8(%arg0: i32) -> (i32, i32) {
    %c0_i32 = arith.constant 0 : i32
    %c0_i32_0 = arith.constant 0 : i32
    %c0_i32_1 = arith.constant 0 : i32
    return %c0_i32, %c0_i32_0 : i32, i32
  }
  func.func @transform_9(%arg0: i32) -> (i32, i32) {
    %c0_i32 = arith.constant 0 : i32
    %c0_i32_0 = arith.constant 0 : i32
    %c0_i32_1 = arith.constant 0 : i32
    return %c0_i32, %c0_i32_0 : i32, i32
  }
  func.func @transform_10(%arg0: i32) -> (i32, i32) {
    %c0_i32 = arith.constant 0 : i32
    %c0_i32_0 = arith.constant 0 : i32
    %c0_i32_1 = arith.constant 0 : i32
    return %c0_i32, %c0_i32_0 : i32, i32
  }
  func.func @transform_11(%arg0: i32) -> (i32, i32) {
    %c0_i32 = arith.constant 0 : i32
    %c0_i32_0 = arith.constant 0 : i32
    %c0_i32_1 = arith.constant 0 : i32
    return %c0_i32, %c0_i32_0 : i32, i32
  }
}

</mosaic_0001>

<llo_original>
// kernel: dueling_dqn_forward.1
$region0: #{dueling_dqn_forward.1}
  #allocation0 [shape = 'u32[]', space=smem, size = 0x4, offset = 0x4, fixed_abs, tag = 'smem constant byte address 0x4 - core index']
  #allocation1 [shape = 'u32[72,128]{1,0:T(1,128)}', space=vmem, size = 0x9000, scoped, tag = 'internal scratch']
  #allocation2 [shape = 'f32[72,64]{1,0:T(8,128)}', space=vmem, size = 0x9000, scoped, tag = 'scratch operand']
  %s0 = inlined_call_operand.vmem [shape: bf16[16,72,256], index: 0, kind: input, shape index: {}]
  %s1 = inlined_call_operand.vmem [shape: bf16[256,32], index: 1, kind: input, shape index: {}]
  %s2 = inlined_call_operand.vmem [shape: f32[1,32], index: 2, kind: input, shape index: {}]
  %s3 = inlined_call_operand.vmem [shape: bf16[16,32,64], index: 3, kind: input, shape index: {}]
  %s4 = inlined_call_operand.vmem [shape: f32[1,64], index: 4, kind: input, shape index: {}]
  %s5 = inlined_call_operand.vmem [shape: bf16[9,64,64], index: 5, kind: input, shape index: {}]
  %s6 = inlined_call_operand.vmem [shape: f32[1,64], index: 6, kind: input, shape index: {}]
  %s7 = inlined_call_operand.vmem [shape: bf16[64,1024], index: 7, kind: input, shape index: {}]
  %s8 = inlined_call_operand.vmem [shape: f32[1,1024], index: 8, kind: input, shape index: {}]
  %s9 = inlined_call_operand.vmem [shape: bf16[1024,7], index: 9, kind: input, shape index: {}]
  %s10 = inlined_call_operand.vmem [shape: f32[1,7], index: 10, kind: input, shape index: {}]
  %s11 = inlined_call_operand.vmem [shape: f32[8,6], index: 11, kind: output, shape index: {}]
  %s12 = sld [smem:[#allocation0]]
  $region54: #{dueling_dqn_forward.1} parent=0
    _
  %s14 = ssub.s32 1, %s12
  %s15 = scalar_select 0, %s14, %s12
  // Predicated region
  $region2: #{dueling_dqn_forward.1} parent=0 // pred_check
    _
  $region3: #{dueling_dqn_forward.1} parent=0 // pred_check_branch
    %17 = sbr.rel (0) target = $region5
  $region4: #{dueling_dqn_forward.1} parent=0 // pred_region
    _
  $region5: #{dueling_dqn_forward.1} parent=0 // pred_fallthru
    _
  // Predicated region
  $region6: #{dueling_dqn_forward.1} parent=0 // pred_check
    _
  $region7: #{dueling_dqn_forward.1} parent=0 // pred_check_branch
    %19 = sbr.rel (0) target = $region9
  $region8: #{dueling_dqn_forward.1} parent=0 // pred_region
    _
  $region9: #{dueling_dqn_forward.1} parent=0 // pred_fallthru
    _
  // Predicated region
  $region10: #{dueling_dqn_forward.1} parent=0 // pred_check
    _
  $region11: #{dueling_dqn_forward.1} parent=0 // pred_check_branch
    %21 = sbr.rel (0) target = $region13
  $region12: #{dueling_dqn_forward.1} parent=0 // pred_region
    _
  $region13: #{dueling_dqn_forward.1} parent=0 // pred_fallthru
    _
  // Predicated region
  $region14: #{dueling_dqn_forward.1} parent=0 // pred_check
    _
  $region15: #{dueling_dqn_forward.1} parent=0 // pred_check_branch
    %23 = sbr.rel (0) target = $region17
  $region16: #{dueling_dqn_forward.1} parent=0 // pred_region
    _
  $region17: #{dueling_dqn_forward.1} parent=0 // pred_fallthru
    _
  // Predicated region
  $region18: #{dueling_dqn_forward.1} parent=0 // pred_check
    _
  $region19: #{dueling_dqn_forward.1} parent=0 // pred_check_branch
    %25 = sbr.rel (0) target = $region21
  $region20: #{dueling_dqn_forward.1} parent=0 // pred_region
    _
  $region21: #{dueling_dqn_forward.1} parent=0 // pred_fallthru
    _
  // Predicated region
  $region22: #{dueling_dqn_forward.1} parent=0 // pred_check
    _
  $region23: #{dueling_dqn_forward.1} parent=0 // pred_check_branch
    %27 = sbr.rel (0) target = $region25
  $region24: #{dueling_dqn_forward.1} parent=0 // pred_region
    _
  $region25: #{dueling_dqn_forward.1} parent=0 // pred_fallthru
    _
  // Predicated region
  $region26: #{dueling_dqn_forward.1} parent=0 // pred_check
    _
  $region27: #{dueling_dqn_forward.1} parent=0 // pred_check_branch
    %29 = sbr.rel (0) target = $region29
  $region28: #{dueling_dqn_forward.1} parent=0 // pred_region
    _
  $region29: #{dueling_dqn_forward.1} parent=0 // pred_fallthru
    _
  // Predicated region
  $region30: #{dueling_dqn_forward.1} parent=0 // pred_check
    _
  $region31: #{dueling_dqn_forward.1} parent=0 // pred_check_branch
    %31 = sbr.rel (0) target = $region33
  $region32: #{dueling_dqn_forward.1} parent=0 // pred_region
    _
  $region33: #{dueling_dqn_forward.1} parent=0 // pred_fallthru
    _
  // Predicated region
  $region34: #{dueling_dqn_forward.1} parent=0 // pred_check
    _
  $region35: #{dueling_dqn_forward.1} parent=0 // pred_check_branch
    %33 = sbr.rel (0) target = $region37
  $region36: #{dueling_dqn_forward.1} parent=0 // pred_region
    _
  $region37: #{dueling_dqn_forward.1} parent=0 // pred_fallthru
    _
  // Predicated region
  $region38: #{dueling_dqn_forward.1} parent=0 // pred_check
    _
  $region39: #{dueling_dqn_forward.1} parent=0 // pred_check_branch
    %35 = sbr.rel (0) target = $region41
  $region40: #{dueling_dqn_forward.1} parent=0 // pred_region
    _
  $region41: #{dueling_dqn_forward.1} parent=0 // pred_fallthru
    _
  // Predicated region
  $region42: #{dueling_dqn_forward.1} parent=0 // pred_check
    _
  $region43: #{dueling_dqn_forward.1} parent=0 // pred_check_branch
    %37 = sbr.rel (0) target = $region45
  $region44: #{dueling_dqn_forward.1} parent=0 // pred_region
    _
  $region45: #{dueling_dqn_forward.1} parent=0 // pred_fallthru
    _
  %v39 = vld [vmem:[%s1] sm:$0xf]
  %v40 = vld [vmem:[%s1 + $0x4] sm:$0xf]
  %v41 = vld [vmem:[%s1 + $0x8] sm:$0xf]
  %v42 = vld [vmem:[%s1 + $0xc] sm:$0xf]
  %v43 = vld [vmem:[%s1 + $0x10] sm:$0xf]
  %v44 = vld [vmem:[%s1 + $0x14] sm:$0xf]
  %v45 = vld [vmem:[%s1 + $0x18] sm:$0xf]
  %v46 = vld [vmem:[%s1 + $0x1c] sm:$0xf]
  %v47 = vld [vmem:[%s1 + $0x20] sm:$0xf]
  %v48 = vld [vmem:[%s1 + $0x24] sm:$0xf]
  %v49 = vld [vmem:[%s1 + $0x28] sm:$0xf]
  %v50 = vld [vmem:[%s1 + $0x2c] sm:$0xf]
  %v51 = vld [vmem:[%s1 + $0x30] sm:$0xf]
  %v52 = vld [vmem:[%s1 + $0x34] sm:$0xf]
  %v53 = vld [vmem:[%s1 + $0x38] sm:$0xf]
  %v54 = vld [vmem:[%s1 + $0x3c] sm:$0xf]
  %v55 = vld [vmem:[%s1 + $0x40] sm:$0xf]
  %v56 = vld [vmem:[%s1 + $0x44] sm:$0xf]
  %v57 = vld [vmem:[%s1 + $0x48] sm:$0xf]
  %v58 = vld [vmem:[%s1 + $0x4c] sm:$0xf]
  %v59 = vld [vmem:[%s1 + $0x50] sm:$0xf]
  %v60 = vld [vmem:[%s1 + $0x54] sm:$0xf]
  %v61 = vld [vmem:[%s1 + $0x58] sm:$0xf]
  %v62 = vld [vmem:[%s1 + $0x5c] sm:$0xf]
  %v63 = vld [vmem:[%s1 + $0x60] sm:$0xf]
  %v64 = vld [vmem:[%s1 + $0x64] sm:$0xf]
  %v65 = vld [vmem:[%s1 + $0x68] sm:$0xf]
  %v66 = vld [vmem:[%s1 + $0x6c] sm:$0xf]
  %v67 = vld [vmem:[%s1 + $0x70] sm:$0xf]
  %v68 = vld [vmem:[%s1 + $0x74] sm:$0xf]
  %v69 = vld [vmem:[%s1 + $0x78] sm:$0xf]
  %v70 = vld [vmem:[%s1 + $0x7c] sm:$0xf]
  %v71 = vld [vmem:[%s2] sm:$0x1]
  %v72 = vld [vmem:[%s0] sm:$0xff]
  %v73 = vld [vmem:[%s0 + $0x8] sm:$0xff]
  %v74 = vld [vmem:[%s0 + $0x10] sm:$0xff]
  %v75 = vld [vmem:[%s0 + $0x18] sm:$0xff]
  %v76 = vld [vmem:[%s0 + $0x20] sm:$0xff]
  %v77 = vld [vmem:[%s0 + $0x28] sm:$0xff]
  %v78 = vld [vmem:[%s0 + $0x30] sm:$0xff]
  %v79 = vld [vmem:[%s0 + $0x38] sm:$0xff]
  %v80 = vld [vmem:[%s0 + $0x40] sm:$0xff]
  %v82 = vperm.slane %v71, 0
  %v93 = vunpack.c.l.b16 %v72
  %v94 = vunpack.c.h.b16 %v72
  %v95 = vunpack.c.l.b16 %v73
  %v96 = vunpack.c.h.b16 %v73
  %v97 = vunpack.c.l.b16 %v74
  %v98 = vunpack.c.h.b16 %v74
  %v99 = vunpack.c.l.b16 %v75
  %v100 = vunpack.c.h.b16 %v75
  %v101 = vunpack.c.l.b16 %v76
  %v102 = vunpack.c.h.b16 %v76
  %v103 = vunpack.c.l.b16 %v77
  %v104 = vunpack.c.h.b16 %v77
  %v105 = vunpack.c.l.b16 %v78
  %v106 = vunpack.c.h.b16 %v78
  %v107 = vunpack.c.l.b16 %v79
  %v108 = vunpack.c.h.b16 %v79
  %v109 = vunpack.c.l.b16 %v80
  %v110 = vunpack.c.h.b16 %v80
  %v111 = vpack.c.b16 %v95, %v93
  %v112 = vpack.c.b16 %v96, %v94
  %v113 = vpack.c.b16 %v99, %v97
  %v114 = vpack.c.b16 %v100, %v98
  %v115 = vpack.c.b16 %v103, %v101
  %v116 = vpack.c.b16 %v104, %v102
  %v117 = vpack.c.b16 %v107, %v105
  %v118 = vpack.c.b16 %v108, %v106
  %v119 = vpack.c.b16 %v109, %v109
  %v120 = vpack.c.b16 %v110, %v110
  %v163 = vunpack.c.l.b16 %v39
  %v164 = vunpack.c.l.b16 %v40
  %v165 = vunpack.c.l.b16 %v41
  %v166 = vunpack.c.l.b16 %v42
  %v167 = vunpack.c.l.b16 %v43
  %v168 = vunpack.c.l.b16 %v44
  %v169 = vunpack.c.l.b16 %v45
  %v170 = vunpack.c.l.b16 %v46
  %v171 = vunpack.c.l.b16 %v47
  %v172 = vunpack.c.l.b16 %v48
  %v173 = vunpack.c.l.b16 %v49
  %v174 = vunpack.c.l.b16 %v50
  %v175 = vunpack.c.l.b16 %v51
  %v176 = vunpack.c.l.b16 %v52
  %v177 = vunpack.c.l.b16 %v53
  %v178 = vunpack.c.l.b16 %v54
  %v179 = vunpack.c.l.b16 %v55
  %v180 = vunpack.c.l.b16 %v56
  %v181 = vunpack.c.l.b16 %v57
  %v182 = vunpack.c.l.b16 %v58
  %v183 = vunpack.c.l.b16 %v59
  %v184 = vunpack.c.l.b16 %v60
  %v185 = vunpack.c.l.b16 %v61
  %v186 = vunpack.c.l.b16 %v62
  %v187 = vunpack.c.l.b16 %v63
  %v188 = vunpack.c.l.b16 %v64
  %v189 = vunpack.c.l.b16 %v65
  %v190 = vunpack.c.l.b16 %v66
  %v191 = vunpack.c.l.b16 %v67
  %v192 = vunpack.c.l.b16 %v68
  %v193 = vunpack.c.l.b16 %v69
  %v194 = vunpack.c.l.b16 %v70
  %v195 = vpack.c.b16 %v164, %v163
  %v196 = vpack.c.b16 %v166, %v165
  %v197 = vpack.c.b16 %v168, %v167
  %v198 = vpack.c.b16 %v170, %v169
  %v199 = vpack.c.b16 %v172, %v171
  %v200 = vpack.c.b16 %v174, %v173
  %v201 = vpack.c.b16 %v176, %v175
  %v202 = vpack.c.b16 %v178, %v177
  %v203 = vpack.c.b16 %v180, %v179
  %v204 = vpack.c.b16 %v182, %v181
  %v205 = vpack.c.b16 %v184, %v183
  %v206 = vpack.c.b16 %v186, %v185
  %v207 = vpack.c.b16 %v188, %v187
  %v208 = vpack.c.b16 %v190, %v189
  %v209 = vpack.c.b16 %v192, %v191
  %v210 = vpack.c.b16 %v194, %v193
  %227 = vmatpush.bf16.msra.mxu0 %v202
  %228 = vmatpush.bf16.msra.mxu0 %v201
  %229 = vmatpush.bf16.msra.mxu0 %v200
  %230 = vmatpush.bf16.msra.mxu0 %v199
  %231 = vmatpush.bf16.msra.mxu0 %v198
  %232 = vmatpush.bf16.msra.mxu0 %v197
  %233 = vmatpush.bf16.msra.mxu0 %v196
  %234 = vmatpush.bf16.msra.mxu0 %v195
  %235 = vmatmul.bf16.gmra.mxu0 %v111
  %v236 = vpop.f32.mrf.mxu0
  %v237 = vadd.f32 %v82, %v236
  %v238 = vpop.f32.mrf.mxu0
  %v239 = vadd.f32 %v82, %v238
  %240 = vmatmul.bf16.gmra.mxu0 %v113
  %v241 = vpop.f32.mrf.mxu0
  %v242 = vadd.f32 %v82, %v241
  %v243 = vpop.f32.mrf.mxu0
  %v244 = vadd.f32 %v82, %v243
  %245 = vmatmul.bf16.gmra.mxu0 %v115
  %v246 = vpop.f32.mrf.mxu0
  %v247 = vadd.f32 %v82, %v246
  %v248 = vpop.f32.mrf.mxu0
  %v249 = vadd.f32 %v82, %v248
  %250 = vmatmul.bf16.gmra.mxu0 %v117
  %v251 = vpop.f32.mrf.mxu0
  %v252 = vadd.f32 %v82, %v251
  %v253 = vpop.f32.mrf.mxu0
  %v254 = vadd.f32 %v82, %v253
  %255 = vmatmul.bf16.gmra.mxu0 %v119
  %v256 = vpop.f32.mrf.mxu0
  %v257 = vadd.f32 %v82, %v256
  %v258 = vpop.f32.mrf.mxu0
  %259 = vdwg.mxu0
  %260 = vmatpush.bf16.msra.mxu0 %v210
  %261 = vmatpush.bf16.msra.mxu0 %v209
  %262 = vmatpush.bf16.msra.mxu0 %v208
  %263 = vmatpush.bf16.msra.mxu0 %v207
  %264 = vmatpush.bf16.msra.mxu0 %v206
  %265 = vmatpush.bf16.msra.mxu0 %v205
  %266 = vmatpush.bf16.msra.mxu0 %v204
  %267 = vmatpush.bf16.msra.mxu0 %v203
  %268 = vmatmul.bf16.gmra.mxu0 %v112
  %v269 = vpop.f32.mrf.mxu0
  %v270 = vadd.f32 %v237, %v269
  %v271 = vpop.f32.mrf.mxu0
  %v272 = vadd.f32 %v239, %v271
  %273 = vmatmul.bf16.gmra.mxu0 %v114
  %v274 = vpop.f32.mrf.mxu0
  %v275 = vadd.f32 %v242, %v274
  %v276 = vpop.f32.mrf.mxu0
  %v277 = vadd.f32 %v244, %v276
  %278 = vmatmul.bf16.gmra.mxu0 %v116
  %v279 = vpop.f32.mrf.mxu0
  %v280 = vadd.f32 %v247, %v279
  %v281 = vpop.f32.mrf.mxu0
  %v282 = vadd.f32 %v249, %v281
  %283 = vmatmul.bf16.gmra.mxu0 %v118
  %v284 = vpop.f32.mrf.mxu0
  %v285 = vadd.f32 %v252, %v284
  %v286 = vpop.f32.mrf.mxu0
  %v287 = vadd.f32 %v254, %v286
  %288 = vmatmul.bf16.gmra.mxu0 %v120
  %v289 = vpop.f32.mrf.mxu0
  %v290 = vadd.f32 %v257, %v289
  %v291 = vpop.f32.mrf.mxu0
  %292 = vdwg.mxu0
  %v293 = vmax.f32 %v270, 0.0
  %v294 = vmax.f32 %v272, 0.0
  %v295 = vmax.f32 %v275, 0.0
  %v296 = vmax.f32 %v277, 0.0
  %v297 = vmax.f32 %v280, 0.0
  %v298 = vmax.f32 %v282, 0.0
  %v299 = vmax.f32 %v285, 0.0
  %v300 = vmax.f32 %v287, 0.0
  %v301 = vmax.f32 %v290, 0.0
  %v302 = vpack.c.bf16 %v294, %v293
  %v303 = vpack.c.bf16 %v296, %v295
  %v304 = vpack.c.bf16 %v298, %v297
  %v305 = vpack.c.bf16 %v300, %v299
  %v306 = vpack.c.bf16 %v301, %v301
  %v307 = vld [vmem:[%s3] sm:$0xf]
  %v308 = vld [vmem:[%s3 + $0x4] sm:$0xf]
  %v309 = vld [vmem:[%s3 + $0x8] sm:$0xf]
  %v310 = vld [vmem:[%s3 + $0xc] sm:$0xf]
  %s311 = scalar_lea.vmem %s0, 72
  %v312 = vld [vmem:[%s311] sm:$0xff]
  %v313 = vld [vmem:[%s311 + $0x8] sm:$0xff]
  %v314 = vld [vmem:[%s311 + $0x10] sm:$0xff]
  %v315 = vld [vmem:[%s311 + $0x18] sm:$0xff]
  %v316 = vld [vmem:[%s311 + $0x20] sm:$0xff]
  %v317 = vld [vmem:[%s311 + $0x28] sm:$0xff]
  %v318 = vld [vmem:[%s311 + $0x30] sm:$0xff]
  %v319 = vld [vmem:[%s311 + $0x38] sm:$0xff]
  %v320 = vld [vmem:[%s311 + $0x40] sm:$0xff]
  %v330 = vunpack.c.l.b16 %v312
  %v331 = vunpack.c.h.b16 %v312
  %v332 = vunpack.c.l.b16 %v313
  %v333 = vunpack.c.h.b16 %v313
  %v334 = vunpack.c.l.b16 %v314
  %v335 = vunpack.c.h.b16 %v314
  %v336 = vunpack.c.l.b16 %v315
  %v337 = vunpack.c.h.b16 %v315
  %v338 = vunpack.c.l.b16 %v316
  %v339 = vunpack.c.h.b16 %v316
  %v340 = vunpack.c.l.b16 %v317
  %v341 = vunpack.c.h.b16 %v317
  %v342 = vunpack.c.l.b16 %v318
  %v343 = vunpack.c.h.b16 %v318
  %v344 = vunpack.c.l.b16 %v319
  %v345 = vunpack.c.h.b16 %v319
  %v346 = vunpack.c.l.b16 %v320
  %v347 = vunpack.c.h.b16 %v320
  %v348 = vpack.c.b16 %v332, %v330
  %v349 = vpack.c.b16 %v333, %v331
  %v350 = vpack.c.b16 %v336, %v334
  %v351 = vpack.c.b16 %v337, %v335
  %v352 = vpack.c.b16 %v340, %v338
  %v353 = vpack.c.b16 %v341, %v339
  %v354 = vpack.c.b16 %v344, %v342
  %v355 = vpack.c.b16 %v345, %v343
  %v356 = vpack.c.b16 %v346, %v346
  %v357 = vpack.c.b16 %v347, %v347
  %368 = vmatpush.bf16.msra.mxu0 %v202
  %369 = vmatpush.bf16.msra.mxu0 %v201
  %370 = vmatpush.bf16.msra.mxu0 %v200
  %371 = vmatpush.bf16.msra.mxu0 %v199
  %372 = vmatpush.bf16.msra.mxu0 %v198
  %373 = vmatpush.bf16.msra.mxu0 %v197
  %374 = vmatpush.bf16.msra.mxu0 %v196
  %375 = vmatpush.bf16.msra.mxu0 %v195
  %376 = vmatmul.bf16.gmra.mxu0 %v348
  %v377 = vpop.f32.mrf.mxu0
  %v378 = vadd.f32 %v82, %v377
  %v379 = vpop.f32.mrf.mxu0
  %v380 = vadd.f32 %v82, %v379
  %381 = vmatmul.bf16.gmra.mxu0 %v350
  %v382 = vpop.f32.mrf.mxu0
  %v383 = vadd.f32 %v82, %v382
  %v384 = vpop.f32.mrf.mxu0
  %v385 = vadd.f32 %v82, %v384
  %386 = vmatmul.bf16.gmra.mxu0 %v352
  %v387 = vpop.f32.mrf.mxu0
  %v388 = vadd.f32 %v82, %v387
  %v389 = vpop.f32.mrf.mxu0
  %v390 = vadd.f32 %v82, %v389
  %391 = vmatmul.bf16.gmra.mxu0 %v354
  %v392 = vpop.f32.mrf.mxu0
  %v393 = vadd.f32 %v82, %v392
  %v394 = vpop.f32.mrf.mxu0
  %v395 = vadd.f32 %v82, %v394
  %396 = vmatmul.bf16.gmra.mxu0 %v356
  %v397 = vpop.f32.mrf.mxu0
  %v398 = vadd.f32 %v82, %v397
  %v399 = vpop.f32.mrf.mxu0
  %400 = vdwg.mxu0
  %401 = vmatpush.bf16.msra.mxu0 %v210
  %402 = vmatpush.bf16.msra.mxu0 %v209
  %403 = vmatpush.bf16.msra.mxu0 %v208
  %404 = vmatpush.bf16.msra.mxu0 %v207
  %405 = vmatpush.bf16.msra.mxu0 %v206
  %406 = vmatpush.bf16.msra.mxu0 %v205
  %407 = vmatpush.bf16.msra.mxu0 %v204
  %408 = vmatpush.bf16.msra.mxu0 %v203
  %409 = vmatmul.bf16.gmra.mxu0 %v349
  %v410 = vpop.f32.mrf.mxu0
  %v411 = vadd.f32 %v378, %v410
  %v412 = vpop.f32.mrf.mxu0
  %v413 = vadd.f32 %v380, %v412
  %414 = vmatmul.bf16.gmra.mxu0 %v351
  %v415 = vpop.f32.mrf.mxu0
  %v416 = vadd.f32 %v383, %v415
  %v417 = vpop.f32.mrf.mxu0
  %v418 = vadd.f32 %v385, %v417
  %419 = vmatmul.bf16.gmra.mxu0 %v353
  %v420 = vpop.f32.mrf.mxu0
  %v421 = vadd.f32 %v388, %v420
  %v422 = vpop.f32.mrf.mxu0
  %v423 = vadd.f32 %v390, %v422
  %424 = vmatmul.bf16.gmra.mxu0 %v355
  %v425 = vpop.f32.mrf.mxu0
  %v426 = vadd.f32 %v393, %v425
  %v427 = vpop.f32.mrf.mxu0
  %v428 = vadd.f32 %v395, %v427
  %429 = vmatmul.bf16.gmra.mxu0 %v357
  %v430 = vpop.f32.mrf.mxu0
  %v431 = vadd.f32 %v398, %v430
  %v432 = vpop.f32.mrf.mxu0
  %433 = vdwg.mxu0
  %v434 = vmax.f32 %v411, 0.0
  %v435 = vmax.f32 %v413, 0.0
  %v436 = vmax.f32 %v416, 0.0
  %v437 = vmax.f32 %v418, 0.0
  %v438 = vmax.f32 %v421, 0.0
  %v439 = vmax.f32 %v423, 0.0
  %v440 = vmax.f32 %v426, 0.0
  %v441 = vmax.f32 %v428, 0.0
  %v442 = vmax.f32 %v431, 0.0
  %v443 = vpack.c.bf16 %v435, %v434
  %v444 = vpack.c.bf16 %v437, %v436
  %v445 = vpack.c.bf16 %v439, %v438
  %v446 = vpack.c.bf16 %v441, %v440
  %v447 = vpack.c.bf16 %v442, %v442
  %s448 = scalar_lea.vmem %s3, 16
  %v449 = vld [vmem:[%s448] sm:$0xf]
  %v450 = vld [vmem:[%s448 + $0x4] sm:$0xf]
  %v451 = vld [vmem:[%s448 + $0x8] sm:$0xf]
  %v452 = vld [vmem:[%s448 + $0xc] sm:$0xf]
  %v457 = vunpack.c.l.b16 %v449
  %v458 = vunpack.c.l.b16 %v450
  %v459 = vunpack.c.l.b16 %v451
  %v460 = vunpack.c.l.b16 %v452
  %v461 = vpack.c.b16 %v458, %v457
  %v462 = vpack.c.b16 %v460, %v459
  %vm465 = vcmask 261120
  %v467 = vsel %vm465, %v443, 0
  %v470 = vsel %vm465, %v444, 0
  %v473 = vsel %vm465, %v445, 0
  %v476 = vsel %vm465, %v446, 0
  %v479 = vsel %vm465, %v447, 0
  %481 = vmatpush.bf16.msra.mxu0 0
  %482 = vmatpush.bf16.msra.mxu0 0
  %483 = vmatpush.bf16.msra.mxu0 0
  %484 = vmatpush.bf16.msra.mxu0 0
  %485 = vmatpush.bf16.msra.mxu0 0
  %486 = vmatpush.bf16.msra.mxu0 0
  %487 = vmatpush.bf16.msra.mxu0 %v462
  %488 = vmatpush.bf16.msra.mxu0 %v461
  %489 = vmatmul.bf16.gmra.mxu0 %v467
  %v490 = vpop.f32.mrf.mxu0
  %v491 = vadd.f32 0.0, %v490
  %v492 = vpop.f32.mrf.mxu0
  %v493 = vadd.f32 0.0, %v492
  %494 = vmatmul.bf16.gmra.mxu0 %v470
  %v495 = vpop.f32.mrf.mxu0
  %v496 = vadd.f32 0.0, %v495
  %v497 = vpop.f32.mrf.mxu0
  %v498 = vadd.f32 0.0, %v497
  %499 = vmatmul.bf16.gmra.mxu0 %v473
  %v500 = vpop.f32.mrf.mxu0
  %v501 = vadd.f32 0.0, %v500
  %v502 = vpop.f32.mrf.mxu0
  %v503 = vadd.f32 0.0, %v502
  %504 = vmatmul.bf16.gmra.mxu0 %v476
  %v505 = vpop.f32.mrf.mxu0
  %v506 = vadd.f32 0.0, %v505
  %v507 = vpop.f32.mrf.mxu0
  %v508 = vadd.f32 0.0, %v507
  %509 = vmatmul.bf16.gmra.mxu0 %v479
  %v510 = vpop.f32.mrf.mxu0
  %v511 = vadd.f32 0.0, %v510
  %v512 = vpop.f32.mrf.mxu0
  %513 = vdwg.mxu0
  %v518 = vunpack.c.l.b16 %v307
  %v519 = vunpack.c.l.b16 %v308
  %v520 = vunpack.c.l.b16 %v309
  %v521 = vunpack.c.l.b16 %v310
  %v522 = vpack.c.b16 %v519, %v518
  %v523 = vpack.c.b16 %v521, %v520
  %v527 = vsel %vm465, %v302, 0
  %v530 = vsel %vm465, %v303, 0
  %v533 = vsel %vm465, %v304, 0
  %v536 = vsel %vm465, %v305, 0
  %v539 = vsel %vm465, %v306, 0
  %541 = vmatpush.bf16.msra.mxu0 0
  %542 = vmatpush.bf16.msra.mxu0 0
  %543 = vmatpush.bf16.msra.mxu0 0
  %544 = vmatpush.bf16.msra.mxu0 0
  %545 = vmatpush.bf16.msra.mxu0 0
  %546 = vmatpush.bf16.msra.mxu0 0
  %547 = vmatpush.bf16.msra.mxu0 %v523
  %548 = vmatpush.bf16.msra.mxu0 %v522
  %549 = vmatmul.bf16.gmra.mxu0 %v527
  %v550 = vpop.f32.mrf.mxu0
  %v551 = vadd.f32 %v491, %v550
  %v552 = vpop.f32.mrf.mxu0
  %v553 = vadd.f32 %v493, %v552
  %554 = vmatmul.bf16.gmra.mxu0 %v530
  %v555 = vpop.f32.mrf.mxu0
  %v556 = vadd.f32 %v496, %v555
  %v557 = vpop.f32.mrf.mxu0
  %v558 = vadd.f32 %v498, %v557
  %559 = vmatmul.bf16.gmra.mxu0 %v533
  %v560 = vpop.f32.mrf.mxu0
  %v561 = vadd.f32 %v501, %v560
  %v562 = vpop.f32.mrf.mxu0
  %v563 = vadd.f32 %v503, %v562
  %564 = vmatmul.bf16.gmra.mxu0 %v536
  %v565 = vpop.f32.mrf.mxu0
  %v566 = vadd.f32 %v506, %v565
  %v567 = vpop.f32.mrf.mxu0
  %v568 = vadd.f32 %v508, %v567
  %569 = vmatmul.bf16.gmra.mxu0 %v539
  %v570 = vpop.f32.mrf.mxu0
  %v571 = vadd.f32 %v511, %v570
  %v572 = vpop.f32.mrf.mxu0
  %573 = vdwg.mxu0
  %s574 = scalar_lea.vmem %s0, 144
  %v575 = vld [vmem:[%s574] sm:$0xff]
  %v576 = vld [vmem:[%s574 + $0x8] sm:$0xff]
  %v577 = vld [vmem:[%s574 + $0x10] sm:$0xff]
  %v578 = vld [vmem:[%s574 + $0x18] sm:$0xff]
  %v579 = vld [vmem:[%s574 + $0x20] sm:$0xff]
  %v580 = vld [vmem:[%s574 + $0x28] sm:$0xff]
  %v581 = vld [vmem:[%s574 + $0x30] sm:$0xff]
  %v582 = vld [vmem:[%s574 + $0x38] sm:$0xff]
  %v583 = vld [vmem:[%s574 + $0x40] sm:$0xff]
  %v593 = vunpack.c.l.b16 %v575
  %v594 = vunpack.c.h.b16 %v575
  %v595 = vunpack.c.l.b16 %v576
  %v596 = vunpack.c.h.b16 %v576
  %v597 = vunpack.c.l.b16 %v577
  %v598 = vunpack.c.h.b16 %v577
  %v599 = vunpack.c.l.b16 %v578
  %v600 = vunpack.c.h.b16 %v578
  %v601 = vunpack.c.l.b16 %v579
  %v602 = vunpack.c.h.b16 %v579
  %v603 = vunpack.c.l.b16 %v580
  %v604 = vunpack.c.h.b16 %v580
  %v605 = vunpack.c.l.b16 %v581
  %v606 = vunpack.c.h.b16 %v581
  %v607 = vunpack.c.l.b16 %v582
  %v608 = vunpack.c.h.b16 %v582
  %v609 = vunpack.c.l.b16 %v583
  %v610 = vunpack.c.h.b16 %v583
  %v611 = vpack.c.b16 %v595, %v593
  %v612 = vpack.c.b16 %v596, %v594
  %v613 = vpack.c.b16 %v599, %v597
  %v614 = vpack.c.b16 %v600, %v598
  %v615 = vpack.c.b16 %v603, %v601
  %v616 = vpack.c.b16 %v604, %v602
  %v617 = vpack.c.b16 %v607, %v605
  %v618 = vpack.c.b16 %v608, %v606
  %v619 = vpack.c.b16 %v609, %v609
  %v620 = vpack.c.b16 %v610, %v610
  %631 = vmatpush.bf16.msra.mxu0 %v202
  %632 = vmatpush.bf16.msra.mxu0 %v201
  %633 = vmatpush.bf16.msra.mxu0 %v200
  %634 = vmatpush.bf16.msra.mxu0 %v199
  %635 = vmatpush.bf16.msra.mxu0 %v198
  %636 = vmatpush.bf16.msra.mxu0 %v197
  %637 = vmatpush.bf16.msra.mxu0 %v196
  %638 = vmatpush.bf16.msra.mxu0 %v195
  %639 = vmatmul.bf16.gmra.mxu0 %v611
  %v640 = vpop.f32.mrf.mxu0
  %v641 = vadd.f32 %v82, %v640
  %v642 = vpop.f32.mrf.mxu0
  %v643 = vadd.f32 %v82, %v642
  %644 = vmatmul.bf16.gmra.mxu0 %v613
  %v645 = vpop.f32.mrf.mxu0
  %v646 = vadd.f32 %v82, %v645
  %v647 = vpop.f32.mrf.mxu0
  %v648 = vadd.f32 %v82, %v647
  %649 = vmatmul.bf16.gmra.mxu0 %v615
  %v650 = vpop.f32.mrf.mxu0
  %v651 = vadd.f32 %v82, %v650
  %v652 = vpop.f32.mrf.mxu0
  %v653 = vadd.f32 %v82, %v652
  %654 = vmatmul.bf16.gmra.mxu0 %v617
  %v655 = vpop.f32.mrf.mxu0
  %v656 = vadd.f32 %v82, %v655
  %v657 = vpop.f32.mrf.mxu0
  %v658 = vadd.f32 %v82, %v657
  %659 = vmatmul.bf16.gmra.mxu0 %v619
  %v660 = vpop.f32.mrf.mxu0
  %v661 = vadd.f32 %v82, %v660
  %v662 = vpop.f32.mrf.mxu0
  %663 = vdwg.mxu0
  %664 = vmatpush.bf16.msra.mxu0 %v210
  %665 = vmatpush.bf16.msra.mxu0 %v209
  %666 = vmatpush.bf16.msra.mxu0 %v208
  %667 = vmatpush.bf16.msra.mxu0 %v207
  %668 = vmatpush.bf16.msra.mxu0 %v206
  %669 = vmatpush.bf16.msra.mxu0 %v205
  %670 = vmatpush.bf16.msra.mxu0 %v204
  %671 = vmatpush.bf16.msra.mxu0 %v203
  %672 = vmatmul.bf16.gmra.mxu0 %v612
  %v673 = vpop.f32.mrf.mxu0
  %v674 = vadd.f32 %v641, %v673
  %v675 = vpop.f32.mrf.mxu0
  %v676 = vadd.f32 %v643, %v675
  %677 = vmatmul.bf16.gmra.mxu0 %v614
  %v678 = vpop.f32.mrf.mxu0
  %v679 = vadd.f32 %v646, %v678
  %v680 = vpop.f32.mrf.mxu0
  %v681 = vadd.f32 %v648, %v680
  %682 = vmatmul.bf16.gmra.mxu0 %v616
  %v683 = vpop.f32.mrf.mxu0
  %v684 = vadd.f32 %v651, %v683
  %v685 = vpop.f32.mrf.mxu0
  %v686 = vadd.f32 %v653, %v685
  %687 = vmatmul.bf16.gmra.mxu0 %v618
  %v688 = vpop.f32.mrf.mxu0
  %v689 = vadd.f32 %v656, %v688
  %v690 = vpop.f32.mrf.mxu0
  %v691 = vadd.f32 %v658, %v690
  %692 = vmatmul.bf16.gmra.mxu0 %v620
  %v693 = vpop.f32.mrf.mxu0
  %v694 = vadd.f32 %v661, %v693
  %v695 = vpop.f32.mrf.mxu0
  %696 = vdwg.mxu0
  %v697 = vmax.f32 %v674, 0.0
  %v698 = vmax.f32 %v676, 0.0
  %v699 = vmax.f32 %v679, 0.0
  %v700 = vmax.f32 %v681, 0.0
  %v701 = vmax.f32 %v684, 0.0
  %v702 = vmax.f32 %v686, 0.0
  %v703 = vmax.f32 %v689, 0.0
  %v704 = vmax.f32 %v691, 0.0
  %v705 = vmax.f32 %v694, 0.0
  %v706 = vpack.c.bf16 %v698, %v697
  %v707 = vpack.c.bf16 %v700, %v699
  %v708 = vpack.c.bf16 %v702, %v701
  %v709 = vpack.c.bf16 %v704, %v703
  %v710 = vpack.c.bf16 %v705, %v705
  %s711 = scalar_lea.vmem %s3, 32
  %v712 = vld [vmem:[%s711] sm:$0xf]
  %v713 = vld [vmem:[%s711 + $0x4] sm:$0xf]
  %v714 = vld [vmem:[%s711 + $0x8] sm:$0xf]
  %v715 = vld [vmem:[%s711 + $0xc] sm:$0xf]
  %v720 = vunpack.c.l.b16 %v712
  %v721 = vunpack.c.l.b16 %v713
  %v722 = vunpack.c.l.b16 %v714
  %v723 = vunpack.c.l.b16 %v715
  %v724 = vpack.c.b16 %v721, %v720
  %v725 = vpack.c.b16 %v723, %v722
  %v729 = vsel %vm465, %v706, 0
  %v732 = vsel %vm465, %v707, 0
  %v735 = vsel %vm465, %v708, 0
  %v738 = vsel %vm465, %v709, 0
  %v741 = vsel %vm465, %v710, 0
  %743 = vmatpush.bf16.msra.mxu0 0
  %744 = vmatpush.bf16.msra.mxu0 0
  %745 = vmatpush.bf16.msra.mxu0 0
  %746 = vmatpush.bf16.msra.mxu0 0
  %747 = vmatpush.bf16.msra.mxu0 0
  %748 = vmatpush.bf16.msra.mxu0 0
  %749 = vmatpush.bf16.msra.mxu0 %v725
  %750 = vmatpush.bf16.msra.mxu0 %v724
  %751 = vmatmul.bf16.gmra.mxu0 %v729
  %v752 = vpop.f32.mrf.mxu0
  %v753 = vadd.f32 0.0, %v752
  %v754 = vpop.f32.mrf.mxu0
  %v755 = vadd.f32 0.0, %v754
  %756 = vmatmul.bf16.gmra.mxu0 %v732
  %v757 = vpop.f32.mrf.mxu0
  %v758 = vadd.f32 0.0, %v757
  %v759 = vpop.f32.mrf.mxu0
  %v760 = vadd.f32 0.0, %v759
  %761 = vmatmul.bf16.gmra.mxu0 %v735
  %v762 = vpop.f32.mrf.mxu0
  %v763 = vadd.f32 0.0, %v762
  %v764 = vpop.f32.mrf.mxu0
  %v765 = vadd.f32 0.0, %v764
  %766 = vmatmul.bf16.gmra.mxu0 %v738
  %v767 = vpop.f32.mrf.mxu0
  %v768 = vadd.f32 0.0, %v767
  %v769 = vpop.f32.mrf.mxu0
  %v770 = vadd.f32 0.0, %v769
  %771 = vmatmul.bf16.gmra.mxu0 %v741
  %v772 = vpop.f32.mrf.mxu0
  %v773 = vadd.f32 0.0, %v772
  %v774 = vpop.f32.mrf.mxu0
  %775 = vdwg.mxu0
  %v776 = vadd.f32 %v551, %v753
  %v777 = vadd.f32 %v553, %v755
  %v778 = vadd.f32 %v556, %v758
  %v779 = vadd.f32 %v558, %v760
  %v780 = vadd.f32 %v561, %v763
  %v781 = vadd.f32 %v563, %v765
  %v782 = vadd.f32 %v566, %v768
  %v783 = vadd.f32 %v568, %v770
  %v784 = vadd.f32 %v571, %v773
  %s785 = scalar_lea.vmem %s0, 216
  %v786 = vld [vmem:[%s785] sm:$0xff]
  %v787 = vld [vmem:[%s785 + $0x8] sm:$0xff]
  %v788 = vld [vmem:[%s785 + $0x10] sm:$0xff]
  %v789 = vld [vmem:[%s785 + $0x18] sm:$0xff]
  %v790 = vld [vmem:[%s785 + $0x20] sm:$0xff]
  %v791 = vld [vmem:[%s785 + $0x28] sm:$0xff]
  %v792 = vld [vmem:[%s785 + $0x30] sm:$0xff]
  %v793 = vld [vmem:[%s785 + $0x38] sm:$0xff]
  %v794 = vld [vmem:[%s785 + $0x40] sm:$0xff]
  %v804 = vunpack.c.l.b16 %v786
  %v805 = vunpack.c.h.b16 %v786
  %v806 = vunpack.c.l.b16 %v787
  %v807 = vunpack.c.h.b16 %v787
  %v808 = vunpack.c.l.b16 %v788
  %v809 = vunpack.c.h.b16 %v788
  %v810 = vunpack.c.l.b16 %v789
  %v811 = vunpack.c.h.b16 %v789
  %v812 = vunpack.c.l.b16 %v790
  %v813 = vunpack.c.h.b16 %v790
  %v814 = vunpack.c.l.b16 %v791
  %v815 = vunpack.c.h.b16 %v791
  %v816 = vunpack.c.l.b16 %v792
  %v817 = vunpack.c.h.b16 %v792
  %v818 = vunpack.c.l.b16 %v793
  %v819 = vunpack.c.h.b16 %v793
  %v820 = vunpack.c.l.b16 %v794
  %v821 = vunpack.c.h.b16 %v794
  %v822 = vpack.c.b16 %v806, %v804
  %v823 = vpack.c.b16 %v807, %v805
  %v824 = vpack.c.b16 %v810, %v808
  %v825 = vpack.c.b16 %v811, %v809
  %v826 = vpack.c.b16 %v814, %v812
  %v827 = vpack.c.b16 %v815, %v813
  %v828 = vpack.c.b16 %v818, %v816
  %v829 = vpack.c.b16 %v819, %v817
  %v830 = vpack.c.b16 %v820, %v820
  %v831 = vpack.c.b16 %v821, %v821
  %842 = vmatpush.bf16.msra.mxu0 %v202
  %843 = vmatpush.bf16.msra.mxu0 %v201
  %844 = vmatpush.bf16.msra.mxu0 %v200
  %845 = vmatpush.bf16.msra.mxu0 %v199
  %846 = vmatpush.bf16.msra.mxu0 %v198
  %847 = vmatpush.bf16.msra.mxu0 %v197
  %848 = vmatpush.bf16.msra.mxu0 %v196
  %849 = vmatpush.bf16.msra.mxu0 %v195
  %850 = vmatmul.bf16.gmra.mxu0 %v822
  %v851 = vpop.f32.mrf.mxu0
  %v852 = vadd.f32 %v82, %v851
  %v853 = vpop.f32.mrf.mxu0
  %v854 = vadd.f32 %v82, %v853
  %855 = vmatmul.bf16.gmra.mxu0 %v824
  %v856 = vpop.f32.mrf.mxu0
  %v857 = vadd.f32 %v82, %v856
  %v858 = vpop.f32.mrf.mxu0
  %v859 = vadd.f32 %v82, %v858
  %860 = vmatmul.bf16.gmra.mxu0 %v826
  %v861 = vpop.f32.mrf.mxu0
  %v862 = vadd.f32 %v82, %v861
  %v863 = vpop.f32.mrf.mxu0
  %v864 = vadd.f32 %v82, %v863
  %865 = vmatmul.bf16.gmra.mxu0 %v828
  %v866 = vpop.f32.mrf.mxu0
  %v867 = vadd.f32 %v82, %v866
  %v868 = vpop.f32.mrf.mxu0
  %v869 = vadd.f32 %v82, %v868
  %870 = vmatmul.bf16.gmra.mxu0 %v830
  %v871 = vpop.f32.mrf.mxu0
  %v872 = vadd.f32 %v82, %v871
  %v873 = vpop.f32.mrf.mxu0
  %874 = vdwg.mxu0
  %875 = vmatpush.bf16.msra.mxu0 %v210
  %876 = vmatpush.bf16.msra.mxu0 %v209
  %877 = vmatpush.bf16.msra.mxu0 %v208
  %878 = vmatpush.bf16.msra.mxu0 %v207
  %879 = vmatpush.bf16.msra.mxu0 %v206
  %880 = vmatpush.bf16.msra.mxu0 %v205
  %881 = vmatpush.bf16.msra.mxu0 %v204
  %882 = vmatpush.bf16.msra.mxu0 %v203
  %883 = vmatmul.bf16.gmra.mxu0 %v823
  %v884 = vpop.f32.mrf.mxu0
  %v885 = vadd.f32 %v852, %v884
  %v886 = vpop.f32.mrf.mxu0
  %v887 = vadd.f32 %v854, %v886
  %888 = vmatmul.bf16.gmra.mxu0 %v825
  %v889 = vpop.f32.mrf.mxu0
  %v890 = vadd.f32 %v857, %v889
  %v891 = vpop.f32.mrf.mxu0
  %v892 = vadd.f32 %v859, %v891
  %893 = vmatmul.bf16.gmra.mxu0 %v827
  %v894 = vpop.f32.mrf.mxu0
  %v895 = vadd.f32 %v862, %v894
  %v896 = vpop.f32.mrf.mxu0
  %v897 = vadd.f32 %v864, %v896
  %898 = vmatmul.bf16.gmra.mxu0 %v829
  %v899 = vpop.f32.mrf.mxu0
  %v900 = vadd.f32 %v867, %v899
  %v901 = vpop.f32.mrf.mxu0
  %v902 = vadd.f32 %v869, %v901
  %903 = vmatmul.bf16.gmra.mxu0 %v831
  %v904 = vpop.f32.mrf.mxu0
  %v905 = vadd.f32 %v872, %v904
  %v906 = vpop.f32.mrf.mxu0
  %907 = vdwg.mxu0
  %v908 = vmax.f32 %v885, 0.0
  %v909 = vmax.f32 %v887, 0.0
  %v910 = vmax.f32 %v890, 0.0
  %v911 = vmax.f32 %v892, 0.0
  %v912 = vmax.f32 %v895, 0.0
  %v913 = vmax.f32 %v897, 0.0
  %v914 = vmax.f32 %v900, 0.0
  %v915 = vmax.f32 %v902, 0.0
  %v916 = vmax.f32 %v905, 0.0
  %v917 = vpack.c.bf16 %v909, %v908
  %v918 = vpack.c.bf16 %v911, %v910
  %v919 = vpack.c.bf16 %v913, %v912
  %v920 = vpack.c.bf16 %v915, %v914
  %v921 = vpack.c.bf16 %v916, %v916
  %s922 = scalar_lea.vmem %s3, 48
  %v923 = vld [vmem:[%s922] sm:$0xf]
  %v924 = vld [vmem:[%s922 + $0x4] sm:$0xf]
  %v925 = vld [vmem:[%s922 + $0x8] sm:$0xf]
  %v926 = vld [vmem:[%s922 + $0xc] sm:$0xf]
  %v931 = vunpack.c.l.b16 %v923
  %v932 = vunpack.c.l.b16 %v924
  %v933 = vunpack.c.l.b16 %v925
  %v934 = vunpack.c.l.b16 %v926
  %v935 = vpack.c.b16 %v932, %v931
  %v936 = vpack.c.b16 %v934, %v933
  %v940 = vsel %vm465, %v917, 0
  %v943 = vsel %vm465, %v918, 0
  %v946 = vsel %vm465, %v919, 0
  %v949 = vsel %vm465, %v920, 0
  %v952 = vsel %vm465, %v921, 0
  %954 = vmatpush.bf16.msra.mxu0 0
  %955 = vmatpush.bf16.msra.mxu0 0
  %956 = vmatpush.bf16.msra.mxu0 0
  %957 = vmatpush.bf16.msra.mxu0 0
  %958 = vmatpush.bf16.msra.mxu0 0
  %959 = vmatpush.bf16.msra.mxu0 0
  %960 = vmatpush.bf16.msra.mxu0 %v936
  %961 = vmatpush.bf16.msra.mxu0 %v935
  %962 = vmatmul.bf16.gmra.mxu0 %v940
  %v963 = vpop.f32.mrf.mxu0
  %v964 = vadd.f32 0.0, %v963
  %v965 = vpop.f32.mrf.mxu0
  %v966 = vadd.f32 0.0, %v965
  %967 = vmatmul.bf16.gmra.mxu0 %v943
  %v968 = vpop.f32.mrf.mxu0
  %v969 = vadd.f32 0.0, %v968
  %v970 = vpop.f32.mrf.mxu0
  %v971 = vadd.f32 0.0, %v970
  %972 = vmatmul.bf16.gmra.mxu0 %v946
  %v973 = vpop.f32.mrf.mxu0
  %v974 = vadd.f32 0.0, %v973
  %v975 = vpop.f32.mrf.mxu0
  %v976 = vadd.f32 0.0, %v975
  %977 = vmatmul.bf16.gmra.mxu0 %v949
  %v978 = vpop.f32.mrf.mxu0
  %v979 = vadd.f32 0.0, %v978
  %v980 = vpop.f32.mrf.mxu0
  %v981 = vadd.f32 0.0, %v980
  %982 = vmatmul.bf16.gmra.mxu0 %v952
  %v983 = vpop.f32.mrf.mxu0
  %v984 = vadd.f32 0.0, %v983
  %v985 = vpop.f32.mrf.mxu0
  %986 = vdwg.mxu0
  %v987 = vadd.f32 %v776, %v964
  %v988 = vadd.f32 %v777, %v966
  %v989 = vadd.f32 %v778, %v969
  %v990 = vadd.f32 %v779, %v971
  %v991 = vadd.f32 %v780, %v974
  %v992 = vadd.f32 %v781, %v976
  %v993 = vadd.f32 %v782, %v979
  %v994 = vadd.f32 %v783, %v981
  %v995 = vadd.f32 %v784, %v984
  %s996 = scalar_lea.vmem %s0, 288
  %v997 = vld [vmem:[%s996] sm:$0xff]
  %v998 = vld [vmem:[%s996 + $0x8] sm:$0xff]
  %v999 = vld [vmem:[%s996 + $0x10] sm:$0xff]
  %v1000 = vld [vmem:[%s996 + $0x18] sm:$0xff]
  %v1001 = vld [vmem:[%s996 + $0x20] sm:$0xff]
  %v1002 = vld [vmem:[%s996 + $0x28] sm:$0xff]
  %v1003 = vld [vmem:[%s996 + $0x30] sm:$0xff]
  %v1004 = vld [vmem:[%s996 + $0x38] sm:$0xff]
  %v1005 = vld [vmem:[%s996 + $0x40] sm:$0xff]
  %v1015 = vunpack.c.l.b16 %v997
  %v1016 = vunpack.c.h.b16 %v997
  %v1017 = vunpack.c.l.b16 %v998
  %v1018 = vunpack.c.h.b16 %v998
  %v1019 = vunpack.c.l.b16 %v999
  %v1020 = vunpack.c.h.b16 %v999
  %v1021 = vunpack.c.l.b16 %v1000
  %v1022 = vunpack.c.h.b16 %v1000
  %v1023 = vunpack.c.l.b16 %v1001
  %v1024 = vunpack.c.h.b16 %v1001
  %v1025 = vunpack.c.l.b16 %v1002
  %v1026 = vunpack.c.h.b16 %v1002
  %v1027 = vunpack.c.l.b16 %v1003
  %v1028 = vunpack.c.h.b16 %v1003
  %v1029 = vunpack.c.l.b16 %v1004
  %v1030 = vunpack.c.h.b16 %v1004
  %v1031 = vunpack.c.l.b16 %v1005
  %v1032 = vunpack.c.h.b16 %v1005
  %v1033 = vpack.c.b16 %v1017, %v1015
  %v1034 = vpack.c.b16 %v1018, %v1016
  %v1035 = vpack.c.b16 %v1021, %v1019
  %v1036 = vpack.c.b16 %v1022, %v1020
  %v1037 = vpack.c.b16 %v1025, %v1023
  %v1038 = vpack.c.b16 %v1026, %v1024
  %v1039 = vpack.c.b16 %v1029, %v1027
  %v1040 = vpack.c.b16 %v1030, %v1028
  %v1041 = vpack.c.b16 %v1031, %v1031
  %v1042 = vpack.c.b16 %v1032, %v1032
  %1053 = vmatpush.bf16.msra.mxu0 %v202
  %1054 = vmatpush.bf16.msra.mxu0 %v201
  %1055 = vmatpush.bf16.msra.mxu0 %v200
  %1056 = vmatpush.bf16.msra.mxu0 %v199
  %1057 = vmatpush.bf16.msra.mxu0 %v198
  %1058 = vmatpush.bf16.msra.mxu0 %v197
  %1059 = vmatpush.bf16.msra.mxu0 %v196
  %1060 = vmatpush.bf16.msra.mxu0 %v195
  %1061 = vmatmul.bf16.gmra.mxu0 %v1033
  %v1062 = vpop.f32.mrf.mxu0
  %v1063 = vadd.f32 %v82, %v1062
  %v1064 = vpop.f32.mrf.mxu0
  %v1065 = vadd.f32 %v82, %v1064
  %1066 = vmatmul.bf16.gmra.mxu0 %v1035
  %v1067 = vpop.f32.mrf.mxu0
  %v1068 = vadd.f32 %v82, %v1067
  %v1069 = vpop.f32.mrf.mxu0
  %v1070 = vadd.f32 %v82, %v1069
  %1071 = vmatmul.bf16.gmra.mxu0 %v1037
  %v1072 = vpop.f32.mrf.mxu0
  %v1073 = vadd.f32 %v82, %v1072
  %v1074 = vpop.f32.mrf.mxu0
  %v1075 = vadd.f32 %v82, %v1074
  %1076 = vmatmul.bf16.gmra.mxu0 %v1039
  %v1077 = vpop.f32.mrf.mxu0
  %v1078 = vadd.f32 %v82, %v1077
  %v1079 = vpop.f32.mrf.mxu0
  %v1080 = vadd.f32 %v82, %v1079
  %1081 = vmatmul.bf16.gmra.mxu0 %v1041
  %v1082 = vpop.f32.mrf.mxu0
  %v1083 = vadd.f32 %v82, %v1082
  %v1084 = vpop.f32.mrf.mxu0
  %1085 = vdwg.mxu0
  %1086 = vmatpush.bf16.msra.mxu0 %v210
  %1087 = vmatpush.bf16.msra.mxu0 %v209
  %1088 = vmatpush.bf16.msra.mxu0 %v208
  %1089 = vmatpush.bf16.msra.mxu0 %v207
  %1090 = vmatpush.bf16.msra.mxu0 %v206
  %1091 = vmatpush.bf16.msra.mxu0 %v205
  %1092 = vmatpush.bf16.msra.mxu0 %v204
  %1093 = vmatpush.bf16.msra.mxu0 %v203
  %1094 = vmatmul.bf16.gmra.mxu0 %v1034
  %v1095 = vpop.f32.mrf.mxu0
  %v1096 = vadd.f32 %v1063, %v1095
  %v1097 = vpop.f32.mrf.mxu0
  %v1098 = vadd.f32 %v1065, %v1097
  %1099 = vmatmul.bf16.gmra.mxu0 %v1036
  %v1100 = vpop.f32.mrf.mxu0
  %v1101 = vadd.f32 %v1068, %v1100
  %v1102 = vpop.f32.mrf.mxu0
  %v1103 = vadd.f32 %v1070, %v1102
  %1104 = vmatmul.bf16.gmra.mxu0 %v1038
  %v1105 = vpop.f32.mrf.mxu0
  %v1106 = vadd.f32 %v1073, %v1105
  %v1107 = vpop.f32.mrf.mxu0
  %v1108 = vadd.f32 %v1075, %v1107
  %1109 = vmatmul.bf16.gmra.mxu0 %v1040
  %v1110 = vpop.f32.mrf.mxu0
  %v1111 = vadd.f32 %v1078, %v1110
  %v1112 = vpop.f32.mrf.mxu0
  %v1113 = vadd.f32 %v1080, %v1112
  %1114 = vmatmul.bf16.gmra.mxu0 %v1042
  %v1115 = vpop.f32.mrf.mxu0
  %v1116 = vadd.f32 %v1083, %v1115
  %v1117 = vpop.f32.mrf.mxu0
  %1118 = vdwg.mxu0
  %v1119 = vmax.f32 %v1096, 0.0
  %v1120 = vmax.f32 %v1098, 0.0
  %v1121 = vmax.f32 %v1101, 0.0
  %v1122 = vmax.f32 %v1103, 0.0
  %v1123 = vmax.f32 %v1106, 0.0
  %v1124 = vmax.f32 %v1108, 0.0
  %v1125 = vmax.f32 %v1111, 0.0
  %v1126 = vmax.f32 %v1113, 0.0
  %v1127 = vmax.f32 %v1116, 0.0
  %v1128 = vpack.c.bf16 %v1120, %v1119
  %v1129 = vpack.c.bf16 %v1122, %v1121
  %v1130 = vpack.c.bf16 %v1124, %v1123
  %v1131 = vpack.c.bf16 %v1126, %v1125
  %v1132 = vpack.c.bf16 %v1127, %v1127
  %s1133 = scalar_lea.vmem %s3, 64
  %v1134 = vld [vmem:[%s1133] sm:$0xf]
  %v1135 = vld [vmem:[%s1133 + $0x4] sm:$0xf]
  %v1136 = vld [vmem:[%s1133 + $0x8] sm:$0xf]
  %v1137 = vld [vmem:[%s1133 + $0xc] sm:$0xf]
  %v1142 = vunpack.c.l.b16 %v1134
  %v1143 = vunpack.c.l.b16 %v1135
  %v1144 = vunpack.c.l.b16 %v1136
  %v1145 = vunpack.c.l.b16 %v1137
  %v1146 = vpack.c.b16 %v1143, %v1142
  %v1147 = vpack.c.b16 %v1145, %v1144
  %v1151 = vsel %vm465, %v1128, 0
  %v1154 = vsel %vm465, %v1129, 0
  %v1157 = vsel %vm465, %v1130, 0
  %v1160 = vsel %vm465, %v1131, 0
  %v1163 = vsel %vm465, %v1132, 0
  %1165 = vmatpush.bf16.msra.mxu0 0
  %1166 = vmatpush.bf16.msra.mxu0 0
  %1167 = vmatpush.bf16.msra.mxu0 0
  %1168 = vmatpush.bf16.msra.mxu0 0
  %1169 = vmatpush.bf16.msra.mxu0 0
  %1170 = vmatpush.bf16.msra.mxu0 0
  %1171 = vmatpush.bf16.msra.mxu0 %v1147
  %1172 = vmatpush.bf16.msra.mxu0 %v1146
  %1173 = vmatmul.bf16.gmra.mxu0 %v1151
  %v1174 = vpop.f32.mrf.mxu0
  %v1175 = vadd.f32 0.0, %v1174
  %v1176 = vpop.f32.mrf.mxu0
  %v1177 = vadd.f32 0.0, %v1176
  %1178 = vmatmul.bf16.gmra.mxu0 %v1154
  %v1179 = vpop.f32.mrf.mxu0
  %v1180 = vadd.f32 0.0, %v1179
  %v1181 = vpop.f32.mrf.mxu0
  %v1182 = vadd.f32 0.0, %v1181
  %1183 = vmatmul.bf16.gmra.mxu0 %v1157
  %v1184 = vpop.f32.mrf.mxu0
  %v1185 = vadd.f32 0.0, %v1184
  %v1186 = vpop.f32.mrf.mxu0
  %v1187 = vadd.f32 0.0, %v1186
  %1188 = vmatmul.bf16.gmra.mxu0 %v1160
  %v1189 = vpop.f32.mrf.mxu0
  %v1190 = vadd.f32 0.0, %v1189
  %v1191 = vpop.f32.mrf.mxu0
  %v1192 = vadd.f32 0.0, %v1191
  %1193 = vmatmul.bf16.gmra.mxu0 %v1163
  %v1194 = vpop.f32.mrf.mxu0
  %v1195 = vadd.f32 0.0, %v1194
  %v1196 = vpop.f32.mrf.mxu0
  %1197 = vdwg.mxu0
  %v1198 = vadd.f32 %v987, %v1175
  %v1199 = vadd.f32 %v988, %v1177
  %v1200 = vadd.f32 %v989, %v1180
  %v1201 = vadd.f32 %v990, %v1182
  %v1202 = vadd.f32 %v991, %v1185
  %v1203 = vadd.f32 %v992, %v1187
  %v1204 = vadd.f32 %v993, %v1190
  %v1205 = vadd.f32 %v994, %v1192
  %v1206 = vadd.f32 %v995, %v1195
  %s1207 = scalar_lea.vmem %s0, 360
  %v1208 = vld [vmem:[%s1207] sm:$0xff]
  %v1209 = vld [vmem:[%s1207 + $0x8] sm:$0xff]
  %v1210 = vld [vmem:[%s1207 + $0x10] sm:$0xff]
  %v1211 = vld [vmem:[%s1207 + $0x18] sm:$0xff]
  %v1212 = vld [vmem:[%s1207 + $0x20] sm:$0xff]
  %v1213 = vld [vmem:[%s1207 + $0x28] sm:$0xff]
  %v1214 = vld [vmem:[%s1207 + $0x30] sm:$0xff]
  %v1215 = vld [vmem:[%s1207 + $0x38] sm:$0xff]
  %v1216 = vld [vmem:[%s1207 + $0x40] sm:$0xff]
  %v1226 = vunpack.c.l.b16 %v1208
  %v1227 = vunpack.c.h.b16 %v1208
  %v1228 = vunpack.c.l.b16 %v1209
  %v1229 = vunpack.c.h.b16 %v1209
  %v1230 = vunpack.c.l.b16 %v1210
  %v1231 = vunpack.c.h.b16 %v1210
  %v1232 = vunpack.c.l.b16 %v1211
  %v1233 = vunpack.c.h.b16 %v1211
  %v1234 = vunpack.c.l.b16 %v1212
  %v1235 = vunpack.c.h.b16 %v1212
  %v1236 = vunpack.c.l.b16 %v1213
  %v1237 = vunpack.c.h.b16 %v1213
  %v1238 = vunpack.c.l.b16 %v1214
  %v1239 = vunpack.c.h.b16 %v1214
  %v1240 = vunpack.c.l.b16 %v1215
  %v1241 = vunpack.c.h.b16 %v1215
  %v1242 = vunpack.c.l.b16 %v1216
  %v1243 = vunpack.c.h.b16 %v1216
  %v1244 = vpack.c.b16 %v1228, %v1226
  %v1245 = vpack.c.b16 %v1229, %v1227
  %v1246 = vpack.c.b16 %v1232, %v1230
  %v1247 = vpack.c.b16 %v1233, %v1231
  %v1248 = vpack.c.b16 %v1236, %v1234
  %v1249 = vpack.c.b16 %v1237, %v1235
  %v1250 = vpack.c.b16 %v1240, %v1238
  %v1251 = vpack.c.b16 %v1241, %v1239
  %v1252 = vpack.c.b16 %v1242, %v1242
  %v1253 = vpack.c.b16 %v1243, %v1243
  %1264 = vmatpush.bf16.msra.mxu0 %v202
  %1265 = vmatpush.bf16.msra.mxu0 %v201
  %1266 = vmatpush.bf16.msra.mxu0 %v200
  %1267 = vmatpush.bf16.msra.mxu0 %v199
  %1268 = vmatpush.bf16.msra.mxu0 %v198
  %1269 = vmatpush.bf16.msra.mxu0 %v197
  %1270 = vmatpush.bf16.msra.mxu0 %v196
  %1271 = vmatpush.bf16.msra.mxu0 %v195
  %1272 = vmatmul.bf16.gmra.mxu0 %v1244
  %v1273 = vpop.f32.mrf.mxu0
  %v1274 = vadd.f32 %v82, %v1273
  %v1275 = vpop.f32.mrf.mxu0
  %v1276 = vadd.f32 %v82, %v1275
  %1277 = vmatmul.bf16.gmra.mxu0 %v1246
  %v1278 = vpop.f32.mrf.mxu0
  %v1279 = vadd.f32 %v82, %v1278
  %v1280 = vpop.f32.mrf.mxu0
  %v1281 = vadd.f32 %v82, %v1280
  %1282 = vmatmul.bf16.gmra.mxu0 %v1248
  %v1283 = vpop.f32.mrf.mxu0
  %v1284 = vadd.f32 %v82, %v1283
  %v1285 = vpop.f32.mrf.mxu0
  %v1286 = vadd.f32 %v82, %v1285
  %1287 = vmatmul.bf16.gmra.mxu0 %v1250
  %v1288 = vpop.f32.mrf.mxu0
  %v1289 = vadd.f32 %v82, %v1288
  %v1290 = vpop.f32.mrf.mxu0
  %v1291 = vadd.f32 %v82, %v1290
  %1292 = vmatmul.bf16.gmra.mxu0 %v1252
  %v1293 = vpop.f32.mrf.mxu0
  %v1294 = vadd.f32 %v82, %v1293
  %v1295 = vpop.f32.mrf.mxu0
  %1296 = vdwg.mxu0
  %1297 = vmatpush.bf16.msra.mxu0 %v210
  %1298 = vmatpush.bf16.msra.mxu0 %v209
  %1299 = vmatpush.bf16.msra.mxu0 %v208
  %1300 = vmatpush.bf16.msra.mxu0 %v207
  %1301 = vmatpush.bf16.msra.mxu0 %v206
  %1302 = vmatpush.bf16.msra.mxu0 %v205
  %1303 = vmatpush.bf16.msra.mxu0 %v204
  %1304 = vmatpush.bf16.msra.mxu0 %v203
  %1305 = vmatmul.bf16.gmra.mxu0 %v1245
  %v1306 = vpop.f32.mrf.mxu0
  %v1307 = vadd.f32 %v1274, %v1306
  %v1308 = vpop.f32.mrf.mxu0
  %v1309 = vadd.f32 %v1276, %v1308
  %1310 = vmatmul.bf16.gmra.mxu0 %v1247
  %v1311 = vpop.f32.mrf.mxu0
  %v1312 = vadd.f32 %v1279, %v1311
  %v1313 = vpop.f32.mrf.mxu0
  %v1314 = vadd.f32 %v1281, %v1313
  %1315 = vmatmul.bf16.gmra.mxu0 %v1249
  %v1316 = vpop.f32.mrf.mxu0
  %v1317 = vadd.f32 %v1284, %v1316
  %v1318 = vpop.f32.mrf.mxu0
  %v1319 = vadd.f32 %v1286, %v1318
  %1320 = vmatmul.bf16.gmra.mxu0 %v1251
  %v1321 = vpop.f32.mrf.mxu0
  %v1322 = vadd.f32 %v1289, %v1321
  %v1323 = vpop.f32.mrf.mxu0
  %v1324 = vadd.f32 %v1291, %v1323
  %1325 = vmatmul.bf16.gmra.mxu0 %v1253
  %v1326 = vpop.f32.mrf.mxu0
  %v1327 = vadd.f32 %v1294, %v1326
  %v1328 = vpop.f32.mrf.mxu0
  %1329 = vdwg.mxu0
  %v1330 = vmax.f32 %v1307, 0.0
  %v1331 = vmax.f32 %v1309, 0.0
  %v1332 = vmax.f32 %v1312, 0.0
  %v1333 = vmax.f32 %v1314, 0.0
  %v1334 = vmax.f32 %v1317, 0.0
  %v1335 = vmax.f32 %v1319, 0.0
  %v1336 = vmax.f32 %v1322, 0.0
  %v1337 = vmax.f32 %v1324, 0.0
  %v1338 = vmax.f32 %v1327, 0.0
  %v1339 = vpack.c.bf16 %v1331, %v1330
  %v1340 = vpack.c.bf16 %v1333, %v1332
  %v1341 = vpack.c.bf16 %v1335, %v1334
  %v1342 = vpack.c.bf16 %v1337, %v1336
  %v1343 = vpack.c.bf16 %v1338, %v1338
  %s1344 = scalar_lea.vmem %s3, 80
  %v1345 = vld [vmem:[%s1344] sm:$0xf]
  %v1346 = vld [vmem:[%s1344 + $0x4] sm:$0xf]
  %v1347 = vld [vmem:[%s1344 + $0x8] sm:$0xf]
  %v1348 = vld [vmem:[%s1344 + $0xc] sm:$0xf]
  %v1353 = vunpack.c.l.b16 %v1345
  %v1354 = vunpack.c.l.b16 %v1346
  %v1355 = vunpack.c.l.b16 %v1347
  %v1356 = vunpack.c.l.b16 %v1348
  %v1357 = vpack.c.b16 %v1354, %v1353
  %v1358 = vpack.c.b16 %v1356, %v1355
  %v1362 = vsel %vm465, %v1339, 0
  %v1365 = vsel %vm465, %v1340, 0
  %v1368 = vsel %vm465, %v1341, 0
  %v1371 = vsel %vm465, %v1342, 0
  %v1374 = vsel %vm465, %v1343, 0
  %1376 = vmatpush.bf16.msra.mxu0 0
  %1377 = vmatpush.bf16.msra.mxu0 0
  %1378 = vmatpush.bf16.msra.mxu0 0
  %1379 = vmatpush.bf16.msra.mxu0 0
  %1380 = vmatpush.bf16.msra.mxu0 0
  %1381 = vmatpush.bf16.msra.mxu0 0
  %1382 = vmatpush.bf16.msra.mxu0 %v1358
  %1383 = vmatpush.bf16.msra.mxu0 %v1357
  %1384 = vmatmul.bf16.gmra.mxu0 %v1362
  %v1385 = vpop.f32.mrf.mxu0
  %v1386 = vadd.f32 0.0, %v1385
  %v1387 = vpop.f32.mrf.mxu0
  %v1388 = vadd.f32 0.0, %v1387
  %1389 = vmatmul.bf16.gmra.mxu0 %v1365
  %v1390 = vpop.f32.mrf.mxu0
  %v1391 = vadd.f32 0.0, %v1390
  %v1392 = vpop.f32.mrf.mxu0
  %v1393 = vadd.f32 0.0, %v1392
  %1394 = vmatmul.bf16.gmra.mxu0 %v1368
  %v1395 = vpop.f32.mrf.mxu0
  %v1396 = vadd.f32 0.0, %v1395
  %v1397 = vpop.f32.mrf.mxu0
  %v1398 = vadd.f32 0.0, %v1397
  %1399 = vmatmul.bf16.gmra.mxu0 %v1371
  %v1400 = vpop.f32.mrf.mxu0
  %v1401 = vadd.f32 0.0, %v1400
  %v1402 = vpop.f32.mrf.mxu0
  %v1403 = vadd.f32 0.0, %v1402
  %1404 = vmatmul.bf16.gmra.mxu0 %v1374
  %v1405 = vpop.f32.mrf.mxu0
  %v1406 = vadd.f32 0.0, %v1405
  %v1407 = vpop.f32.mrf.mxu0
  %1408 = vdwg.mxu0
  %v1409 = vadd.f32 %v1198, %v1386
  %v1410 = vadd.f32 %v1199, %v1388
  %v1411 = vadd.f32 %v1200, %v1391
  %v1412 = vadd.f32 %v1201, %v1393
  %v1413 = vadd.f32 %v1202, %v1396
  %v1414 = vadd.f32 %v1203, %v1398
  %v1415 = vadd.f32 %v1204, %v1401
  %v1416 = vadd.f32 %v1205, %v1403
  %v1417 = vadd.f32 %v1206, %v1406
  %s1418 = scalar_lea.vmem %s0, 432
  %v1419 = vld [vmem:[%s1418] sm:$0xff]
  %v1420 = vld [vmem:[%s1418 + $0x8] sm:$0xff]
  %v1421 = vld [vmem:[%s1418 + $0x10] sm:$0xff]
  %v1422 = vld [vmem:[%s1418 + $0x18] sm:$0xff]
  %v1423 = vld [vmem:[%s1418 + $0x20] sm:$0xff]
  %v1424 = vld [vmem:[%s1418 + $0x28] sm:$0xff]
  %v1425 = vld [vmem:[%s1418 + $0x30] sm:$0xff]
  %v1426 = vld [vmem:[%s1418 + $0x38] sm:$0xff]
  %v1427 = vld [vmem:[%s1418 + $0x40] sm:$0xff]
  %v1437 = vunpack.c.l.b16 %v1419
  %v1438 = vunpack.c.h.b16 %v1419
  %v1439 = vunpack.c.l.b16 %v1420
  %v1440 = vunpack.c.h.b16 %v1420
  %v1441 = vunpack.c.l.b16 %v1421
  %v1442 = vunpack.c.h.b16 %v1421
  %v1443 = vunpack.c.l.b16 %v1422
  %v1444 = vunpack.c.h.b16 %v1422
  %v1445 = vunpack.c.l.b16 %v1423
  %v1446 = vunpack.c.h.b16 %v1423
  %v1447 = vunpack.c.l.b16 %v1424
  %v1448 = vunpack.c.h.b16 %v1424
  %v1449 = vunpack.c.l.b16 %v1425
  %v1450 = vunpack.c.h.b16 %v1425
  %v1451 = vunpack.c.l.b16 %v1426
  %v1452 = vunpack.c.h.b16 %v1426
  %v1453 = vunpack.c.l.b16 %v1427
  %v1454 = vunpack.c.h.b16 %v1427
  %v1455 = vpack.c.b16 %v1439, %v1437
  %v1456 = vpack.c.b16 %v1440, %v1438
  %v1457 = vpack.c.b16 %v1443, %v1441
  %v1458 = vpack.c.b16 %v1444, %v1442
  %v1459 = vpack.c.b16 %v1447, %v1445
  %v1460 = vpack.c.b16 %v1448, %v1446
  %v1461 = vpack.c.b16 %v1451, %v1449
  %v1462 = vpack.c.b16 %v1452, %v1450
  %v1463 = vpack.c.b16 %v1453, %v1453
  %v1464 = vpack.c.b16 %v1454, %v1454
  %1475 = vmatpush.bf16.msra.mxu0 %v202
  %1476 = vmatpush.bf16.msra.mxu0 %v201
  %1477 = vmatpush.bf16.msra.mxu0 %v200
  %1478 = vmatpush.bf16.msra.mxu0 %v199
  %1479 = vmatpush.bf16.msra.mxu0 %v198
  %1480 = vmatpush.bf16.msra.mxu0 %v197
  %1481 = vmatpush.bf16.msra.mxu0 %v196
  %1482 = vmatpush.bf16.msra.mxu0 %v195
  %1483 = vmatmul.bf16.gmra.mxu0 %v1455
  %v1484 = vpop.f32.mrf.mxu0
  %v1485 = vadd.f32 %v82, %v1484
  %v1486 = vpop.f32.mrf.mxu0
  %v1487 = vadd.f32 %v82, %v1486
  %1488 = vmatmul.bf16.gmra.mxu0 %v1457
  %v1489 = vpop.f32.mrf.mxu0
  %v1490 = vadd.f32 %v82, %v1489
  %v1491 = vpop.f32.mrf.mxu0
  %v1492 = vadd.f32 %v82, %v1491
  %1493 = vmatmul.bf16.gmra.mxu0 %v1459
  %v1494 = vpop.f32.mrf.mxu0
  %v1495 = vadd.f32 %v82, %v1494
  %v1496 = vpop.f32.mrf.mxu0
  %v1497 = vadd.f32 %v82, %v1496
  %1498 = vmatmul.bf16.gmra.mxu0 %v1461
  %v1499 = vpop.f32.mrf.mxu0
  %v1500 = vadd.f32 %v82, %v1499
  %v1501 = vpop.f32.mrf.mxu0
  %v1502 = vadd.f32 %v82, %v1501
  %1503 = vmatmul.bf16.gmra.mxu0 %v1463
  %v1504 = vpop.f32.mrf.mxu0
  %v1505 = vadd.f32 %v82, %v1504
  %v1506 = vpop.f32.mrf.mxu0
  %1507 = vdwg.mxu0
  %1508 = vmatpush.bf16.msra.mxu0 %v210
  %1509 = vmatpush.bf16.msra.mxu0 %v209
  %1510 = vmatpush.bf16.msra.mxu0 %v208
  %1511 = vmatpush.bf16.msra.mxu0 %v207
  %1512 = vmatpush.bf16.msra.mxu0 %v206
  %1513 = vmatpush.bf16.msra.mxu0 %v205
  %1514 = vmatpush.bf16.msra.mxu0 %v204
  %1515 = vmatpush.bf16.msra.mxu0 %v203
  %1516 = vmatmul.bf16.gmra.mxu0 %v1456
  %v1517 = vpop.f32.mrf.mxu0
  %v1518 = vadd.f32 %v1485, %v1517
  %v1519 = vpop.f32.mrf.mxu0
  %v1520 = vadd.f32 %v1487, %v1519
  %1521 = vmatmul.bf16.gmra.mxu0 %v1458
  %v1522 = vpop.f32.mrf.mxu0
  %v1523 = vadd.f32 %v1490, %v1522
  %v1524 = vpop.f32.mrf.mxu0
  %v1525 = vadd.f32 %v1492, %v1524
  %1526 = vmatmul.bf16.gmra.mxu0 %v1460
  %v1527 = vpop.f32.mrf.mxu0
  %v1528 = vadd.f32 %v1495, %v1527
  %v1529 = vpop.f32.mrf.mxu0
  %v1530 = vadd.f32 %v1497, %v1529
  %1531 = vmatmul.bf16.gmra.mxu0 %v1462
  %v1532 = vpop.f32.mrf.mxu0
  %v1533 = vadd.f32 %v1500, %v1532
  %v1534 = vpop.f32.mrf.mxu0
  %v1535 = vadd.f32 %v1502, %v1534
  %1536 = vmatmul.bf16.gmra.mxu0 %v1464
  %v1537 = vpop.f32.mrf.mxu0
  %v1538 = vadd.f32 %v1505, %v1537
  %v1539 = vpop.f32.mrf.mxu0
  %1540 = vdwg.mxu0
  %v1541 = vmax.f32 %v1518, 0.0
  %v1542 = vmax.f32 %v1520, 0.0
  %v1543 = vmax.f32 %v1523, 0.0
  %v1544 = vmax.f32 %v1525, 0.0
  %v1545 = vmax.f32 %v1528, 0.0
  %v1546 = vmax.f32 %v1530, 0.0
  %v1547 = vmax.f32 %v1533, 0.0
  %v1548 = vmax.f32 %v1535, 0.0
  %v1549 = vmax.f32 %v1538, 0.0
  %v1550 = vpack.c.bf16 %v1542, %v1541
  %v1551 = vpack.c.bf16 %v1544, %v1543
  %v1552 = vpack.c.bf16 %v1546, %v1545
  %v1553 = vpack.c.bf16 %v1548, %v1547
  %v1554 = vpack.c.bf16 %v1549, %v1549
  %s1555 = scalar_lea.vmem %s3, 96
  %v1556 = vld [vmem:[%s1555] sm:$0xf]
  %v1557 = vld [vmem:[%s1555 + $0x4] sm:$0xf]
  %v1558 = vld [vmem:[%s1555 + $0x8] sm:$0xf]
  %v1559 = vld [vmem:[%s1555 + $0xc] sm:$0xf]
  %v1564 = vunpack.c.l.b16 %v1556
  %v1565 = vunpack.c.l.b16 %v1557
  %v1566 = vunpack.c.l.b16 %v1558
  %v1567 = vunpack.c.l.b16 %v1559
  %v1568 = vpack.c.b16 %v1565, %v1564
  %v1569 = vpack.c.b16 %v1567, %v1566
  %v1573 = vsel %vm465, %v1550, 0
  %v1576 = vsel %vm465, %v1551, 0
  %v1579 = vsel %vm465, %v1552, 0
  %v1582 = vsel %vm465, %v1553, 0
  %v1585 = vsel %vm465, %v1554, 0
  %1587 = vmatpush.bf16.msra.mxu0 0
  %1588 = vmatpush.bf16.msra.mxu0 0
  %1589 = vmatpush.bf16.msra.mxu0 0
  %1590 = vmatpush.bf16.msra.mxu0 0
  %1591 = vmatpush.bf16.msra.mxu0 0
  %1592 = vmatpush.bf16.msra.mxu0 0
  %1593 = vmatpush.bf16.msra.mxu0 %v1569
  %1594 = vmatpush.bf16.msra.mxu0 %v1568
  %1595 = vmatmul.bf16.gmra.mxu0 %v1573
  %v1596 = vpop.f32.mrf.mxu0
  %v1597 = vadd.f32 0.0, %v1596
  %v1598 = vpop.f32.mrf.mxu0
  %v1599 = vadd.f32 0.0, %v1598
  %1600 = vmatmul.bf16.gmra.mxu0 %v1576
  %v1601 = vpop.f32.mrf.mxu0
  %v1602 = vadd.f32 0.0, %v1601
  %v1603 = vpop.f32.mrf.mxu0
  %v1604 = vadd.f32 0.0, %v1603
  %1605 = vmatmul.bf16.gmra.mxu0 %v1579
  %v1606 = vpop.f32.mrf.mxu0
  %v1607 = vadd.f32 0.0, %v1606
  %v1608 = vpop.f32.mrf.mxu0
  %v1609 = vadd.f32 0.0, %v1608
  %1610 = vmatmul.bf16.gmra.mxu0 %v1582
  %v1611 = vpop.f32.mrf.mxu0
  %v1612 = vadd.f32 0.0, %v1611
  %v1613 = vpop.f32.mrf.mxu0
  %v1614 = vadd.f32 0.0, %v1613
  %1615 = vmatmul.bf16.gmra.mxu0 %v1585
  %v1616 = vpop.f32.mrf.mxu0
  %v1617 = vadd.f32 0.0, %v1616
  %v1618 = vpop.f32.mrf.mxu0
  %1619 = vdwg.mxu0
  %v1620 = vadd.f32 %v1409, %v1597
  %v1621 = vadd.f32 %v1410, %v1599
  %v1622 = vadd.f32 %v1411, %v1602
  %v1623 = vadd.f32 %v1412, %v1604
  %v1624 = vadd.f32 %v1413, %v1607
  %v1625 = vadd.f32 %v1414, %v1609
  %v1626 = vadd.f32 %v1415, %v1612
  %v1627 = vadd.f32 %v1416, %v1614
  %v1628 = vadd.f32 %v1417, %v1617
  %s1629 = scalar_lea.vmem %s0, 504
  %v1630 = vld [vmem:[%s1629] sm:$0xff]
  %v1631 = vld [vmem:[%s1629 + $0x8] sm:$0xff]
  %v1632 = vld [vmem:[%s1629 + $0x10] sm:$0xff]
  %v1633 = vld [vmem:[%s1629 + $0x18] sm:$0xff]
  %v1634 = vld [vmem:[%s1629 + $0x20] sm:$0xff]
  %v1635 = vld [vmem:[%s1629 + $0x28] sm:$0xff]
  %v1636 = vld [vmem:[%s1629 + $0x30] sm:$0xff]
  %v1637 = vld [vmem:[%s1629 + $0x38] sm:$0xff]
  %v1638 = vld [vmem:[%s1629 + $0x40] sm:$0xff]
  %v1648 = vunpack.c.l.b16 %v1630
  %v1649 = vunpack.c.h.b16 %v1630
  %v1650 = vunpack.c.l.b16 %v1631
  %v1651 = vunpack.c.h.b16 %v1631
  %v1652 = vunpack.c.l.b16 %v1632
  %v1653 = vunpack.c.h.b16 %v1632
  %v1654 = vunpack.c.l.b16 %v1633
  %v1655 = vunpack.c.h.b16 %v1633
  %v1656 = vunpack.c.l.b16 %v1634
  %v1657 = vunpack.c.h.b16 %v1634
  %v1658 = vunpack.c.l.b16 %v1635
  %v1659 = vunpack.c.h.b16 %v1635
  %v1660 = vunpack.c.l.b16 %v1636
  %v1661 = vunpack.c.h.b16 %v1636
  %v1662 = vunpack.c.l.b16 %v1637
  %v1663 = vunpack.c.h.b16 %v1637
  %v1664 = vunpack.c.l.b16 %v1638
  %v1665 = vunpack.c.h.b16 %v1638
  %v1666 = vpack.c.b16 %v1650, %v1648
  %v1667 = vpack.c.b16 %v1651, %v1649
  %v1668 = vpack.c.b16 %v1654, %v1652
  %v1669 = vpack.c.b16 %v1655, %v1653
  %v1670 = vpack.c.b16 %v1658, %v1656
  %v1671 = vpack.c.b16 %v1659, %v1657
  %v1672 = vpack.c.b16 %v1662, %v1660
  %v1673 = vpack.c.b16 %v1663, %v1661
  %v1674 = vpack.c.b16 %v1664, %v1664
  %v1675 = vpack.c.b16 %v1665, %v1665
  %1686 = vmatpush.bf16.msra.mxu0 %v202
  %1687 = vmatpush.bf16.msra.mxu0 %v201
  %1688 = vmatpush.bf16.msra.mxu0 %v200
  %1689 = vmatpush.bf16.msra.mxu0 %v199
  %1690 = vmatpush.bf16.msra.mxu0 %v198
  %1691 = vmatpush.bf16.msra.mxu0 %v197
  %1692 = vmatpush.bf16.msra.mxu0 %v196
  %1693 = vmatpush.bf16.msra.mxu0 %v195
  %1694 = vmatmul.bf16.gmra.mxu0 %v1666
  %v1695 = vpop.f32.mrf.mxu0
  %v1696 = vadd.f32 %v82, %v1695
  %v1697 = vpop.f32.mrf.mxu0
  %v1698 = vadd.f32 %v82, %v1697
  %1699 = vmatmul.bf16.gmra.mxu0 %v1668
  %v1700 = vpop.f32.mrf.mxu0
  %v1701 = vadd.f32 %v82, %v1700
  %v1702 = vpop.f32.mrf.mxu0
  %v1703 = vadd.f32 %v82, %v1702
  %1704 = vmatmul.bf16.gmra.mxu0 %v1670
  %v1705 = vpop.f32.mrf.mxu0
  %v1706 = vadd.f32 %v82, %v1705
  %v1707 = vpop.f32.mrf.mxu0
  %v1708 = vadd.f32 %v82, %v1707
  %1709 = vmatmul.bf16.gmra.mxu0 %v1672
  %v1710 = vpop.f32.mrf.mxu0
  %v1711 = vadd.f32 %v82, %v1710
  %v1712 = vpop.f32.mrf.mxu0
  %v1713 = vadd.f32 %v82, %v1712
  %1714 = vmatmul.bf16.gmra.mxu0 %v1674
  %v1715 = vpop.f32.mrf.mxu0
  %v1716 = vadd.f32 %v82, %v1715
  %v1717 = vpop.f32.mrf.mxu0
  %1718 = vdwg.mxu0
  %1719 = vmatpush.bf16.msra.mxu0 %v210
  %1720 = vmatpush.bf16.msra.mxu0 %v209
  %1721 = vmatpush.bf16.msra.mxu0 %v208
  %1722 = vmatpush.bf16.msra.mxu0 %v207
  %1723 = vmatpush.bf16.msra.mxu0 %v206
  %1724 = vmatpush.bf16.msra.mxu0 %v205
  %1725 = vmatpush.bf16.msra.mxu0 %v204
  %1726 = vmatpush.bf16.msra.mxu0 %v203
  %1727 = vmatmul.bf16.gmra.mxu0 %v1667
  %v1728 = vpop.f32.mrf.mxu0
  %v1729 = vadd.f32 %v1696, %v1728
  %v1730 = vpop.f32.mrf.mxu0
  %v1731 = vadd.f32 %v1698, %v1730
  %1732 = vmatmul.bf16.gmra.mxu0 %v1669
  %v1733 = vpop.f32.mrf.mxu0
  %v1734 = vadd.f32 %v1701, %v1733
  %v1735 = vpop.f32.mrf.mxu0
  %v1736 = vadd.f32 %v1703, %v1735
  %1737 = vmatmul.bf16.gmra.mxu0 %v1671
  %v1738 = vpop.f32.mrf.mxu0
  %v1739 = vadd.f32 %v1706, %v1738
  %v1740 = vpop.f32.mrf.mxu0
  %v1741 = vadd.f32 %v1708, %v1740
  %1742 = vmatmul.bf16.gmra.mxu0 %v1673
  %v1743 = vpop.f32.mrf.mxu0
  %v1744 = vadd.f32 %v1711, %v1743
  %v1745 = vpop.f32.mrf.mxu0
  %v1746 = vadd.f32 %v1713, %v1745
  %1747 = vmatmul.bf16.gmra.mxu0 %v1675
  %v1748 = vpop.f32.mrf.mxu0
  %v1749 = vadd.f32 %v1716, %v1748
  %v1750 = vpop.f32.mrf.mxu0
  %1751 = vdwg.mxu0
  %v1752 = vmax.f32 %v1729, 0.0
  %v1753 = vmax.f32 %v1731, 0.0
  %v1754 = vmax.f32 %v1734, 0.0
  %v1755 = vmax.f32 %v1736, 0.0
  %v1756 = vmax.f32 %v1739, 0.0
  %v1757 = vmax.f32 %v1741, 0.0
  %v1758 = vmax.f32 %v1744, 0.0
  %v1759 = vmax.f32 %v1746, 0.0
  %v1760 = vmax.f32 %v1749, 0.0
  %v1761 = vpack.c.bf16 %v1753, %v1752
  %v1762 = vpack.c.bf16 %v1755, %v1754
  %v1763 = vpack.c.bf16 %v1757, %v1756
  %v1764 = vpack.c.bf16 %v1759, %v1758
  %v1765 = vpack.c.bf16 %v1760, %v1760
  %s1766 = scalar_lea.vmem %s3, 112
  %v1767 = vld [vmem:[%s1766] sm:$0xf]
  %v1768 = vld [vmem:[%s1766 + $0x4] sm:$0xf]
  %v1769 = vld [vmem:[%s1766 + $0x8] sm:$0xf]
  %v1770 = vld [vmem:[%s1766 + $0xc] sm:$0xf]
  %v1775 = vunpack.c.l.b16 %v1767
  %v1776 = vunpack.c.l.b16 %v1768
  %v1777 = vunpack.c.l.b16 %v1769
  %v1778 = vunpack.c.l.b16 %v1770
  %v1779 = vpack.c.b16 %v1776, %v1775
  %v1780 = vpack.c.b16 %v1778, %v1777
  %v1784 = vsel %vm465, %v1761, 0
  %v1787 = vsel %vm465, %v1762, 0
  %v1790 = vsel %vm465, %v1763, 0
  %v1793 = vsel %vm465, %v1764, 0
  %v1796 = vsel %vm465, %v1765, 0
  %1798 = vmatpush.bf16.msra.mxu0 0
  %1799 = vmatpush.bf16.msra.mxu0 0
  %1800 = vmatpush.bf16.msra.mxu0 0
  %1801 = vmatpush.bf16.msra.mxu0 0
  %1802 = vmatpush.bf16.msra.mxu0 0
  %1803 = vmatpush.bf16.msra.mxu0 0
  %1804 = vmatpush.bf16.msra.mxu0 %v1780
  %1805 = vmatpush.bf16.msra.mxu0 %v1779
  %1806 = vmatmul.bf16.gmra.mxu0 %v1784
  %v1807 = vpop.f32.mrf.mxu0
  %v1808 = vadd.f32 0.0, %v1807
  %v1809 = vpop.f32.mrf.mxu0
  %v1810 = vadd.f32 0.0, %v1809
  %1811 = vmatmul.bf16.gmra.mxu0 %v1787
  %v1812 = vpop.f32.mrf.mxu0
  %v1813 = vadd.f32 0.0, %v1812
  %v1814 = vpop.f32.mrf.mxu0
  %v1815 = vadd.f32 0.0, %v1814
  %1816 = vmatmul.bf16.gmra.mxu0 %v1790
  %v1817 = vpop.f32.mrf.mxu0
  %v1818 = vadd.f32 0.0, %v1817
  %v1819 = vpop.f32.mrf.mxu0
  %v1820 = vadd.f32 0.0, %v1819
  %1821 = vmatmul.bf16.gmra.mxu0 %v1793
  %v1822 = vpop.f32.mrf.mxu0
  %v1823 = vadd.f32 0.0, %v1822
  %v1824 = vpop.f32.mrf.mxu0
  %v1825 = vadd.f32 0.0, %v1824
  %1826 = vmatmul.bf16.gmra.mxu0 %v1796
  %v1827 = vpop.f32.mrf.mxu0
  %v1828 = vadd.f32 0.0, %v1827
  %v1829 = vpop.f32.mrf.mxu0
  %1830 = vdwg.mxu0
  %v1831 = vadd.f32 %v1620, %v1808
  %v1832 = vadd.f32 %v1621, %v1810
  %v1833 = vadd.f32 %v1622, %v1813
  %v1834 = vadd.f32 %v1623, %v1815
  %v1835 = vadd.f32 %v1624, %v1818
  %v1836 = vadd.f32 %v1625, %v1820
  %v1837 = vadd.f32 %v1626, %v1823
  %v1838 = vadd.f32 %v1627, %v1825
  %v1839 = vadd.f32 %v1628, %v1828
  %s1840 = scalar_lea.vmem %s0, 576
  %v1841 = vld [vmem:[%s1840] sm:$0xff]
  %v1842 = vld [vmem:[%s1840 + $0x8] sm:$0xff]
  %v1843 = vld [vmem:[%s1840 + $0x10] sm:$0xff]
  %v1844 = vld [vmem:[%s1840 + $0x18] sm:$0xff]
  %v1845 = vld [vmem:[%s1840 + $0x20] sm:$0xff]
  %v1846 = vld [vmem:[%s1840 + $0x28] sm:$0xff]
  %v1847 = vld [vmem:[%s1840 + $0x30] sm:$0xff]
  %v1848 = vld [vmem:[%s1840 + $0x38] sm:$0xff]
  %v1849 = vld [vmem:[%s1840 + $0x40] sm:$0xff]
  %v1859 = vunpack.c.l.b16 %v1841
  %v1860 = vunpack.c.h.b16 %v1841
  %v1861 = vunpack.c.l.b16 %v1842
  %v1862 = vunpack.c.h.b16 %v1842
  %v1863 = vunpack.c.l.b16 %v1843
  %v1864 = vunpack.c.h.b16 %v1843
  %v1865 = vunpack.c.l.b16 %v1844
  %v1866 = vunpack.c.h.b16 %v1844
  %v1867 = vunpack.c.l.b16 %v1845
  %v1868 = vunpack.c.h.b16 %v1845
  %v1869 = vunpack.c.l.b16 %v1846
  %v1870 = vunpack.c.h.b16 %v1846
  %v1871 = vunpack.c.l.b16 %v1847
  %v1872 = vunpack.c.h.b16 %v1847
  %v1873 = vunpack.c.l.b16 %v1848
  %v1874 = vunpack.c.h.b16 %v1848
  %v1875 = vunpack.c.l.b16 %v1849
  %v1876 = vunpack.c.h.b16 %v1849
  %v1877 = vpack.c.b16 %v1861, %v1859
  %v1878 = vpack.c.b16 %v1862, %v1860
  %v1879 = vpack.c.b16 %v1865, %v1863
  %v1880 = vpack.c.b16 %v1866, %v1864
  %v1881 = vpack.c.b16 %v1869, %v1867
  %v1882 = vpack.c.b16 %v1870, %v1868
  %v1883 = vpack.c.b16 %v1873, %v1871
  %v1884 = vpack.c.b16 %v1874, %v1872
  %v1885 = vpack.c.b16 %v1875, %v1875
  %v1886 = vpack.c.b16 %v1876, %v1876
  %1897 = vmatpush.bf16.msra.mxu0 %v202
  %1898 = vmatpush.bf16.msra.mxu0 %v201
  %1899 = vmatpush.bf16.msra.mxu0 %v200
  %1900 = vmatpush.bf16.msra.mxu0 %v199
  %1901 = vmatpush.bf16.msra.mxu0 %v198
  %1902 = vmatpush.bf16.msra.mxu0 %v197
  %1903 = vmatpush.bf16.msra.mxu0 %v196
  %1904 = vmatpush.bf16.msra.mxu0 %v195
  %1905 = vmatmul.bf16.gmra.mxu0 %v1877
  %v1906 = vpop.f32.mrf.mxu0
  %v1907 = vadd.f32 %v82, %v1906
  %v1908 = vpop.f32.mrf.mxu0
  %v1909 = vadd.f32 %v82, %v1908
  %1910 = vmatmul.bf16.gmra.mxu0 %v1879
  %v1911 = vpop.f32.mrf.mxu0
  %v1912 = vadd.f32 %v82, %v1911
  %v1913 = vpop.f32.mrf.mxu0
  %v1914 = vadd.f32 %v82, %v1913
  %1915 = vmatmul.bf16.gmra.mxu0 %v1881
  %v1916 = vpop.f32.mrf.mxu0
  %v1917 = vadd.f32 %v82, %v1916
  %v1918 = vpop.f32.mrf.mxu0
  %v1919 = vadd.f32 %v82, %v1918
  %1920 = vmatmul.bf16.gmra.mxu0 %v1883
  %v1921 = vpop.f32.mrf.mxu0
  %v1922 = vadd.f32 %v82, %v1921
  %v1923 = vpop.f32.mrf.mxu0
  %v1924 = vadd.f32 %v82, %v1923
  %1925 = vmatmul.bf16.gmra.mxu0 %v1885
  %v1926 = vpop.f32.mrf.mxu0
  %v1927 = vadd.f32 %v82, %v1926
  %v1928 = vpop.f32.mrf.mxu0
  %1929 = vdwg.mxu0
  %1930 = vmatpush.bf16.msra.mxu0 %v210
  %1931 = vmatpush.bf16.msra.mxu0 %v209
  %1932 = vmatpush.bf16.msra.mxu0 %v208
  %1933 = vmatpush.bf16.msra.mxu0 %v207
  %1934 = vmatpush.bf16.msra.mxu0 %v206
  %1935 = vmatpush.bf16.msra.mxu0 %v205
  %1936 = vmatpush.bf16.msra.mxu0 %v204
  %1937 = vmatpush.bf16.msra.mxu0 %v203
  %1938 = vmatmul.bf16.gmra.mxu0 %v1878
  %v1939 = vpop.f32.mrf.mxu0
  %v1940 = vadd.f32 %v1907, %v1939
  %v1941 = vpop.f32.mrf.mxu0
  %v1942 = vadd.f32 %v1909, %v1941
  %1943 = vmatmul.bf16.gmra.mxu0 %v1880
  %v1944 = vpop.f32.mrf.mxu0
  %v1945 = vadd.f32 %v1912, %v1944
  %v1946 = vpop.f32.mrf.mxu0
  %v1947 = vadd.f32 %v1914, %v1946
  %1948 = vmatmul.bf16.gmra.mxu0 %v1882
  %v1949 = vpop.f32.mrf.mxu0
  %v1950 = vadd.f32 %v1917, %v1949
  %v1951 = vpop.f32.mrf.mxu0
  %v1952 = vadd.f32 %v1919, %v1951
  %1953 = vmatmul.bf16.gmra.mxu0 %v1884
  %v1954 = vpop.f32.mrf.mxu0
  %v1955 = vadd.f32 %v1922, %v1954
  %v1956 = vpop.f32.mrf.mxu0
  %v1957 = vadd.f32 %v1924, %v1956
  %1958 = vmatmul.bf16.gmra.mxu0 %v1886
  %v1959 = vpop.f32.mrf.mxu0
  %v1960 = vadd.f32 %v1927, %v1959
  %v1961 = vpop.f32.mrf.mxu0
  %1962 = vdwg.mxu0
  %v1963 = vmax.f32 %v1940, 0.0
  %v1964 = vmax.f32 %v1942, 0.0
  %v1965 = vmax.f32 %v1945, 0.0
  %v1966 = vmax.f32 %v1947, 0.0
  %v1967 = vmax.f32 %v1950, 0.0
  %v1968 = vmax.f32 %v1952, 0.0
  %v1969 = vmax.f32 %v1955, 0.0
  %v1970 = vmax.f32 %v1957, 0.0
  %v1971 = vmax.f32 %v1960, 0.0
  %v1972 = vpack.c.bf16 %v1964, %v1963
  %v1973 = vpack.c.bf16 %v1966, %v1965
  %v1974 = vpack.c.bf16 %v1968, %v1967
  %v1975 = vpack.c.bf16 %v1970, %v1969
  %v1976 = vpack.c.bf16 %v1971, %v1971
  %s1977 = scalar_lea.vmem %s3, 128
  %v1978 = vld [vmem:[%s1977] sm:$0xf]
  %v1979 = vld [vmem:[%s1977 + $0x4] sm:$0xf]
  %v1980 = vld [vmem:[%s1977 + $0x8] sm:$0xf]
  %v1981 = vld [vmem:[%s1977 + $0xc] sm:$0xf]
  %v1986 = vunpack.c.l.b16 %v1978
  %v1987 = vunpack.c.l.b16 %v1979
  %v1988 = vunpack.c.l.b16 %v1980
  %v1989 = vunpack.c.l.b16 %v1981
  %v1990 = vpack.c.b16 %v1987, %v1986
  %v1991 = vpack.c.b16 %v1989, %v1988
  %v1995 = vsel %vm465, %v1972, 0
  %v1998 = vsel %vm465, %v1973, 0
  %v2001 = vsel %vm465, %v1974, 0
  %v2004 = vsel %vm465, %v1975, 0
  %v2007 = vsel %vm465, %v1976, 0
  %2009 = vmatpush.bf16.msra.mxu0 0
  %2010 = vmatpush.bf16.msra.mxu0 0
  %2011 = vmatpush.bf16.msra.mxu0 0
  %2012 = vmatpush.bf16.msra.mxu0 0
  %2013 = vmatpush.bf16.msra.mxu0 0
  %2014 = vmatpush.bf16.msra.mxu0 0
  %2015 = vmatpush.bf16.msra.mxu0 %v1991
  %2016 = vmatpush.bf16.msra.mxu0 %v1990
  %2017 = vmatmul.bf16.gmra.mxu0 %v1995
  %v2018 = vpop.f32.mrf.mxu0
  %v2019 = vadd.f32 0.0, %v2018
  %v2020 = vpop.f32.mrf.mxu0
  %v2021 = vadd.f32 0.0, %v2020
  %2022 = vmatmul.bf16.gmra.mxu0 %v1998
  %v2023 = vpop.f32.mrf.mxu0
  %v2024 = vadd.f32 0.0, %v2023
  %v2025 = vpop.f32.mrf.mxu0
  %v2026 = vadd.f32 0.0, %v2025
  %2027 = vmatmul.bf16.gmra.mxu0 %v2001
  %v2028 = vpop.f32.mrf.mxu0
  %v2029 = vadd.f32 0.0, %v2028
  %v2030 = vpop.f32.mrf.mxu0
  %v2031 = vadd.f32 0.0, %v2030
  %2032 = vmatmul.bf16.gmra.mxu0 %v2004
  %v2033 = vpop.f32.mrf.mxu0
  %v2034 = vadd.f32 0.0, %v2033
  %v2035 = vpop.f32.mrf.mxu0
  %v2036 = vadd.f32 0.0, %v2035
  %2037 = vmatmul.bf16.gmra.mxu0 %v2007
  %v2038 = vpop.f32.mrf.mxu0
  %v2039 = vadd.f32 0.0, %v2038
  %v2040 = vpop.f32.mrf.mxu0
  %2041 = vdwg.mxu0
  %v2042 = vadd.f32 %v1831, %v2019
  %v2043 = vadd.f32 %v1832, %v2021
  %v2044 = vadd.f32 %v1833, %v2024
  %v2045 = vadd.f32 %v1834, %v2026
  %v2046 = vadd.f32 %v1835, %v2029
  %v2047 = vadd.f32 %v1836, %v2031
  %v2048 = vadd.f32 %v1837, %v2034
  %v2049 = vadd.f32 %v1838, %v2036
  %v2050 = vadd.f32 %v1839, %v2039
  %s2051 = scalar_lea.vmem %s0, 648
  %v2052 = vld [vmem:[%s2051] sm:$0xff]
  %v2053 = vld [vmem:[%s2051 + $0x8] sm:$0xff]
  %v2054 = vld [vmem:[%s2051 + $0x10] sm:$0xff]
  %v2055 = vld [vmem:[%s2051 + $0x18] sm:$0xff]
  %v2056 = vld [vmem:[%s2051 + $0x20] sm:$0xff]
  %v2057 = vld [vmem:[%s2051 + $0x28] sm:$0xff]
  %v2058 = vld [vmem:[%s2051 + $0x30] sm:$0xff]
  %v2059 = vld [vmem:[%s2051 + $0x38] sm:$0xff]
  %v2060 = vld [vmem:[%s2051 + $0x40] sm:$0xff]
  %v2070 = vunpack.c.l.b16 %v2052
  %v2071 = vunpack.c.h.b16 %v2052
  %v2072 = vunpack.c.l.b16 %v2053
  %v2073 = vunpack.c.h.b16 %v2053
  %v2074 = vunpack.c.l.b16 %v2054
  %v2075 = vunpack.c.h.b16 %v2054
  %v2076 = vunpack.c.l.b16 %v2055
  %v2077 = vunpack.c.h.b16 %v2055
  %v2078 = vunpack.c.l.b16 %v2056
  %v2079 = vunpack.c.h.b16 %v2056
  %v2080 = vunpack.c.l.b16 %v2057
  %v2081 = vunpack.c.h.b16 %v2057
  %v2082 = vunpack.c.l.b16 %v2058
  %v2083 = vunpack.c.h.b16 %v2058
  %v2084 = vunpack.c.l.b16 %v2059
  %v2085 = vunpack.c.h.b16 %v2059
  %v2086 = vunpack.c.l.b16 %v2060
  %v2087 = vunpack.c.h.b16 %v2060
  %v2088 = vpack.c.b16 %v2072, %v2070
  %v2089 = vpack.c.b16 %v2073, %v2071
  %v2090 = vpack.c.b16 %v2076, %v2074
  %v2091 = vpack.c.b16 %v2077, %v2075
  %v2092 = vpack.c.b16 %v2080, %v2078
  %v2093 = vpack.c.b16 %v2081, %v2079
  %v2094 = vpack.c.b16 %v2084, %v2082
  %v2095 = vpack.c.b16 %v2085, %v2083
  %v2096 = vpack.c.b16 %v2086, %v2086
  %v2097 = vpack.c.b16 %v2087, %v2087
  %2108 = vmatpush.bf16.msra.mxu0 %v202
  %2109 = vmatpush.bf16.msra.mxu0 %v201
  %2110 = vmatpush.bf16.msra.mxu0 %v200
  %2111 = vmatpush.bf16.msra.mxu0 %v199
  %2112 = vmatpush.bf16.msra.mxu0 %v198
  %2113 = vmatpush.bf16.msra.mxu0 %v197
  %2114 = vmatpush.bf16.msra.mxu0 %v196
  %2115 = vmatpush.bf16.msra.mxu0 %v195
  %2116 = vmatmul.bf16.gmra.mxu0 %v2088
  %v2117 = vpop.f32.mrf.mxu0
  %v2118 = vadd.f32 %v82, %v2117
  %v2119 = vpop.f32.mrf.mxu0
  %v2120 = vadd.f32 %v82, %v2119
  %2121 = vmatmul.bf16.gmra.mxu0 %v2090
  %v2122 = vpop.f32.mrf.mxu0
  %v2123 = vadd.f32 %v82, %v2122
  %v2124 = vpop.f32.mrf.mxu0
  %v2125 = vadd.f32 %v82, %v2124
  %2126 = vmatmul.bf16.gmra.mxu0 %v2092
  %v2127 = vpop.f32.mrf.mxu0
  %v2128 = vadd.f32 %v82, %v2127
  %v2129 = vpop.f32.mrf.mxu0
  %v2130 = vadd.f32 %v82, %v2129
  %2131 = vmatmul.bf16.gmra.mxu0 %v2094
  %v2132 = vpop.f32.mrf.mxu0
  %v2133 = vadd.f32 %v82, %v2132
  %v2134 = vpop.f32.mrf.mxu0
  %v2135 = vadd.f32 %v82, %v2134
  %2136 = vmatmul.bf16.gmra.mxu0 %v2096
  %v2137 = vpop.f32.mrf.mxu0
  %v2138 = vadd.f32 %v82, %v2137
  %v2139 = vpop.f32.mrf.mxu0
  %2140 = vdwg.mxu0
  %2141 = vmatpush.bf16.msra.mxu0 %v210
  %2142 = vmatpush.bf16.msra.mxu0 %v209
  %2143 = vmatpush.bf16.msra.mxu0 %v208
  %2144 = vmatpush.bf16.msra.mxu0 %v207
  %2145 = vmatpush.bf16.msra.mxu0 %v206
  %2146 = vmatpush.bf16.msra.mxu0 %v205
  %2147 = vmatpush.bf16.msra.mxu0 %v204
  %2148 = vmatpush.bf16.msra.mxu0 %v203
  %2149 = vmatmul.bf16.gmra.mxu0 %v2089
  %v2150 = vpop.f32.mrf.mxu0
  %v2151 = vadd.f32 %v2118, %v2150
  %v2152 = vpop.f32.mrf.mxu0
  %v2153 = vadd.f32 %v2120, %v2152
  %2154 = vmatmul.bf16.gmra.mxu0 %v2091
  %v2155 = vpop.f32.mrf.mxu0
  %v2156 = vadd.f32 %v2123, %v2155
  %v2157 = vpop.f32.mrf.mxu0
  %v2158 = vadd.f32 %v2125, %v2157
  %2159 = vmatmul.bf16.gmra.mxu0 %v2093
  %v2160 = vpop.f32.mrf.mxu0
  %v2161 = vadd.f32 %v2128, %v2160
  %v2162 = vpop.f32.mrf.mxu0
  %v2163 = vadd.f32 %v2130, %v2162
  %2164 = vmatmul.bf16.gmra.mxu0 %v2095
  %v2165 = vpop.f32.mrf.mxu0
  %v2166 = vadd.f32 %v2133, %v2165
  %v2167 = vpop.f32.mrf.mxu0
  %v2168 = vadd.f32 %v2135, %v2167
  %2169 = vmatmul.bf16.gmra.mxu0 %v2097
  %v2170 = vpop.f32.mrf.mxu0
  %v2171 = vadd.f32 %v2138, %v2170
  %v2172 = vpop.f32.mrf.mxu0
  %2173 = vdwg.mxu0
  %v2174 = vmax.f32 %v2151, 0.0
  %v2175 = vmax.f32 %v2153, 0.0
  %v2176 = vmax.f32 %v2156, 0.0
  %v2177 = vmax.f32 %v2158, 0.0
  %v2178 = vmax.f32 %v2161, 0.0
  %v2179 = vmax.f32 %v2163, 0.0
  %v2180 = vmax.f32 %v2166, 0.0
  %v2181 = vmax.f32 %v2168, 0.0
  %v2182 = vmax.f32 %v2171, 0.0
  %v2183 = vpack.c.bf16 %v2175, %v2174
  %v2184 = vpack.c.bf16 %v2177, %v2176
  %v2185 = vpack.c.bf16 %v2179, %v2178
  %v2186 = vpack.c.bf16 %v2181, %v2180
  %v2187 = vpack.c.bf16 %v2182, %v2182
  %s2188 = scalar_lea.vmem %s3, 144
  %v2189 = vld [vmem:[%s2188] sm:$0xf]
  %v2190 = vld [vmem:[%s2188 + $0x4] sm:$0xf]
  %v2191 = vld [vmem:[%s2188 + $0x8] sm:$0xf]
  %v2192 = vld [vmem:[%s2188 + $0xc] sm:$0xf]
  %v2197 = vunpack.c.l.b16 %v2189
  %v2198 = vunpack.c.l.b16 %v2190
  %v2199 = vunpack.c.l.b16 %v2191
  %v2200 = vunpack.c.l.b16 %v2192
  %v2201 = vpack.c.b16 %v2198, %v2197
  %v2202 = vpack.c.b16 %v2200, %v2199
  %v2206 = vsel %vm465, %v2183, 0
  %v2209 = vsel %vm465, %v2184, 0
  %v2212 = vsel %vm465, %v2185, 0
  %v2215 = vsel %vm465, %v2186, 0
  %v2218 = vsel %vm465, %v2187, 0
  %2220 = vmatpush.bf16.msra.mxu0 0
  %2221 = vmatpush.bf16.msra.mxu0 0
  %2222 = vmatpush.bf16.msra.mxu0 0
  %2223 = vmatpush.bf16.msra.mxu0 0
  %2224 = vmatpush.bf16.msra.mxu0 0
  %2225 = vmatpush.bf16.msra.mxu0 0
  %2226 = vmatpush.bf16.msra.mxu0 %v2202
  %2227 = vmatpush.bf16.msra.mxu0 %v2201
  %2228 = vmatmul.bf16.gmra.mxu0 %v2206
  %v2229 = vpop.f32.mrf.mxu0
  %v2230 = vadd.f32 0.0, %v2229
  %v2231 = vpop.f32.mrf.mxu0
  %v2232 = vadd.f32 0.0, %v2231
  %2233 = vmatmul.bf16.gmra.mxu0 %v2209
  %v2234 = vpop.f32.mrf.mxu0
  %v2235 = vadd.f32 0.0, %v2234
  %v2236 = vpop.f32.mrf.mxu0
  %v2237 = vadd.f32 0.0, %v2236
  %2238 = vmatmul.bf16.gmra.mxu0 %v2212
  %v2239 = vpop.f32.mrf.mxu0
  %v2240 = vadd.f32 0.0, %v2239
  %v2241 = vpop.f32.mrf.mxu0
  %v2242 = vadd.f32 0.0, %v2241
  %2243 = vmatmul.bf16.gmra.mxu0 %v2215
  %v2244 = vpop.f32.mrf.mxu0
  %v2245 = vadd.f32 0.0, %v2244
  %v2246 = vpop.f32.mrf.mxu0
  %v2247 = vadd.f32 0.0, %v2246
  %2248 = vmatmul.bf16.gmra.mxu0 %v2218
  %v2249 = vpop.f32.mrf.mxu0
  %v2250 = vadd.f32 0.0, %v2249
  %v2251 = vpop.f32.mrf.mxu0
  %2252 = vdwg.mxu0
  %v2253 = vadd.f32 %v2042, %v2230
  %v2254 = vadd.f32 %v2043, %v2232
  %v2255 = vadd.f32 %v2044, %v2235
  %v2256 = vadd.f32 %v2045, %v2237
  %v2257 = vadd.f32 %v2046, %v2240
  %v2258 = vadd.f32 %v2047, %v2242
  %v2259 = vadd.f32 %v2048, %v2245
  %v2260 = vadd.f32 %v2049, %v2247
  %v2261 = vadd.f32 %v2050, %v2250
  %s2262 = scalar_lea.vmem %s0, 720
  %v2263 = vld [vmem:[%s2262] sm:$0xff]
  %v2264 = vld [vmem:[%s2262 + $0x8] sm:$0xff]
  %v2265 = vld [vmem:[%s2262 + $0x10] sm:$0xff]
  %v2266 = vld [vmem:[%s2262 + $0x18] sm:$0xff]
  %v2267 = vld [vmem:[%s2262 + $0x20] sm:$0xff]
  %v2268 = vld [vmem:[%s2262 + $0x28] sm:$0xff]
  %v2269 = vld [vmem:[%s2262 + $0x30] sm:$0xff]
  %v2270 = vld [vmem:[%s2262 + $0x38] sm:$0xff]
  %v2271 = vld [vmem:[%s2262 + $0x40] sm:$0xff]
  %v2281 = vunpack.c.l.b16 %v2263
  %v2282 = vunpack.c.h.b16 %v2263
  %v2283 = vunpack.c.l.b16 %v2264
  %v2284 = vunpack.c.h.b16 %v2264
  %v2285 = vunpack.c.l.b16 %v2265
  %v2286 = vunpack.c.h.b16 %v2265
  %v2287 = vunpack.c.l.b16 %v2266
  %v2288 = vunpack.c.h.b16 %v2266
  %v2289 = vunpack.c.l.b16 %v2267
  %v2290 = vunpack.c.h.b16 %v2267
  %v2291 = vunpack.c.l.b16 %v2268
  %v2292 = vunpack.c.h.b16 %v2268
  %v2293 = vunpack.c.l.b16 %v2269
  %v2294 = vunpack.c.h.b16 %v2269
  %v2295 = vunpack.c.l.b16 %v2270
  %v2296 = vunpack.c.h.b16 %v2270
  %v2297 = vunpack.c.l.b16 %v2271
  %v2298 = vunpack.c.h.b16 %v2271
  %v2299 = vpack.c.b16 %v2283, %v2281
  %v2300 = vpack.c.b16 %v2284, %v2282
  %v2301 = vpack.c.b16 %v2287, %v2285
  %v2302 = vpack.c.b16 %v2288, %v2286
  %v2303 = vpack.c.b16 %v2291, %v2289
  %v2304 = vpack.c.b16 %v2292, %v2290
  %v2305 = vpack.c.b16 %v2295, %v2293
  %v2306 = vpack.c.b16 %v2296, %v2294
  %v2307 = vpack.c.b16 %v2297, %v2297
  %v2308 = vpack.c.b16 %v2298, %v2298
  %2319 = vmatpush.bf16.msra.mxu0 %v202
  %2320 = vmatpush.bf16.msra.mxu0 %v201
  %2321 = vmatpush.bf16.msra.mxu0 %v200
  %2322 = vmatpush.bf16.msra.mxu0 %v199
  %2323 = vmatpush.bf16.msra.mxu0 %v198
  %2324 = vmatpush.bf16.msra.mxu0 %v197
  %2325 = vmatpush.bf16.msra.mxu0 %v196
  %2326 = vmatpush.bf16.msra.mxu0 %v195
  %2327 = vmatmul.bf16.gmra.mxu0 %v2299
  %v2328 = vpop.f32.mrf.mxu0
  %v2329 = vadd.f32 %v82, %v2328
  %v2330 = vpop.f32.mrf.mxu0
  %v2331 = vadd.f32 %v82, %v2330
  %2332 = vmatmul.bf16.gmra.mxu0 %v2301
  %v2333 = vpop.f32.mrf.mxu0
  %v2334 = vadd.f32 %v82, %v2333
  %v2335 = vpop.f32.mrf.mxu0
  %v2336 = vadd.f32 %v82, %v2335
  %2337 = vmatmul.bf16.gmra.mxu0 %v2303
  %v2338 = vpop.f32.mrf.mxu0
  %v2339 = vadd.f32 %v82, %v2338
  %v2340 = vpop.f32.mrf.mxu0
  %v2341 = vadd.f32 %v82, %v2340
  %2342 = vmatmul.bf16.gmra.mxu0 %v2305
  %v2343 = vpop.f32.mrf.mxu0
  %v2344 = vadd.f32 %v82, %v2343
  %v2345 = vpop.f32.mrf.mxu0
  %v2346 = vadd.f32 %v82, %v2345
  %2347 = vmatmul.bf16.gmra.mxu0 %v2307
  %v2348 = vpop.f32.mrf.mxu0
  %v2349 = vadd.f32 %v82, %v2348
  %v2350 = vpop.f32.mrf.mxu0
  %2351 = vdwg.mxu0
  %2352 = vmatpush.bf16.msra.mxu0 %v210
  %2353 = vmatpush.bf16.msra.mxu0 %v209
  %2354 = vmatpush.bf16.msra.mxu0 %v208
  %2355 = vmatpush.bf16.msra.mxu0 %v207
  %2356 = vmatpush.bf16.msra.mxu0 %v206
  %2357 = vmatpush.bf16.msra.mxu0 %v205
  %2358 = vmatpush.bf16.msra.mxu0 %v204
  %2359 = vmatpush.bf16.msra.mxu0 %v203
  %2360 = vmatmul.bf16.gmra.mxu0 %v2300
  %v2361 = vpop.f32.mrf.mxu0
  %v2362 = vadd.f32 %v2329, %v2361
  %v2363 = vpop.f32.mrf.mxu0
  %v2364 = vadd.f32 %v2331, %v2363
  %2365 = vmatmul.bf16.gmra.mxu0 %v2302
  %v2366 = vpop.f32.mrf.mxu0
  %v2367 = vadd.f32 %v2334, %v2366
  %v2368 = vpop.f32.mrf.mxu0
  %v2369 = vadd.f32 %v2336, %v2368
  %2370 = vmatmul.bf16.gmra.mxu0 %v2304
  %v2371 = vpop.f32.mrf.mxu0
  %v2372 = vadd.f32 %v2339, %v2371
  %v2373 = vpop.f32.mrf.mxu0
  %v2374 = vadd.f32 %v2341, %v2373
  %2375 = vmatmul.bf16.gmra.mxu0 %v2306
  %v2376 = vpop.f32.mrf.mxu0
  %v2377 = vadd.f32 %v2344, %v2376
  %v2378 = vpop.f32.mrf.mxu0
  %v2379 = vadd.f32 %v2346, %v2378
  %2380 = vmatmul.bf16.gmra.mxu0 %v2308
  %v2381 = vpop.f32.mrf.mxu0
  %v2382 = vadd.f32 %v2349, %v2381
  %v2383 = vpop.f32.mrf.mxu0
  %2384 = vdwg.mxu0
  %v2385 = vmax.f32 %v2362, 0.0
  %v2386 = vmax.f32 %v2364, 0.0
  %v2387 = vmax.f32 %v2367, 0.0
  %v2388 = vmax.f32 %v2369, 0.0
  %v2389 = vmax.f32 %v2372, 0.0
  %v2390 = vmax.f32 %v2374, 0.0
  %v2391 = vmax.f32 %v2377, 0.0
  %v2392 = vmax.f32 %v2379, 0.0
  %v2393 = vmax.f32 %v2382, 0.0
  %v2394 = vpack.c.bf16 %v2386, %v2385
  %v2395 = vpack.c.bf16 %v2388, %v2387
  %v2396 = vpack.c.bf16 %v2390, %v2389
  %v2397 = vpack.c.bf16 %v2392, %v2391
  %v2398 = vpack.c.bf16 %v2393, %v2393
  %s2399 = scalar_lea.vmem %s3, 160
  %v2400 = vld [vmem:[%s2399] sm:$0xf]
  %v2401 = vld [vmem:[%s2399 + $0x4] sm:$0xf]
  %v2402 = vld [vmem:[%s2399 + $0x8] sm:$0xf]
  %v2403 = vld [vmem:[%s2399 + $0xc] sm:$0xf]
  %v2408 = vunpack.c.l.b16 %v2400
  %v2409 = vunpack.c.l.b16 %v2401
  %v2410 = vunpack.c.l.b16 %v2402
  %v2411 = vunpack.c.l.b16 %v2403
  %v2412 = vpack.c.b16 %v2409, %v2408
  %v2413 = vpack.c.b16 %v2411, %v2410
  %v2417 = vsel %vm465, %v2394, 0
  %v2420 = vsel %vm465, %v2395, 0
  %v2423 = vsel %vm465, %v2396, 0
  %v2426 = vsel %vm465, %v2397, 0
  %v2429 = vsel %vm465, %v2398, 0
  %2431 = vmatpush.bf16.msra.mxu0 0
  %2432 = vmatpush.bf16.msra.mxu0 0
  %2433 = vmatpush.bf16.msra.mxu0 0
  %2434 = vmatpush.bf16.msra.mxu0 0
  %2435 = vmatpush.bf16.msra.mxu0 0
  %2436 = vmatpush.bf16.msra.mxu0 0
  %2437 = vmatpush.bf16.msra.mxu0 %v2413
  %2438 = vmatpush.bf16.msra.mxu0 %v2412
  %2439 = vmatmul.bf16.gmra.mxu0 %v2417
  %v2440 = vpop.f32.mrf.mxu0
  %v2441 = vadd.f32 0.0, %v2440
  %v2442 = vpop.f32.mrf.mxu0
  %v2443 = vadd.f32 0.0, %v2442
  %2444 = vmatmul.bf16.gmra.mxu0 %v2420
  %v2445 = vpop.f32.mrf.mxu0
  %v2446 = vadd.f32 0.0, %v2445
  %v2447 = vpop.f32.mrf.mxu0
  %v2448 = vadd.f32 0.0, %v2447
  %2449 = vmatmul.bf16.gmra.mxu0 %v2423
  %v2450 = vpop.f32.mrf.mxu0
  %v2451 = vadd.f32 0.0, %v2450
  %v2452 = vpop.f32.mrf.mxu0
  %v2453 = vadd.f32 0.0, %v2452
  %2454 = vmatmul.bf16.gmra.mxu0 %v2426
  %v2455 = vpop.f32.mrf.mxu0
  %v2456 = vadd.f32 0.0, %v2455
  %v2457 = vpop.f32.mrf.mxu0
  %v2458 = vadd.f32 0.0, %v2457
  %2459 = vmatmul.bf16.gmra.mxu0 %v2429
  %v2460 = vpop.f32.mrf.mxu0
  %v2461 = vadd.f32 0.0, %v2460
  %v2462 = vpop.f32.mrf.mxu0
  %2463 = vdwg.mxu0
  %v2464 = vadd.f32 %v2253, %v2441
  %v2465 = vadd.f32 %v2254, %v2443
  %v2466 = vadd.f32 %v2255, %v2446
  %v2467 = vadd.f32 %v2256, %v2448
  %v2468 = vadd.f32 %v2257, %v2451
  %v2469 = vadd.f32 %v2258, %v2453
  %v2470 = vadd.f32 %v2259, %v2456
  %v2471 = vadd.f32 %v2260, %v2458
  %v2472 = vadd.f32 %v2261, %v2461
  %s2473 = scalar_lea.vmem %s0, 792
  %v2474 = vld [vmem:[%s2473] sm:$0xff]
  %v2475 = vld [vmem:[%s2473 + $0x8] sm:$0xff]
  %v2476 = vld [vmem:[%s2473 + $0x10] sm:$0xff]
  %v2477 = vld [vmem:[%s2473 + $0x18] sm:$0xff]
  %v2478 = vld [vmem:[%s2473 + $0x20] sm:$0xff]
  %v2479 = vld [vmem:[%s2473 + $0x28] sm:$0xff]
  %v2480 = vld [vmem:[%s2473 + $0x30] sm:$0xff]
  %v2481 = vld [vmem:[%s2473 + $0x38] sm:$0xff]
  %v2482 = vld [vmem:[%s2473 + $0x40] sm:$0xff]
  %v2492 = vunpack.c.l.b16 %v2474
  %v2493 = vunpack.c.h.b16 %v2474
  %v2494 = vunpack.c.l.b16 %v2475
  %v2495 = vunpack.c.h.b16 %v2475
  %v2496 = vunpack.c.l.b16 %v2476
  %v2497 = vunpack.c.h.b16 %v2476
  %v2498 = vunpack.c.l.b16 %v2477
  %v2499 = vunpack.c.h.b16 %v2477
  %v2500 = vunpack.c.l.b16 %v2478
  %v2501 = vunpack.c.h.b16 %v2478
  %v2502 = vunpack.c.l.b16 %v2479
  %v2503 = vunpack.c.h.b16 %v2479
  %v2504 = vunpack.c.l.b16 %v2480
  %v2505 = vunpack.c.h.b16 %v2480
  %v2506 = vunpack.c.l.b16 %v2481
  %v2507 = vunpack.c.h.b16 %v2481
  %v2508 = vunpack.c.l.b16 %v2482
  %v2509 = vunpack.c.h.b16 %v2482
  %v2510 = vpack.c.b16 %v2494, %v2492
  %v2511 = vpack.c.b16 %v2495, %v2493
  %v2512 = vpack.c.b16 %v2498, %v2496
  %v2513 = vpack.c.b16 %v2499, %v2497
  %v2514 = vpack.c.b16 %v2502, %v2500
  %v2515 = vpack.c.b16 %v2503, %v2501
  %v2516 = vpack.c.b16 %v2506, %v2504
  %v2517 = vpack.c.b16 %v2507, %v2505
  %v2518 = vpack.c.b16 %v2508, %v2508
  %v2519 = vpack.c.b16 %v2509, %v2509
  %2530 = vmatpush.bf16.msra.mxu0 %v202
  %2531 = vmatpush.bf16.msra.mxu0 %v201
  %2532 = vmatpush.bf16.msra.mxu0 %v200
  %2533 = vmatpush.bf16.msra.mxu0 %v199
  %2534 = vmatpush.bf16.msra.mxu0 %v198
  %2535 = vmatpush.bf16.msra.mxu0 %v197
  %2536 = vmatpush.bf16.msra.mxu0 %v196
  %2537 = vmatpush.bf16.msra.mxu0 %v195
  %2538 = vmatmul.bf16.gmra.mxu0 %v2510
  %v2539 = vpop.f32.mrf.mxu0
  %v2540 = vadd.f32 %v82, %v2539
  %v2541 = vpop.f32.mrf.mxu0
  %v2542 = vadd.f32 %v82, %v2541
  %2543 = vmatmul.bf16.gmra.mxu0 %v2512
  %v2544 = vpop.f32.mrf.mxu0
  %v2545 = vadd.f32 %v82, %v2544
  %v2546 = vpop.f32.mrf.mxu0
  %v2547 = vadd.f32 %v82, %v2546
  %2548 = vmatmul.bf16.gmra.mxu0 %v2514
  %v2549 = vpop.f32.mrf.mxu0
  %v2550 = vadd.f32 %v82, %v2549
  %v2551 = vpop.f32.mrf.mxu0
  %v2552 = vadd.f32 %v82, %v2551
  %2553 = vmatmul.bf16.gmra.mxu0 %v2516
  %v2554 = vpop.f32.mrf.mxu0
  %v2555 = vadd.f32 %v82, %v2554
  %v2556 = vpop.f32.mrf.mxu0
  %v2557 = vadd.f32 %v82, %v2556
  %2558 = vmatmul.bf16.gmra.mxu0 %v2518
  %v2559 = vpop.f32.mrf.mxu0
  %v2560 = vadd.f32 %v82, %v2559
  %v2561 = vpop.f32.mrf.mxu0
  %2562 = vdwg.mxu0
  %2563 = vmatpush.bf16.msra.mxu0 %v210
  %2564 = vmatpush.bf16.msra.mxu0 %v209
  %2565 = vmatpush.bf16.msra.mxu0 %v208
  %2566 = vmatpush.bf16.msra.mxu0 %v207
  %2567 = vmatpush.bf16.msra.mxu0 %v206
  %2568 = vmatpush.bf16.msra.mxu0 %v205
  %2569 = vmatpush.bf16.msra.mxu0 %v204
  %2570 = vmatpush.bf16.msra.mxu0 %v203
  %2571 = vmatmul.bf16.gmra.mxu0 %v2511
  %v2572 = vpop.f32.mrf.mxu0
  %v2573 = vadd.f32 %v2540, %v2572
  %v2574 = vpop.f32.mrf.mxu0
  %v2575 = vadd.f32 %v2542, %v2574
  %2576 = vmatmul.bf16.gmra.mxu0 %v2513
  %v2577 = vpop.f32.mrf.mxu0
  %v2578 = vadd.f32 %v2545, %v2577
  %v2579 = vpop.f32.mrf.mxu0
  %v2580 = vadd.f32 %v2547, %v2579
  %2581 = vmatmul.bf16.gmra.mxu0 %v2515
  %v2582 = vpop.f32.mrf.mxu0
  %v2583 = vadd.f32 %v2550, %v2582
  %v2584 = vpop.f32.mrf.mxu0
  %v2585 = vadd.f32 %v2552, %v2584
  %2586 = vmatmul.bf16.gmra.mxu0 %v2517
  %v2587 = vpop.f32.mrf.mxu0
  %v2588 = vadd.f32 %v2555, %v2587
  %v2589 = vpop.f32.mrf.mxu0
  %v2590 = vadd.f32 %v2557, %v2589
  %2591 = vmatmul.bf16.gmra.mxu0 %v2519
  %v2592 = vpop.f32.mrf.mxu0
  %v2593 = vadd.f32 %v2560, %v2592
  %v2594 = vpop.f32.mrf.mxu0
  %2595 = vdwg.mxu0
  %v2596 = vmax.f32 %v2573, 0.0
  %v2597 = vmax.f32 %v2575, 0.0
  %v2598 = vmax.f32 %v2578, 0.0
  %v2599 = vmax.f32 %v2580, 0.0
  %v2600 = vmax.f32 %v2583, 0.0
  %v2601 = vmax.f32 %v2585, 0.0
  %v2602 = vmax.f32 %v2588, 0.0
  %v2603 = vmax.f32 %v2590, 0.0
  %v2604 = vmax.f32 %v2593, 0.0
  %v2605 = vpack.c.bf16 %v2597, %v2596
  %v2606 = vpack.c.bf16 %v2599, %v2598
  %v2607 = vpack.c.bf16 %v2601, %v2600
  %v2608 = vpack.c.bf16 %v2603, %v2602
  %v2609 = vpack.c.bf16 %v2604, %v2604
  %s2610 = scalar_lea.vmem %s3, 176
  %v2611 = vld [vmem:[%s2610] sm:$0xf]
  %v2612 = vld [vmem:[%s2610 + $0x4] sm:$0xf]
  %v2613 = vld [vmem:[%s2610 + $0x8] sm:$0xf]
  %v2614 = vld [vmem:[%s2610 + $0xc] sm:$0xf]
  %v2619 = vunpack.c.l.b16 %v2611
  %v2620 = vunpack.c.l.b16 %v2612
  %v2621 = vunpack.c.l.b16 %v2613
  %v2622 = vunpack.c.l.b16 %v2614
  %v2623 = vpack.c.b16 %v2620, %v2619
  %v2624 = vpack.c.b16 %v2622, %v2621
  %v2628 = vsel %vm465, %v2605, 0
  %v2631 = vsel %vm465, %v2606, 0
  %v2634 = vsel %vm465, %v2607, 0
  %v2637 = vsel %vm465, %v2608, 0
  %v2640 = vsel %vm465, %v2609, 0
  %2642 = vmatpush.bf16.msra.mxu0 0
  %2643 = vmatpush.bf16.msra.mxu0 0
  %2644 = vmatpush.bf16.msra.mxu0 0
  %2645 = vmatpush.bf16.msra.mxu0 0
  %2646 = vmatpush.bf16.msra.mxu0 0
  %2647 = vmatpush.bf16.msra.mxu0 0
  %2648 = vmatpush.bf16.msra.mxu0 %v2624
  %2649 = vmatpush.bf16.msra.mxu0 %v2623
  %2650 = vmatmul.bf16.gmra.mxu0 %v2628
  %v2651 = vpop.f32.mrf.mxu0
  %v2652 = vadd.f32 0.0, %v2651
  %v2653 = vpop.f32.mrf.mxu0
  %v2654 = vadd.f32 0.0, %v2653
  %2655 = vmatmul.bf16.gmra.mxu0 %v2631
  %v2656 = vpop.f32.mrf.mxu0
  %v2657 = vadd.f32 0.0, %v2656
  %v2658 = vpop.f32.mrf.mxu0
  %v2659 = vadd.f32 0.0, %v2658
  %2660 = vmatmul.bf16.gmra.mxu0 %v2634
  %v2661 = vpop.f32.mrf.mxu0
  %v2662 = vadd.f32 0.0, %v2661
  %v2663 = vpop.f32.mrf.mxu0
  %v2664 = vadd.f32 0.0, %v2663
  %2665 = vmatmul.bf16.gmra.mxu0 %v2637
  %v2666 = vpop.f32.mrf.mxu0
  %v2667 = vadd.f32 0.0, %v2666
  %v2668 = vpop.f32.mrf.mxu0
  %v2669 = vadd.f32 0.0, %v2668
  %2670 = vmatmul.bf16.gmra.mxu0 %v2640
  %v2671 = vpop.f32.mrf.mxu0
  %v2672 = vadd.f32 0.0, %v2671
  %v2673 = vpop.f32.mrf.mxu0
  %2674 = vdwg.mxu0
  %v2675 = vadd.f32 %v2464, %v2652
  %v2676 = vadd.f32 %v2465, %v2654
  %v2677 = vadd.f32 %v2466, %v2657
  %v2678 = vadd.f32 %v2467, %v2659
  %v2679 = vadd.f32 %v2468, %v2662
  %v2680 = vadd.f32 %v2469, %v2664
  %v2681 = vadd.f32 %v2470, %v2667
  %v2682 = vadd.f32 %v2471, %v2669
  %v2683 = vadd.f32 %v2472, %v2672
  %s2684 = scalar_lea.vmem %s0, 864
  %v2685 = vld [vmem:[%s2684] sm:$0xff]
  %v2686 = vld [vmem:[%s2684 + $0x8] sm:$0xff]
  %v2687 = vld [vmem:[%s2684 + $0x10] sm:$0xff]
  %v2688 = vld [vmem:[%s2684 + $0x18] sm:$0xff]
  %v2689 = vld [vmem:[%s2684 + $0x20] sm:$0xff]
  %v2690 = vld [vmem:[%s2684 + $0x28] sm:$0xff]
  %v2691 = vld [vmem:[%s2684 + $0x30] sm:$0xff]
  %v2692 = vld [vmem:[%s2684 + $0x38] sm:$0xff]
  %v2693 = vld [vmem:[%s2684 + $0x40] sm:$0xff]
  %v2703 = vunpack.c.l.b16 %v2685
  %v2704 = vunpack.c.h.b16 %v2685
  %v2705 = vunpack.c.l.b16 %v2686
  %v2706 = vunpack.c.h.b16 %v2686
  %v2707 = vunpack.c.l.b16 %v2687
  %v2708 = vunpack.c.h.b16 %v2687
  %v2709 = vunpack.c.l.b16 %v2688
  %v2710 = vunpack.c.h.b16 %v2688
  %v2711 = vunpack.c.l.b16 %v2689
  %v2712 = vunpack.c.h.b16 %v2689
  %v2713 = vunpack.c.l.b16 %v2690
  %v2714 = vunpack.c.h.b16 %v2690
  %v2715 = vunpack.c.l.b16 %v2691
  %v2716 = vunpack.c.h.b16 %v2691
  %v2717 = vunpack.c.l.b16 %v2692
  %v2718 = vunpack.c.h.b16 %v2692
  %v2719 = vunpack.c.l.b16 %v2693
  %v2720 = vunpack.c.h.b16 %v2693
  %v2721 = vpack.c.b16 %v2705, %v2703
  %v2722 = vpack.c.b16 %v2706, %v2704
  %v2723 = vpack.c.b16 %v2709, %v2707
  %v2724 = vpack.c.b16 %v2710, %v2708
  %v2725 = vpack.c.b16 %v2713, %v2711
  %v2726 = vpack.c.b16 %v2714, %v2712
  %v2727 = vpack.c.b16 %v2717, %v2715
  %v2728 = vpack.c.b16 %v2718, %v2716
  %v2729 = vpack.c.b16 %v2719, %v2719
  %v2730 = vpack.c.b16 %v2720, %v2720
  %2741 = vmatpush.bf16.msra.mxu0 %v202
  %2742 = vmatpush.bf16.msra.mxu0 %v201
  %2743 = vmatpush.bf16.msra.mxu0 %v200
  %2744 = vmatpush.bf16.msra.mxu0 %v199
  %2745 = vmatpush.bf16.msra.mxu0 %v198
  %2746 = vmatpush.bf16.msra.mxu0 %v197
  %2747 = vmatpush.bf16.msra.mxu0 %v196
  %2748 = vmatpush.bf16.msra.mxu0 %v195
  %2749 = vmatmul.bf16.gmra.mxu0 %v2721
  %v2750 = vpop.f32.mrf.mxu0
  %v2751 = vadd.f32 %v82, %v2750
  %v2752 = vpop.f32.mrf.mxu0
  %v2753 = vadd.f32 %v82, %v2752
  %2754 = vmatmul.bf16.gmra.mxu0 %v2723
  %v2755 = vpop.f32.mrf.mxu0
  %v2756 = vadd.f32 %v82, %v2755
  %v2757 = vpop.f32.mrf.mxu0
  %v2758 = vadd.f32 %v82, %v2757
  %2759 = vmatmul.bf16.gmra.mxu0 %v2725
  %v2760 = vpop.f32.mrf.mxu0
  %v2761 = vadd.f32 %v82, %v2760
  %v2762 = vpop.f32.mrf.mxu0
  %v2763 = vadd.f32 %v82, %v2762
  %2764 = vmatmul.bf16.gmra.mxu0 %v2727
  %v2765 = vpop.f32.mrf.mxu0
  %v2766 = vadd.f32 %v82, %v2765
  %v2767 = vpop.f32.mrf.mxu0
  %v2768 = vadd.f32 %v82, %v2767
  %2769 = vmatmul.bf16.gmra.mxu0 %v2729
  %v2770 = vpop.f32.mrf.mxu0
  %v2771 = vadd.f32 %v82, %v2770
  %v2772 = vpop.f32.mrf.mxu0
  %2773 = vdwg.mxu0
  %2774 = vmatpush.bf16.msra.mxu0 %v210
  %2775 = vmatpush.bf16.msra.mxu0 %v209
  %2776 = vmatpush.bf16.msra.mxu0 %v208
  %2777 = vmatpush.bf16.msra.mxu0 %v207
  %2778 = vmatpush.bf16.msra.mxu0 %v206
  %2779 = vmatpush.bf16.msra.mxu0 %v205
  %2780 = vmatpush.bf16.msra.mxu0 %v204
  %2781 = vmatpush.bf16.msra.mxu0 %v203
  %2782 = vmatmul.bf16.gmra.mxu0 %v2722
  %v2783 = vpop.f32.mrf.mxu0
  %v2784 = vadd.f32 %v2751, %v2783
  %v2785 = vpop.f32.mrf.mxu0
  %v2786 = vadd.f32 %v2753, %v2785
  %2787 = vmatmul.bf16.gmra.mxu0 %v2724
  %v2788 = vpop.f32.mrf.mxu0
  %v2789 = vadd.f32 %v2756, %v2788
  %v2790 = vpop.f32.mrf.mxu0
  %v2791 = vadd.f32 %v2758, %v2790
  %2792 = vmatmul.bf16.gmra.mxu0 %v2726
  %v2793 = vpop.f32.mrf.mxu0
  %v2794 = vadd.f32 %v2761, %v2793
  %v2795 = vpop.f32.mrf.mxu0
  %v2796 = vadd.f32 %v2763, %v2795
  %2797 = vmatmul.bf16.gmra.mxu0 %v2728
  %v2798 = vpop.f32.mrf.mxu0
  %v2799 = vadd.f32 %v2766, %v2798
  %v2800 = vpop.f32.mrf.mxu0
  %v2801 = vadd.f32 %v2768, %v2800
  %2802 = vmatmul.bf16.gmra.mxu0 %v2730
  %v2803 = vpop.f32.mrf.mxu0
  %v2804 = vadd.f32 %v2771, %v2803
  %v2805 = vpop.f32.mrf.mxu0
  %2806 = vdwg.mxu0
  %v2807 = vmax.f32 %v2784, 0.0
  %v2808 = vmax.f32 %v2786, 0.0
  %v2809 = vmax.f32 %v2789, 0.0
  %v2810 = vmax.f32 %v2791, 0.0
  %v2811 = vmax.f32 %v2794, 0.0
  %v2812 = vmax.f32 %v2796, 0.0
  %v2813 = vmax.f32 %v2799, 0.0
  %v2814 = vmax.f32 %v2801, 0.0
  %v2815 = vmax.f32 %v2804, 0.0
  %v2816 = vpack.c.bf16 %v2808, %v2807
  %v2817 = vpack.c.bf16 %v2810, %v2809
  %v2818 = vpack.c.bf16 %v2812, %v2811
  %v2819 = vpack.c.bf16 %v2814, %v2813
  %v2820 = vpack.c.bf16 %v2815, %v2815
  %s2821 = scalar_lea.vmem %s3, 192
  %v2822 = vld [vmem:[%s2821] sm:$0xf]
  %v2823 = vld [vmem:[%s2821 + $0x4] sm:$0xf]
  %v2824 = vld [vmem:[%s2821 + $0x8] sm:$0xf]
  %v2825 = vld [vmem:[%s2821 + $0xc] sm:$0xf]
  %v2830 = vunpack.c.l.b16 %v2822
  %v2831 = vunpack.c.l.b16 %v2823
  %v2832 = vunpack.c.l.b16 %v2824
  %v2833 = vunpack.c.l.b16 %v2825
  %v2834 = vpack.c.b16 %v2831, %v2830
  %v2835 = vpack.c.b16 %v2833, %v2832
  %v2839 = vsel %vm465, %v2816, 0
  %v2842 = vsel %vm465, %v2817, 0
  %v2845 = vsel %vm465, %v2818, 0
  %v2848 = vsel %vm465, %v2819, 0
  %v2851 = vsel %vm465, %v2820, 0
  %2853 = vmatpush.bf16.msra.mxu0 0
  %2854 = vmatpush.bf16.msra.mxu0 0
  %2855 = vmatpush.bf16.msra.mxu0 0
  %2856 = vmatpush.bf16.msra.mxu0 0
  %2857 = vmatpush.bf16.msra.mxu0 0
  %2858 = vmatpush.bf16.msra.mxu0 0
  %2859 = vmatpush.bf16.msra.mxu0 %v2835
  %2860 = vmatpush.bf16.msra.mxu0 %v2834
  %2861 = vmatmul.bf16.gmra.mxu0 %v2839
  %v2862 = vpop.f32.mrf.mxu0
  %v2863 = vadd.f32 0.0, %v2862
  %v2864 = vpop.f32.mrf.mxu0
  %v2865 = vadd.f32 0.0, %v2864
  %2866 = vmatmul.bf16.gmra.mxu0 %v2842
  %v2867 = vpop.f32.mrf.mxu0
  %v2868 = vadd.f32 0.0, %v2867
  %v2869 = vpop.f32.mrf.mxu0
  %v2870 = vadd.f32 0.0, %v2869
  %2871 = vmatmul.bf16.gmra.mxu0 %v2845
  %v2872 = vpop.f32.mrf.mxu0
  %v2873 = vadd.f32 0.0, %v2872
  %v2874 = vpop.f32.mrf.mxu0
  %v2875 = vadd.f32 0.0, %v2874
  %2876 = vmatmul.bf16.gmra.mxu0 %v2848
  %v2877 = vpop.f32.mrf.mxu0
  %v2878 = vadd.f32 0.0, %v2877
  %v2879 = vpop.f32.mrf.mxu0
  %v2880 = vadd.f32 0.0, %v2879
  %2881 = vmatmul.bf16.gmra.mxu0 %v2851
  %v2882 = vpop.f32.mrf.mxu0
  %v2883 = vadd.f32 0.0, %v2882
  %v2884 = vpop.f32.mrf.mxu0
  %2885 = vdwg.mxu0
  %v2886 = vadd.f32 %v2675, %v2863
  %v2887 = vadd.f32 %v2676, %v2865
  %v2888 = vadd.f32 %v2677, %v2868
  %v2889 = vadd.f32 %v2678, %v2870
  %v2890 = vadd.f32 %v2679, %v2873
  %v2891 = vadd.f32 %v2680, %v2875
  %v2892 = vadd.f32 %v2681, %v2878
  %v2893 = vadd.f32 %v2682, %v2880
  %v2894 = vadd.f32 %v2683, %v2883
  %s2895 = scalar_lea.vmem %s0, 936
  %v2896 = vld [vmem:[%s2895] sm:$0xff]
  %v2897 = vld [vmem:[%s2895 + $0x8] sm:$0xff]
  %v2898 = vld [vmem:[%s2895 + $0x10] sm:$0xff]
  %v2899 = vld [vmem:[%s2895 + $0x18] sm:$0xff]
  %v2900 = vld [vmem:[%s2895 + $0x20] sm:$0xff]
  %v2901 = vld [vmem:[%s2895 + $0x28] sm:$0xff]
  %v2902 = vld [vmem:[%s2895 + $0x30] sm:$0xff]
  %v2903 = vld [vmem:[%s2895 + $0x38] sm:$0xff]
  %v2904 = vld [vmem:[%s2895 + $0x40] sm:$0xff]
  %v2914 = vunpack.c.l.b16 %v2896
  %v2915 = vunpack.c.h.b16 %v2896
  %v2916 = vunpack.c.l.b16 %v2897
  %v2917 = vunpack.c.h.b16 %v2897
  %v2918 = vunpack.c.l.b16 %v2898
  %v2919 = vunpack.c.h.b16 %v2898
  %v2920 = vunpack.c.l.b16 %v2899
  %v2921 = vunpack.c.h.b16 %v2899
  %v2922 = vunpack.c.l.b16 %v2900
  %v2923 = vunpack.c.h.b16 %v2900
  %v2924 = vunpack.c.l.b16 %v2901
  %v2925 = vunpack.c.h.b16 %v2901
  %v2926 = vunpack.c.l.b16 %v2902
  %v2927 = vunpack.c.h.b16 %v2902
  %v2928 = vunpack.c.l.b16 %v2903
  %v2929 = vunpack.c.h.b16 %v2903
  %v2930 = vunpack.c.l.b16 %v2904
  %v2931 = vunpack.c.h.b16 %v2904
  %v2932 = vpack.c.b16 %v2916, %v2914
  %v2933 = vpack.c.b16 %v2917, %v2915
  %v2934 = vpack.c.b16 %v2920, %v2918
  %v2935 = vpack.c.b16 %v2921, %v2919
  %v2936 = vpack.c.b16 %v2924, %v2922
  %v2937 = vpack.c.b16 %v2925, %v2923
  %v2938 = vpack.c.b16 %v2928, %v2926
  %v2939 = vpack.c.b16 %v2929, %v2927
  %v2940 = vpack.c.b16 %v2930, %v2930
  %v2941 = vpack.c.b16 %v2931, %v2931
  %2952 = vmatpush.bf16.msra.mxu0 %v202
  %2953 = vmatpush.bf16.msra.mxu0 %v201
  %2954 = vmatpush.bf16.msra.mxu0 %v200
  %2955 = vmatpush.bf16.msra.mxu0 %v199
  %2956 = vmatpush.bf16.msra.mxu0 %v198
  %2957 = vmatpush.bf16.msra.mxu0 %v197
  %2958 = vmatpush.bf16.msra.mxu0 %v196
  %2959 = vmatpush.bf16.msra.mxu0 %v195
  %2960 = vmatmul.bf16.gmra.mxu0 %v2932
  %v2961 = vpop.f32.mrf.mxu0
  %v2962 = vadd.f32 %v82, %v2961
  %v2963 = vpop.f32.mrf.mxu0
  %v2964 = vadd.f32 %v82, %v2963
  %2965 = vmatmul.bf16.gmra.mxu0 %v2934
  %v2966 = vpop.f32.mrf.mxu0
  %v2967 = vadd.f32 %v82, %v2966
  %v2968 = vpop.f32.mrf.mxu0
  %v2969 = vadd.f32 %v82, %v2968
  %2970 = vmatmul.bf16.gmra.mxu0 %v2936
  %v2971 = vpop.f32.mrf.mxu0
  %v2972 = vadd.f32 %v82, %v2971
  %v2973 = vpop.f32.mrf.mxu0
  %v2974 = vadd.f32 %v82, %v2973
  %2975 = vmatmul.bf16.gmra.mxu0 %v2938
  %v2976 = vpop.f32.mrf.mxu0
  %v2977 = vadd.f32 %v82, %v2976
  %v2978 = vpop.f32.mrf.mxu0
  %v2979 = vadd.f32 %v82, %v2978
  %2980 = vmatmul.bf16.gmra.mxu0 %v2940
  %v2981 = vpop.f32.mrf.mxu0
  %v2982 = vadd.f32 %v82, %v2981
  %v2983 = vpop.f32.mrf.mxu0
  %2984 = vdwg.mxu0
  %2985 = vmatpush.bf16.msra.mxu0 %v210
  %2986 = vmatpush.bf16.msra.mxu0 %v209
  %2987 = vmatpush.bf16.msra.mxu0 %v208
  %2988 = vmatpush.bf16.msra.mxu0 %v207
  %2989 = vmatpush.bf16.msra.mxu0 %v206
  %2990 = vmatpush.bf16.msra.mxu0 %v205
  %2991 = vmatpush.bf16.msra.mxu0 %v204
  %2992 = vmatpush.bf16.msra.mxu0 %v203
  %2993 = vmatmul.bf16.gmra.mxu0 %v2933
  %v2994 = vpop.f32.mrf.mxu0
  %v2995 = vadd.f32 %v2962, %v2994
  %v2996 = vpop.f32.mrf.mxu0
  %v2997 = vadd.f32 %v2964, %v2996
  %2998 = vmatmul.bf16.gmra.mxu0 %v2935
  %v2999 = vpop.f32.mrf.mxu0
  %v3000 = vadd.f32 %v2967, %v2999
  %v3001 = vpop.f32.mrf.mxu0
  %v3002 = vadd.f32 %v2969, %v3001
  %3003 = vmatmul.bf16.gmra.mxu0 %v2937
  %v3004 = vpop.f32.mrf.mxu0
  %v3005 = vadd.f32 %v2972, %v3004
  %v3006 = vpop.f32.mrf.mxu0
  %v3007 = vadd.f32 %v2974, %v3006
  %3008 = vmatmul.bf16.gmra.mxu0 %v2939
  %v3009 = vpop.f32.mrf.mxu0
  %v3010 = vadd.f32 %v2977, %v3009
  %v3011 = vpop.f32.mrf.mxu0
  %v3012 = vadd.f32 %v2979, %v3011
  %3013 = vmatmul.bf16.gmra.mxu0 %v2941
  %v3014 = vpop.f32.mrf.mxu0
  %v3015 = vadd.f32 %v2982, %v3014
  %v3016 = vpop.f32.mrf.mxu0
  %3017 = vdwg.mxu0
  %v3018 = vmax.f32 %v2995, 0.0
  %v3019 = vmax.f32 %v2997, 0.0
  %v3020 = vmax.f32 %v3000, 0.0
  %v3021 = vmax.f32 %v3002, 0.0
  %v3022 = vmax.f32 %v3005, 0.0
  %v3023 = vmax.f32 %v3007, 0.0
  %v3024 = vmax.f32 %v3010, 0.0
  %v3025 = vmax.f32 %v3012, 0.0
  %v3026 = vmax.f32 %v3015, 0.0
  %v3027 = vpack.c.bf16 %v3019, %v3018
  %v3028 = vpack.c.bf16 %v3021, %v3020
  %v3029 = vpack.c.bf16 %v3023, %v3022
  %v3030 = vpack.c.bf16 %v3025, %v3024
  %v3031 = vpack.c.bf16 %v3026, %v3026
  %s3032 = scalar_lea.vmem %s3, 208
  %v3033 = vld [vmem:[%s3032] sm:$0xf]
  %v3034 = vld [vmem:[%s3032 + $0x4] sm:$0xf]
  %v3035 = vld [vmem:[%s3032 + $0x8] sm:$0xf]
  %v3036 = vld [vmem:[%s3032 + $0xc] sm:$0xf]
  %v3041 = vunpack.c.l.b16 %v3033
  %v3042 = vunpack.c.l.b16 %v3034
  %v3043 = vunpack.c.l.b16 %v3035
  %v3044 = vunpack.c.l.b16 %v3036
  %v3045 = vpack.c.b16 %v3042, %v3041
  %v3046 = vpack.c.b16 %v3044, %v3043
  %v3050 = vsel %vm465, %v3027, 0
  %v3053 = vsel %vm465, %v3028, 0
  %v3056 = vsel %vm465, %v3029, 0
  %v3059 = vsel %vm465, %v3030, 0
  %v3062 = vsel %vm465, %v3031, 0
  %3064 = vmatpush.bf16.msra.mxu0 0
  %3065 = vmatpush.bf16.msra.mxu0 0
  %3066 = vmatpush.bf16.msra.mxu0 0
  %3067 = vmatpush.bf16.msra.mxu0 0
  %3068 = vmatpush.bf16.msra.mxu0 0
  %3069 = vmatpush.bf16.msra.mxu0 0
  %3070 = vmatpush.bf16.msra.mxu0 %v3046
  %3071 = vmatpush.bf16.msra.mxu0 %v3045
  %3072 = vmatmul.bf16.gmra.mxu0 %v3050
  %v3073 = vpop.f32.mrf.mxu0
  %v3074 = vadd.f32 0.0, %v3073
  %v3075 = vpop.f32.mrf.mxu0
  %v3076 = vadd.f32 0.0, %v3075
  %3077 = vmatmul.bf16.gmra.mxu0 %v3053
  %v3078 = vpop.f32.mrf.mxu0
  %v3079 = vadd.f32 0.0, %v3078
  %v3080 = vpop.f32.mrf.mxu0
  %v3081 = vadd.f32 0.0, %v3080
  %3082 = vmatmul.bf16.gmra.mxu0 %v3056
  %v3083 = vpop.f32.mrf.mxu0
  %v3084 = vadd.f32 0.0, %v3083
  %v3085 = vpop.f32.mrf.mxu0
  %v3086 = vadd.f32 0.0, %v3085
  %3087 = vmatmul.bf16.gmra.mxu0 %v3059
  %v3088 = vpop.f32.mrf.mxu0
  %v3089 = vadd.f32 0.0, %v3088
  %v3090 = vpop.f32.mrf.mxu0
  %v3091 = vadd.f32 0.0, %v3090
  %3092 = vmatmul.bf16.gmra.mxu0 %v3062
  %v3093 = vpop.f32.mrf.mxu0
  %v3094 = vadd.f32 0.0, %v3093
  %v3095 = vpop.f32.mrf.mxu0
  %3096 = vdwg.mxu0
  %v3097 = vadd.f32 %v2886, %v3074
  %v3098 = vadd.f32 %v2887, %v3076
  %v3099 = vadd.f32 %v2888, %v3079
  %v3100 = vadd.f32 %v2889, %v3081
  %v3101 = vadd.f32 %v2890, %v3084
  %v3102 = vadd.f32 %v2891, %v3086
  %v3103 = vadd.f32 %v2892, %v3089
  %v3104 = vadd.f32 %v2893, %v3091
  %v3105 = vadd.f32 %v2894, %v3094
  %s3106 = scalar_lea.vmem %s0, 1008
  %v3107 = vld [vmem:[%s3106] sm:$0xff]
  %v3108 = vld [vmem:[%s3106 + $0x8] sm:$0xff]
  %v3109 = vld [vmem:[%s3106 + $0x10] sm:$0xff]
  %v3110 = vld [vmem:[%s3106 + $0x18] sm:$0xff]
  %v3111 = vld [vmem:[%s3106 + $0x20] sm:$0xff]
  %v3112 = vld [vmem:[%s3106 + $0x28] sm:$0xff]
  %v3113 = vld [vmem:[%s3106 + $0x30] sm:$0xff]
  %v3114 = vld [vmem:[%s3106 + $0x38] sm:$0xff]
  %v3115 = vld [vmem:[%s3106 + $0x40] sm:$0xff]
  %v3125 = vunpack.c.l.b16 %v3107
  %v3126 = vunpack.c.h.b16 %v3107
  %v3127 = vunpack.c.l.b16 %v3108
  %v3128 = vunpack.c.h.b16 %v3108
  %v3129 = vunpack.c.l.b16 %v3109
  %v3130 = vunpack.c.h.b16 %v3109
  %v3131 = vunpack.c.l.b16 %v3110
  %v3132 = vunpack.c.h.b16 %v3110
  %v3133 = vunpack.c.l.b16 %v3111
  %v3134 = vunpack.c.h.b16 %v3111
  %v3135 = vunpack.c.l.b16 %v3112
  %v3136 = vunpack.c.h.b16 %v3112
  %v3137 = vunpack.c.l.b16 %v3113
  %v3138 = vunpack.c.h.b16 %v3113
  %v3139 = vunpack.c.l.b16 %v3114
  %v3140 = vunpack.c.h.b16 %v3114
  %v3141 = vunpack.c.l.b16 %v3115
  %v3142 = vunpack.c.h.b16 %v3115
  %v3143 = vpack.c.b16 %v3127, %v3125
  %v3144 = vpack.c.b16 %v3128, %v3126
  %v3145 = vpack.c.b16 %v3131, %v3129
  %v3146 = vpack.c.b16 %v3132, %v3130
  %v3147 = vpack.c.b16 %v3135, %v3133
  %v3148 = vpack.c.b16 %v3136, %v3134
  %v3149 = vpack.c.b16 %v3139, %v3137
  %v3150 = vpack.c.b16 %v3140, %v3138
  %v3151 = vpack.c.b16 %v3141, %v3141
  %v3152 = vpack.c.b16 %v3142, %v3142
  %3163 = vmatpush.bf16.msra.mxu0 %v202
  %3164 = vmatpush.bf16.msra.mxu0 %v201
  %3165 = vmatpush.bf16.msra.mxu0 %v200
  %3166 = vmatpush.bf16.msra.mxu0 %v199
  %3167 = vmatpush.bf16.msra.mxu0 %v198
  %3168 = vmatpush.bf16.msra.mxu0 %v197
  %3169 = vmatpush.bf16.msra.mxu0 %v196
  %3170 = vmatpush.bf16.msra.mxu0 %v195
  %3171 = vmatmul.bf16.gmra.mxu0 %v3143
  %v3172 = vpop.f32.mrf.mxu0
  %v3173 = vadd.f32 %v82, %v3172
  %v3174 = vpop.f32.mrf.mxu0
  %v3175 = vadd.f32 %v82, %v3174
  %3176 = vmatmul.bf16.gmra.mxu0 %v3145
  %v3177 = vpop.f32.mrf.mxu0
  %v3178 = vadd.f32 %v82, %v3177
  %v3179 = vpop.f32.mrf.mxu0
  %v3180 = vadd.f32 %v82, %v3179
  %3181 = vmatmul.bf16.gmra.mxu0 %v3147
  %v3182 = vpop.f32.mrf.mxu0
  %v3183 = vadd.f32 %v82, %v3182
  %v3184 = vpop.f32.mrf.mxu0
  %v3185 = vadd.f32 %v82, %v3184
  %3186 = vmatmul.bf16.gmra.mxu0 %v3149
  %v3187 = vpop.f32.mrf.mxu0
  %v3188 = vadd.f32 %v82, %v3187
  %v3189 = vpop.f32.mrf.mxu0
  %v3190 = vadd.f32 %v82, %v3189
  %3191 = vmatmul.bf16.gmra.mxu0 %v3151
  %v3192 = vpop.f32.mrf.mxu0
  %v3193 = vadd.f32 %v82, %v3192
  %v3194 = vpop.f32.mrf.mxu0
  %3195 = vdwg.mxu0
  %3196 = vmatpush.bf16.msra.mxu0 %v210
  %3197 = vmatpush.bf16.msra.mxu0 %v209
  %3198 = vmatpush.bf16.msra.mxu0 %v208
  %3199 = vmatpush.bf16.msra.mxu0 %v207
  %3200 = vmatpush.bf16.msra.mxu0 %v206
  %3201 = vmatpush.bf16.msra.mxu0 %v205
  %3202 = vmatpush.bf16.msra.mxu0 %v204
  %3203 = vmatpush.bf16.msra.mxu0 %v203
  %3204 = vmatmul.bf16.gmra.mxu0 %v3144
  %v3205 = vpop.f32.mrf.mxu0
  %v3206 = vadd.f32 %v3173, %v3205
  %v3207 = vpop.f32.mrf.mxu0
  %v3208 = vadd.f32 %v3175, %v3207
  %3209 = vmatmul.bf16.gmra.mxu0 %v3146
  %v3210 = vpop.f32.mrf.mxu0
  %v3211 = vadd.f32 %v3178, %v3210
  %v3212 = vpop.f32.mrf.mxu0
  %v3213 = vadd.f32 %v3180, %v3212
  %3214 = vmatmul.bf16.gmra.mxu0 %v3148
  %v3215 = vpop.f32.mrf.mxu0
  %v3216 = vadd.f32 %v3183, %v3215
  %v3217 = vpop.f32.mrf.mxu0
  %v3218 = vadd.f32 %v3185, %v3217
  %3219 = vmatmul.bf16.gmra.mxu0 %v3150
  %v3220 = vpop.f32.mrf.mxu0
  %v3221 = vadd.f32 %v3188, %v3220
  %v3222 = vpop.f32.mrf.mxu0
  %v3223 = vadd.f32 %v3190, %v3222
  %3224 = vmatmul.bf16.gmra.mxu0 %v3152
  %v3225 = vpop.f32.mrf.mxu0
  %v3226 = vadd.f32 %v3193, %v3225
  %v3227 = vpop.f32.mrf.mxu0
  %3228 = vdwg.mxu0
  %v3229 = vmax.f32 %v3206, 0.0
  %v3230 = vmax.f32 %v3208, 0.0
  %v3231 = vmax.f32 %v3211, 0.0
  %v3232 = vmax.f32 %v3213, 0.0
  %v3233 = vmax.f32 %v3216, 0.0
  %v3234 = vmax.f32 %v3218, 0.0
  %v3235 = vmax.f32 %v3221, 0.0
  %v3236 = vmax.f32 %v3223, 0.0
  %v3237 = vmax.f32 %v3226, 0.0
  %v3238 = vpack.c.bf16 %v3230, %v3229
  %v3239 = vpack.c.bf16 %v3232, %v3231
  %v3240 = vpack.c.bf16 %v3234, %v3233
  %v3241 = vpack.c.bf16 %v3236, %v3235
  %v3242 = vpack.c.bf16 %v3237, %v3237
  %s3243 = scalar_lea.vmem %s3, 224
  %v3244 = vld [vmem:[%s3243] sm:$0xf]
  %v3245 = vld [vmem:[%s3243 + $0x4] sm:$0xf]
  %v3246 = vld [vmem:[%s3243 + $0x8] sm:$0xf]
  %v3247 = vld [vmem:[%s3243 + $0xc] sm:$0xf]
  %v3252 = vunpack.c.l.b16 %v3244
  %v3253 = vunpack.c.l.b16 %v3245
  %v3254 = vunpack.c.l.b16 %v3246
  %v3255 = vunpack.c.l.b16 %v3247
  %v3256 = vpack.c.b16 %v3253, %v3252
  %v3257 = vpack.c.b16 %v3255, %v3254
  %v3261 = vsel %vm465, %v3238, 0
  %v3264 = vsel %vm465, %v3239, 0
  %v3267 = vsel %vm465, %v3240, 0
  %v3270 = vsel %vm465, %v3241, 0
  %v3273 = vsel %vm465, %v3242, 0
  %3275 = vmatpush.bf16.msra.mxu0 0
  %3276 = vmatpush.bf16.msra.mxu0 0
  %3277 = vmatpush.bf16.msra.mxu0 0
  %3278 = vmatpush.bf16.msra.mxu0 0
  %3279 = vmatpush.bf16.msra.mxu0 0
  %3280 = vmatpush.bf16.msra.mxu0 0
  %3281 = vmatpush.bf16.msra.mxu0 %v3257
  %3282 = vmatpush.bf16.msra.mxu0 %v3256
  %3283 = vmatmul.bf16.gmra.mxu0 %v3261
  %v3284 = vpop.f32.mrf.mxu0
  %v3285 = vadd.f32 0.0, %v3284
  %v3286 = vpop.f32.mrf.mxu0
  %v3287 = vadd.f32 0.0, %v3286
  %3288 = vmatmul.bf16.gmra.mxu0 %v3264
  %v3289 = vpop.f32.mrf.mxu0
  %v3290 = vadd.f32 0.0, %v3289
  %v3291 = vpop.f32.mrf.mxu0
  %v3292 = vadd.f32 0.0, %v3291
  %3293 = vmatmul.bf16.gmra.mxu0 %v3267
  %v3294 = vpop.f32.mrf.mxu0
  %v3295 = vadd.f32 0.0, %v3294
  %v3296 = vpop.f32.mrf.mxu0
  %v3297 = vadd.f32 0.0, %v3296
  %3298 = vmatmul.bf16.gmra.mxu0 %v3270
  %v3299 = vpop.f32.mrf.mxu0
  %v3300 = vadd.f32 0.0, %v3299
  %v3301 = vpop.f32.mrf.mxu0
  %v3302 = vadd.f32 0.0, %v3301
  %3303 = vmatmul.bf16.gmra.mxu0 %v3273
  %v3304 = vpop.f32.mrf.mxu0
  %v3305 = vadd.f32 0.0, %v3304
  %v3306 = vpop.f32.mrf.mxu0
  %3307 = vdwg.mxu0
  %v3308 = vadd.f32 %v3097, %v3285
  %v3309 = vadd.f32 %v3098, %v3287
  %v3310 = vadd.f32 %v3099, %v3290
  %v3311 = vadd.f32 %v3100, %v3292
  %v3312 = vadd.f32 %v3101, %v3295
  %v3313 = vadd.f32 %v3102, %v3297
  %v3314 = vadd.f32 %v3103, %v3300
  %v3315 = vadd.f32 %v3104, %v3302
  %v3316 = vadd.f32 %v3105, %v3305
  %s3317 = scalar_lea.vmem %s0, 1080
  %v3318 = vld [vmem:[%s3317] sm:$0xff]
  %v3319 = vld [vmem:[%s3317 + $0x8] sm:$0xff]
  %v3320 = vld [vmem:[%s3317 + $0x10] sm:$0xff]
  %v3321 = vld [vmem:[%s3317 + $0x18] sm:$0xff]
  %v3322 = vld [vmem:[%s3317 + $0x20] sm:$0xff]
  %v3323 = vld [vmem:[%s3317 + $0x28] sm:$0xff]
  %v3324 = vld [vmem:[%s3317 + $0x30] sm:$0xff]
  %v3325 = vld [vmem:[%s3317 + $0x38] sm:$0xff]
  %v3326 = vld [vmem:[%s3317 + $0x40] sm:$0xff]
  %v3336 = vunpack.c.l.b16 %v3318
  %v3337 = vunpack.c.h.b16 %v3318
  %v3338 = vunpack.c.l.b16 %v3319
  %v3339 = vunpack.c.h.b16 %v3319
  %v3340 = vunpack.c.l.b16 %v3320
  %v3341 = vunpack.c.h.b16 %v3320
  %v3342 = vunpack.c.l.b16 %v3321
  %v3343 = vunpack.c.h.b16 %v3321
  %v3344 = vunpack.c.l.b16 %v3322
  %v3345 = vunpack.c.h.b16 %v3322
  %v3346 = vunpack.c.l.b16 %v3323
  %v3347 = vunpack.c.h.b16 %v3323
  %v3348 = vunpack.c.l.b16 %v3324
  %v3349 = vunpack.c.h.b16 %v3324
  %v3350 = vunpack.c.l.b16 %v3325
  %v3351 = vunpack.c.h.b16 %v3325
  %v3352 = vunpack.c.l.b16 %v3326
  %v3353 = vunpack.c.h.b16 %v3326
  %v3354 = vpack.c.b16 %v3338, %v3336
  %v3355 = vpack.c.b16 %v3339, %v3337
  %v3356 = vpack.c.b16 %v3342, %v3340
  %v3357 = vpack.c.b16 %v3343, %v3341
  %v3358 = vpack.c.b16 %v3346, %v3344
  %v3359 = vpack.c.b16 %v3347, %v3345
  %v3360 = vpack.c.b16 %v3350, %v3348
  %v3361 = vpack.c.b16 %v3351, %v3349
  %v3362 = vpack.c.b16 %v3352, %v3352
  %v3363 = vpack.c.b16 %v3353, %v3353
  %3374 = vmatpush.bf16.msra.mxu0 %v202
  %3375 = vmatpush.bf16.msra.mxu0 %v201
  %3376 = vmatpush.bf16.msra.mxu0 %v200
  %3377 = vmatpush.bf16.msra.mxu0 %v199
  %3378 = vmatpush.bf16.msra.mxu0 %v198
  %3379 = vmatpush.bf16.msra.mxu0 %v197
  %3380 = vmatpush.bf16.msra.mxu0 %v196
  %3381 = vmatpush.bf16.msra.mxu0 %v195
  %3382 = vmatmul.bf16.gmra.mxu0 %v3354
  %v3383 = vpop.f32.mrf.mxu0
  %v3384 = vadd.f32 %v82, %v3383
  %v3385 = vpop.f32.mrf.mxu0
  %v3386 = vadd.f32 %v82, %v3385
  %3387 = vmatmul.bf16.gmra.mxu0 %v3356
  %v3388 = vpop.f32.mrf.mxu0
  %v3389 = vadd.f32 %v82, %v3388
  %v3390 = vpop.f32.mrf.mxu0
  %v3391 = vadd.f32 %v82, %v3390
  %3392 = vmatmul.bf16.gmra.mxu0 %v3358
  %v3393 = vpop.f32.mrf.mxu0
  %v3394 = vadd.f32 %v82, %v3393
  %v3395 = vpop.f32.mrf.mxu0
  %v3396 = vadd.f32 %v82, %v3395
  %3397 = vmatmul.bf16.gmra.mxu0 %v3360
  %v3398 = vpop.f32.mrf.mxu0
  %v3399 = vadd.f32 %v82, %v3398
  %v3400 = vpop.f32.mrf.mxu0
  %v3401 = vadd.f32 %v82, %v3400
  %3402 = vmatmul.bf16.gmra.mxu0 %v3362
  %v3403 = vpop.f32.mrf.mxu0
  %v3404 = vadd.f32 %v82, %v3403
  %v3405 = vpop.f32.mrf.mxu0
  %3406 = vdwg.mxu0
  %3407 = vmatpush.bf16.msra.mxu0 %v210
  %3408 = vmatpush.bf16.msra.mxu0 %v209
  %3409 = vmatpush.bf16.msra.mxu0 %v208
  %3410 = vmatpush.bf16.msra.mxu0 %v207
  %3411 = vmatpush.bf16.msra.mxu0 %v206
  %3412 = vmatpush.bf16.msra.mxu0 %v205
  %3413 = vmatpush.bf16.msra.mxu0 %v204
  %3414 = vmatpush.bf16.msra.mxu0 %v203
  %3415 = vmatmul.bf16.gmra.mxu0 %v3355
  %v3416 = vpop.f32.mrf.mxu0
  %v3417 = vadd.f32 %v3384, %v3416
  %v3418 = vpop.f32.mrf.mxu0
  %v3419 = vadd.f32 %v3386, %v3418
  %3420 = vmatmul.bf16.gmra.mxu0 %v3357
  %v3421 = vpop.f32.mrf.mxu0
  %v3422 = vadd.f32 %v3389, %v3421
  %v3423 = vpop.f32.mrf.mxu0
  %v3424 = vadd.f32 %v3391, %v3423
  %3425 = vmatmul.bf16.gmra.mxu0 %v3359
  %v3426 = vpop.f32.mrf.mxu0
  %v3427 = vadd.f32 %v3394, %v3426
  %v3428 = vpop.f32.mrf.mxu0
  %v3429 = vadd.f32 %v3396, %v3428
  %3430 = vmatmul.bf16.gmra.mxu0 %v3361
  %v3431 = vpop.f32.mrf.mxu0
  %v3432 = vadd.f32 %v3399, %v3431
  %v3433 = vpop.f32.mrf.mxu0
  %v3434 = vadd.f32 %v3401, %v3433
  %3435 = vmatmul.bf16.gmra.mxu0 %v3363
  %v3436 = vpop.f32.mrf.mxu0
  %v3437 = vadd.f32 %v3404, %v3436
  %v3438 = vpop.f32.mrf.mxu0
  %3439 = vdwg.mxu0
  %v3440 = vmax.f32 %v3417, 0.0
  %v3441 = vmax.f32 %v3419, 0.0
  %v3442 = vmax.f32 %v3422, 0.0
  %v3443 = vmax.f32 %v3424, 0.0
  %v3444 = vmax.f32 %v3427, 0.0
  %v3445 = vmax.f32 %v3429, 0.0
  %v3446 = vmax.f32 %v3432, 0.0
  %v3447 = vmax.f32 %v3434, 0.0
  %v3448 = vmax.f32 %v3437, 0.0
  %v3449 = vpack.c.bf16 %v3441, %v3440
  %v3450 = vpack.c.bf16 %v3443, %v3442
  %v3451 = vpack.c.bf16 %v3445, %v3444
  %v3452 = vpack.c.bf16 %v3447, %v3446
  %v3453 = vpack.c.bf16 %v3448, %v3448
  %s3454 = scalar_lea.vmem %s3, 240
  %v3455 = vld [vmem:[%s3454] sm:$0xf]
  %v3456 = vld [vmem:[%s3454 + $0x4] sm:$0xf]
  %v3457 = vld [vmem:[%s3454 + $0x8] sm:$0xf]
  %v3458 = vld [vmem:[%s3454 + $0xc] sm:$0xf]
  %v3463 = vunpack.c.l.b16 %v3455
  %v3464 = vunpack.c.l.b16 %v3456
  %v3465 = vunpack.c.l.b16 %v3457
  %v3466 = vunpack.c.l.b16 %v3458
  %v3467 = vpack.c.b16 %v3464, %v3463
  %v3468 = vpack.c.b16 %v3466, %v3465
  %v3472 = vsel %vm465, %v3449, 0
  %v3475 = vsel %vm465, %v3450, 0
  %v3478 = vsel %vm465, %v3451, 0
  %v3481 = vsel %vm465, %v3452, 0
  %v3484 = vsel %vm465, %v3453, 0
  %3486 = vmatpush.bf16.msra.mxu0 0
  %3487 = vmatpush.bf16.msra.mxu0 0
  %3488 = vmatpush.bf16.msra.mxu0 0
  %3489 = vmatpush.bf16.msra.mxu0 0
  %3490 = vmatpush.bf16.msra.mxu0 0
  %3491 = vmatpush.bf16.msra.mxu0 0
  %3492 = vmatpush.bf16.msra.mxu0 %v3468
  %3493 = vmatpush.bf16.msra.mxu0 %v3467
  %3494 = vmatmul.bf16.gmra.mxu0 %v3472
  %v3495 = vpop.f32.mrf.mxu0
  %v3496 = vadd.f32 0.0, %v3495
  %v3497 = vpop.f32.mrf.mxu0
  %v3498 = vadd.f32 0.0, %v3497
  %3499 = vmatmul.bf16.gmra.mxu0 %v3475
  %v3500 = vpop.f32.mrf.mxu0
  %v3501 = vadd.f32 0.0, %v3500
  %v3502 = vpop.f32.mrf.mxu0
  %v3503 = vadd.f32 0.0, %v3502
  %3504 = vmatmul.bf16.gmra.mxu0 %v3478
  %v3505 = vpop.f32.mrf.mxu0
  %v3506 = vadd.f32 0.0, %v3505
  %v3507 = vpop.f32.mrf.mxu0
  %v3508 = vadd.f32 0.0, %v3507
  %3509 = vmatmul.bf16.gmra.mxu0 %v3481
  %v3510 = vpop.f32.mrf.mxu0
  %v3511 = vadd.f32 0.0, %v3510
  %v3512 = vpop.f32.mrf.mxu0
  %v3513 = vadd.f32 0.0, %v3512
  %3514 = vmatmul.bf16.gmra.mxu0 %v3484
  %v3515 = vpop.f32.mrf.mxu0
  %v3516 = vadd.f32 0.0, %v3515
  %v3517 = vpop.f32.mrf.mxu0
  %3518 = vdwg.mxu0
  %v3519 = vadd.f32 %v3308, %v3496
  %v3520 = vadd.f32 %v3309, %v3498
  %v3521 = vadd.f32 %v3310, %v3501
  %v3522 = vadd.f32 %v3311, %v3503
  %v3523 = vadd.f32 %v3312, %v3506
  %v3524 = vadd.f32 %v3313, %v3508
  %v3525 = vadd.f32 %v3314, %v3511
  %v3526 = vadd.f32 %v3315, %v3513
  %v3527 = vadd.f32 %v3316, %v3516
  %v3528 = vld [vmem:[%s4] sm:$0x1]
  %v3530 = vperm.slane %v3528, 0
  %v3532 = vadd.f32 %v3519, %v3530
  %v3533 = vadd.f32 %v3520, %v3530
  %v3534 = vadd.f32 %v3521, %v3530
  %v3535 = vadd.f32 %v3522, %v3530
  %v3536 = vadd.f32 %v3523, %v3530
  %v3537 = vadd.f32 %v3524, %v3530
  %v3538 = vadd.f32 %v3525, %v3530
  %v3539 = vadd.f32 %v3526, %v3530
  %v3540 = vadd.f32 %v3527, %v3530
  %v3541 = vmax.f32 %v3532, 0.0
  %v3542 = vmax.f32 %v3533, 0.0
  %v3543 = vmax.f32 %v3534, 0.0
  %v3544 = vmax.f32 %v3535, 0.0
  %v3545 = vmax.f32 %v3536, 0.0
  %v3546 = vmax.f32 %v3537, 0.0
  %v3547 = vmax.f32 %v3538, 0.0
  %v3548 = vmax.f32 %v3539, 0.0
  %v3549 = vmax.f32 %v3540, 0.0
  %vm3550 = vcmask 523264
  %3551 = vst.msk [vmem:[#allocation2] sm:$0xff] %vm3550, %v3541
  %3552 = vst.msk [vmem:[#allocation2 + $0x8] sm:$0xff] %vm3550, %v3542
  %3553 = vst.msk [vmem:[#allocation2 + $0x10] sm:$0xff] %vm3550, %v3543
  %3554 = vst.msk [vmem:[#allocation2 + $0x18] sm:$0xff] %vm3550, %v3544
  %3555 = vst.msk [vmem:[#allocation2 + $0x20] sm:$0xff] %vm3550, %v3545
  %3556 = vst.msk [vmem:[#allocation2 + $0x28] sm:$0xff] %vm3550, %v3546
  %3557 = vst.msk [vmem:[#allocation2 + $0x30] sm:$0xff] %vm3550, %v3547
  %3558 = vst.msk [vmem:[#allocation2 + $0x38] sm:$0xff] %vm3550, %v3548
  %3559 = vst.msk [vmem:[#allocation2 + $0x40] sm:$0xff] %vm3550, %v3549
  %v3560 = vld [vmem:[#allocation2] sm:$0xff]
  %v3561 = vpack.c.bf16 %v3560, %v3560
  %v3562 = vld [vmem:[%s5] sm:$0xf]
  %v3563 = vld [vmem:[%s5 + $0x4] sm:$0xf]
  %v3564 = vld [vmem:[%s5 + $0x8] sm:$0xf]
  %v3565 = vld [vmem:[%s5 + $0xc] sm:$0xf]
  %v3566 = vld [vmem:[%s5 + $0x10] sm:$0xf]
  %v3567 = vld [vmem:[%s5 + $0x14] sm:$0xf]
  %v3568 = vld [vmem:[%s5 + $0x18] sm:$0xf]
  %v3569 = vld [vmem:[%s5 + $0x1c] sm:$0xf]
  %v3570 = vld [vmem:[#allocation2 + $0x8] sm:$0xff]
  %v3571 = vpack.c.bf16 %v3570, %v3570
  %s3572 = scalar_lea.vmem %s5, 32
  %v3573 = vld [vmem:[%s3572] sm:$0xf]
  %v3574 = vld [vmem:[%s3572 + $0x4] sm:$0xf]
  %v3575 = vld [vmem:[%s3572 + $0x8] sm:$0xf]
  %v3576 = vld [vmem:[%s3572 + $0xc] sm:$0xf]
  %v3577 = vld [vmem:[%s3572 + $0x10] sm:$0xf]
  %v3578 = vld [vmem:[%s3572 + $0x14] sm:$0xf]
  %v3579 = vld [vmem:[%s3572 + $0x18] sm:$0xf]
  %v3580 = vld [vmem:[%s3572 + $0x1c] sm:$0xf]
  %v3589 = vunpack.c.l.b16 %v3573
  %v3590 = vunpack.c.l.b16 %v3574
  %v3591 = vunpack.c.l.b16 %v3575
  %v3592 = vunpack.c.l.b16 %v3576
  %v3593 = vunpack.c.l.b16 %v3577
  %v3594 = vunpack.c.l.b16 %v3578
  %v3595 = vunpack.c.l.b16 %v3579
  %v3596 = vunpack.c.l.b16 %v3580
  %v3597 = vpack.c.b16 %v3590, %v3589
  %v3598 = vpack.c.b16 %v3592, %v3591
  %v3599 = vpack.c.b16 %v3594, %v3593
  %v3600 = vpack.c.b16 %v3596, %v3595
  %v3606 = vsel %vm3550, %v3571, 0
  %3608 = vmatpush.bf16.msra.mxu0 0
  %3609 = vmatpush.bf16.msra.mxu0 0
  %3610 = vmatpush.bf16.msra.mxu0 0
  %3611 = vmatpush.bf16.msra.mxu0 0
  %3612 = vmatpush.bf16.msra.mxu0 %v3600
  %3613 = vmatpush.bf16.msra.mxu0 %v3599
  %3614 = vmatpush.bf16.msra.mxu0 %v3598
  %3615 = vmatpush.bf16.msra.mxu0 %v3597
  %3616 = vmatmul.bf16.gmra.mxu0 %v3606
  %v3617 = vpop.f32.mrf.mxu0
  %v3618 = vadd.f32 0.0, %v3617
  %v3619 = vpop.f32.mrf.mxu0
  %3620 = vdwg.mxu0
  %v3629 = vunpack.c.l.b16 %v3562
  %v3630 = vunpack.c.l.b16 %v3563
  %v3631 = vunpack.c.l.b16 %v3564
  %v3632 = vunpack.c.l.b16 %v3565
  %v3633 = vunpack.c.l.b16 %v3566
  %v3634 = vunpack.c.l.b16 %v3567
  %v3635 = vunpack.c.l.b16 %v3568
  %v3636 = vunpack.c.l.b16 %v3569
  %v3637 = vpack.c.b16 %v3630, %v3629
  %v3638 = vpack.c.b16 %v3632, %v3631
  %v3639 = vpack.c.b16 %v3634, %v3633
  %v3640 = vpack.c.b16 %v3636, %v3635
  %v3646 = vsel %vm3550, %v3561, 0
  %3648 = vmatpush.bf16.msra.mxu0 0
  %3649 = vmatpush.bf16.msra.mxu0 0
  %3650 = vmatpush.bf16.msra.mxu0 0
  %3651 = vmatpush.bf16.msra.mxu0 0
  %3652 = vmatpush.bf16.msra.mxu0 %v3640
  %3653 = vmatpush.bf16.msra.mxu0 %v3639
  %3654 = vmatpush.bf16.msra.mxu0 %v3638
  %3655 = vmatpush.bf16.msra.mxu0 %v3637
  %3656 = vmatmul.bf16.gmra.mxu0 %v3646
  %v3657 = vpop.f32.mrf.mxu0
  %v3658 = vadd.f32 %v3618, %v3657
  %v3659 = vpop.f32.mrf.mxu0
  %3660 = vdwg.mxu0
  %v3661 = vld [vmem:[#allocation2 + $0x10] sm:$0xff]
  %v3662 = vpack.c.bf16 %v3661, %v3661
  %s3663 = scalar_lea.vmem %s5, 64
  %v3664 = vld [vmem:[%s3663] sm:$0xf]
  %v3665 = vld [vmem:[%s3663 + $0x4] sm:$0xf]
  %v3666 = vld [vmem:[%s3663 + $0x8] sm:$0xf]
  %v3667 = vld [vmem:[%s3663 + $0xc] sm:$0xf]
  %v3668 = vld [vmem:[%s3663 + $0x10] sm:$0xf]
  %v3669 = vld [vmem:[%s3663 + $0x14] sm:$0xf]
  %v3670 = vld [vmem:[%s3663 + $0x18] sm:$0xf]
  %v3671 = vld [vmem:[%s3663 + $0x1c] sm:$0xf]
  %v3680 = vunpack.c.l.b16 %v3664
  %v3681 = vunpack.c.l.b16 %v3665
  %v3682 = vunpack.c.l.b16 %v3666
  %v3683 = vunpack.c.l.b16 %v3667
  %v3684 = vunpack.c.l.b16 %v3668
  %v3685 = vunpack.c.l.b16 %v3669
  %v3686 = vunpack.c.l.b16 %v3670
  %v3687 = vunpack.c.l.b16 %v3671
  %v3688 = vpack.c.b16 %v3681, %v3680
  %v3689 = vpack.c.b16 %v3683, %v3682
  %v3690 = vpack.c.b16 %v3685, %v3684
  %v3691 = vpack.c.b16 %v3687, %v3686
  %v3697 = vsel %vm3550, %v3662, 0
  %3699 = vmatpush.bf16.msra.mxu0 0
  %3700 = vmatpush.bf16.msra.mxu0 0
  %3701 = vmatpush.bf16.msra.mxu0 0
  %3702 = vmatpush.bf16.msra.mxu0 0
  %3703 = vmatpush.bf16.msra.mxu0 %v3691
  %3704 = vmatpush.bf16.msra.mxu0 %v3690
  %3705 = vmatpush.bf16.msra.mxu0 %v3689
  %3706 = vmatpush.bf16.msra.mxu0 %v3688
  %3707 = vmatmul.bf16.gmra.mxu0 %v3697
  %v3708 = vpop.f32.mrf.mxu0
  %v3709 = vadd.f32 0.0, %v3708
  %v3710 = vpop.f32.mrf.mxu0
  %3711 = vdwg.mxu0
  %v3712 = vadd.f32 %v3658, %v3709
  %v3713 = vld [vmem:[#allocation2 + $0x18] sm:$0xff]
  %v3714 = vpack.c.bf16 %v3713, %v3713
  %s3715 = scalar_lea.vmem %s5, 96
  %v3716 = vld [vmem:[%s3715] sm:$0xf]
  %v3717 = vld [vmem:[%s3715 + $0x4] sm:$0xf]
  %v3718 = vld [vmem:[%s3715 + $0x8] sm:$0xf]
  %v3719 = vld [vmem:[%s3715 + $0xc] sm:$0xf]
  %v3720 = vld [vmem:[%s3715 + $0x10] sm:$0xf]
  %v3721 = vld [vmem:[%s3715 + $0x14] sm:$0xf]
  %v3722 = vld [vmem:[%s3715 + $0x18] sm:$0xf]
  %v3723 = vld [vmem:[%s3715 + $0x1c] sm:$0xf]
  %v3732 = vunpack.c.l.b16 %v3716
  %v3733 = vunpack.c.l.b16 %v3717
  %v3734 = vunpack.c.l.b16 %v3718
  %v3735 = vunpack.c.l.b16 %v3719
  %v3736 = vunpack.c.l.b16 %v3720
  %v3737 = vunpack.c.l.b16 %v3721
  %v3738 = vunpack.c.l.b16 %v3722
  %v3739 = vunpack.c.l.b16 %v3723
  %v3740 = vpack.c.b16 %v3733, %v3732
  %v3741 = vpack.c.b16 %v3735, %v3734
  %v3742 = vpack.c.b16 %v3737, %v3736
  %v3743 = vpack.c.b16 %v3739, %v3738
  %v3749 = vsel %vm3550, %v3714, 0
  %3751 = vmatpush.bf16.msra.mxu0 0
  %3752 = vmatpush.bf16.msra.mxu0 0
  %3753 = vmatpush.bf16.msra.mxu0 0
  %3754 = vmatpush.bf16.msra.mxu0 0
  %3755 = vmatpush.bf16.msra.mxu0 %v3743
  %3756 = vmatpush.bf16.msra.mxu0 %v3742
  %3757 = vmatpush.bf16.msra.mxu0 %v3741
  %3758 = vmatpush.bf16.msra.mxu0 %v3740
  %3759 = vmatmul.bf16.gmra.mxu0 %v3749
  %v3760 = vpop.f32.mrf.mxu0
  %v3761 = vadd.f32 0.0, %v3760
  %v3762 = vpop.f32.mrf.mxu0
  %3763 = vdwg.mxu0
  %v3764 = vadd.f32 %v3712, %v3761
  %v3765 = vld [vmem:[#allocation2 + $0x20] sm:$0xff]
  %v3766 = vpack.c.bf16 %v3765, %v3765
  %s3767 = scalar_lea.vmem %s5, 128
  %v3768 = vld [vmem:[%s3767] sm:$0xf]
  %v3769 = vld [vmem:[%s3767 + $0x4] sm:$0xf]
  %v3770 = vld [vmem:[%s3767 + $0x8] sm:$0xf]
  %v3771 = vld [vmem:[%s3767 + $0xc] sm:$0xf]
  %v3772 = vld [vmem:[%s3767 + $0x10] sm:$0xf]
  %v3773 = vld [vmem:[%s3767 + $0x14] sm:$0xf]
  %v3774 = vld [vmem:[%s3767 + $0x18] sm:$0xf]
  %v3775 = vld [vmem:[%s3767 + $0x1c] sm:$0xf]
  %v3784 = vunpack.c.l.b16 %v3768
  %v3785 = vunpack.c.l.b16 %v3769
  %v3786 = vunpack.c.l.b16 %v3770
  %v3787 = vunpack.c.l.b16 %v3771
  %v3788 = vunpack.c.l.b16 %v3772
  %v3789 = vunpack.c.l.b16 %v3773
  %v3790 = vunpack.c.l.b16 %v3774
  %v3791 = vunpack.c.l.b16 %v3775
  %v3792 = vpack.c.b16 %v3785, %v3784
  %v3793 = vpack.c.b16 %v3787, %v3786
  %v3794 = vpack.c.b16 %v3789, %v3788
  %v3795 = vpack.c.b16 %v3791, %v3790
  %v3801 = vsel %vm3550, %v3766, 0
  %3803 = vmatpush.bf16.msra.mxu0 0
  %3804 = vmatpush.bf16.msra.mxu0 0
  %3805 = vmatpush.bf16.msra.mxu0 0
  %3806 = vmatpush.bf16.msra.mxu0 0
  %3807 = vmatpush.bf16.msra.mxu0 %v3795
  %3808 = vmatpush.bf16.msra.mxu0 %v3794
  %3809 = vmatpush.bf16.msra.mxu0 %v3793
  %3810 = vmatpush.bf16.msra.mxu0 %v3792
  %3811 = vmatmul.bf16.gmra.mxu0 %v3801
  %v3812 = vpop.f32.mrf.mxu0
  %v3813 = vadd.f32 0.0, %v3812
  %v3814 = vpop.f32.mrf.mxu0
  %3815 = vdwg.mxu0
  %v3816 = vadd.f32 %v3764, %v3813
  %v3817 = vld [vmem:[#allocation2 + $0x28] sm:$0xff]
  %v3818 = vpack.c.bf16 %v3817, %v3817
  %s3819 = scalar_lea.vmem %s5, 160
  %v3820 = vld [vmem:[%s3819] sm:$0xf]
  %v3821 = vld [vmem:[%s3819 + $0x4] sm:$0xf]
  %v3822 = vld [vmem:[%s3819 + $0x8] sm:$0xf]
  %v3823 = vld [vmem:[%s3819 + $0xc] sm:$0xf]
  %v3824 = vld [vmem:[%s3819 + $0x10] sm:$0xf]
  %v3825 = vld [vmem:[%s3819 + $0x14] sm:$0xf]
  %v3826 = vld [vmem:[%s3819 + $0x18] sm:$0xf]
  %v3827 = vld [vmem:[%s3819 + $0x1c] sm:$0xf]
  %v3836 = vunpack.c.l.b16 %v3820
  %v3837 = vunpack.c.l.b16 %v3821
  %v3838 = vunpack.c.l.b16 %v3822
  %v3839 = vunpack.c.l.b16 %v3823
  %v3840 = vunpack.c.l.b16 %v3824
  %v3841 = vunpack.c.l.b16 %v3825
  %v3842 = vunpack.c.l.b16 %v3826
  %v3843 = vunpack.c.l.b16 %v3827
  %v3844 = vpack.c.b16 %v3837, %v3836
  %v3845 = vpack.c.b16 %v3839, %v3838
  %v3846 = vpack.c.b16 %v3841, %v3840
  %v3847 = vpack.c.b16 %v3843, %v3842
  %v3853 = vsel %vm3550, %v3818, 0
  %3855 = vmatpush.bf16.msra.mxu0 0
  %3856 = vmatpush.bf16.msra.mxu0 0
  %3857 = vmatpush.bf16.msra.mxu0 0
  %3858 = vmatpush.bf16.msra.mxu0 0
  %3859 = vmatpush.bf16.msra.mxu0 %v3847
  %3860 = vmatpush.bf16.msra.mxu0 %v3846
  %3861 = vmatpush.bf16.msra.mxu0 %v3845
  %3862 = vmatpush.bf16.msra.mxu0 %v3844
  %3863 = vmatmul.bf16.gmra.mxu0 %v3853
  %v3864 = vpop.f32.mrf.mxu0
  %v3865 = vadd.f32 0.0, %v3864
  %v3866 = vpop.f32.mrf.mxu0
  %3867 = vdwg.mxu0
  %v3868 = vadd.f32 %v3816, %v3865
  %v3869 = vld [vmem:[#allocation2 + $0x30] sm:$0xff]
  %v3870 = vpack.c.bf16 %v3869, %v3869
  %s3871 = scalar_lea.vmem %s5, 192
  %v3872 = vld [vmem:[%s3871] sm:$0xf]
  %v3873 = vld [vmem:[%s3871 + $0x4] sm:$0xf]
  %v3874 = vld [vmem:[%s3871 + $0x8] sm:$0xf]
  %v3875 = vld [vmem:[%s3871 + $0xc] sm:$0xf]
  %v3876 = vld [vmem:[%s3871 + $0x10] sm:$0xf]
  %v3877 = vld [vmem:[%s3871 + $0x14] sm:$0xf]
  %v3878 = vld [vmem:[%s3871 + $0x18] sm:$0xf]
  %v3879 = vld [vmem:[%s3871 + $0x1c] sm:$0xf]
  %v3888 = vunpack.c.l.b16 %v3872
  %v3889 = vunpack.c.l.b16 %v3873
  %v3890 = vunpack.c.l.b16 %v3874
  %v3891 = vunpack.c.l.b16 %v3875
  %v3892 = vunpack.c.l.b16 %v3876
  %v3893 = vunpack.c.l.b16 %v3877
  %v3894 = vunpack.c.l.b16 %v3878
  %v3895 = vunpack.c.l.b16 %v3879
  %v3896 = vpack.c.b16 %v3889, %v3888
  %v3897 = vpack.c.b16 %v3891, %v3890
  %v3898 = vpack.c.b16 %v3893, %v3892
  %v3899 = vpack.c.b16 %v3895, %v3894
  %v3905 = vsel %vm3550, %v3870, 0
  %3907 = vmatpush.bf16.msra.mxu0 0
  %3908 = vmatpush.bf16.msra.mxu0 0
  %3909 = vmatpush.bf16.msra.mxu0 0
  %3910 = vmatpush.bf16.msra.mxu0 0
  %3911 = vmatpush.bf16.msra.mxu0 %v3899
  %3912 = vmatpush.bf16.msra.mxu0 %v3898
  %3913 = vmatpush.bf16.msra.mxu0 %v3897
  %3914 = vmatpush.bf16.msra.mxu0 %v3896
  %3915 = vmatmul.bf16.gmra.mxu0 %v3905
  %v3916 = vpop.f32.mrf.mxu0
  %v3917 = vadd.f32 0.0, %v3916
  %v3918 = vpop.f32.mrf.mxu0
  %3919 = vdwg.mxu0
  %v3920 = vadd.f32 %v3868, %v3917
  %v3921 = vld [vmem:[#allocation2 + $0x38] sm:$0xff]
  %v3922 = vpack.c.bf16 %v3921, %v3921
  %s3923 = scalar_lea.vmem %s5, 224
  %v3924 = vld [vmem:[%s3923] sm:$0xf]
  %v3925 = vld [vmem:[%s3923 + $0x4] sm:$0xf]
  %v3926 = vld [vmem:[%s3923 + $0x8] sm:$0xf]
  %v3927 = vld [vmem:[%s3923 + $0xc] sm:$0xf]
  %v3928 = vld [vmem:[%s3923 + $0x10] sm:$0xf]
  %v3929 = vld [vmem:[%s3923 + $0x14] sm:$0xf]
  %v3930 = vld [vmem:[%s3923 + $0x18] sm:$0xf]
  %v3931 = vld [vmem:[%s3923 + $0x1c] sm:$0xf]
  %v3940 = vunpack.c.l.b16 %v3924
  %v3941 = vunpack.c.l.b16 %v3925
  %v3942 = vunpack.c.l.b16 %v3926
  %v3943 = vunpack.c.l.b16 %v3927
  %v3944 = vunpack.c.l.b16 %v3928
  %v3945 = vunpack.c.l.b16 %v3929
  %v3946 = vunpack.c.l.b16 %v3930
  %v3947 = vunpack.c.l.b16 %v3931
  %v3948 = vpack.c.b16 %v3941, %v3940
  %v3949 = vpack.c.b16 %v3943, %v3942
  %v3950 = vpack.c.b16 %v3945, %v3944
  %v3951 = vpack.c.b16 %v3947, %v3946
  %v3957 = vsel %vm3550, %v3922, 0
  %3959 = vmatpush.bf16.msra.mxu0 0
  %3960 = vmatpush.bf16.msra.mxu0 0
  %3961 = vmatpush.bf16.msra.mxu0 0
  %3962 = vmatpush.bf16.msra.mxu0 0
  %3963 = vmatpush.bf16.msra.mxu0 %v3951
  %3964 = vmatpush.bf16.msra.mxu0 %v3950
  %3965 = vmatpush.bf16.msra.mxu0 %v3949
  %3966 = vmatpush.bf16.msra.mxu0 %v3948
  %3967 = vmatmul.bf16.gmra.mxu0 %v3957
  %v3968 = vpop.f32.mrf.mxu0
  %v3969 = vadd.f32 0.0, %v3968
  %v3970 = vpop.f32.mrf.mxu0
  %3971 = vdwg.mxu0
  %v3972 = vadd.f32 %v3920, %v3969
  %v3973 = vld [vmem:[#allocation2 + $0x40] sm:$0xff]
  %v3974 = vpack.c.bf16 %v3973, %v3973
  %s3975 = scalar_lea.vmem %s5, 256
  %v3976 = vld [vmem:[%s3975] sm:$0xf]
  %v3977 = vld [vmem:[%s3975 + $0x4] sm:$0xf]
  %v3978 = vld [vmem:[%s3975 + $0x8] sm:$0xf]
  %v3979 = vld [vmem:[%s3975 + $0xc] sm:$0xf]
  %v3980 = vld [vmem:[%s3975 + $0x10] sm:$0xf]
  %v3981 = vld [vmem:[%s3975 + $0x14] sm:$0xf]
  %v3982 = vld [vmem:[%s3975 + $0x18] sm:$0xf]
  %v3983 = vld [vmem:[%s3975 + $0x1c] sm:$0xf]
  %v3992 = vunpack.c.l.b16 %v3976
  %v3993 = vunpack.c.l.b16 %v3977
  %v3994 = vunpack.c.l.b16 %v3978
  %v3995 = vunpack.c.l.b16 %v3979
  %v3996 = vunpack.c.l.b16 %v3980
  %v3997 = vunpack.c.l.b16 %v3981
  %v3998 = vunpack.c.l.b16 %v3982
  %v3999 = vunpack.c.l.b16 %v3983
  %v4000 = vpack.c.b16 %v3993, %v3992
  %v4001 = vpack.c.b16 %v3995, %v3994
  %v4002 = vpack.c.b16 %v3997, %v3996
  %v4003 = vpack.c.b16 %v3999, %v3998
  %v4009 = vsel %vm3550, %v3974, 0
  %4011 = vmatpush.bf16.msra.mxu0 0
  %4012 = vmatpush.bf16.msra.mxu0 0
  %4013 = vmatpush.bf16.msra.mxu0 0
  %4014 = vmatpush.bf16.msra.mxu0 0
  %4015 = vmatpush.bf16.msra.mxu0 %v4003
  %4016 = vmatpush.bf16.msra.mxu0 %v4002
  %4017 = vmatpush.bf16.msra.mxu0 %v4001
  %4018 = vmatpush.bf16.msra.mxu0 %v4000
  %4019 = vmatmul.bf16.gmra.mxu0 %v4009
  %v4020 = vpop.f32.mrf.mxu0
  %v4021 = vadd.f32 0.0, %v4020
  %v4022 = vpop.f32.mrf.mxu0
  %4023 = vdwg.mxu0
  %v4024 = vadd.f32 %v3972, %v4021
  %v4025 = vld [vmem:[%s6] sm:$0x1]
  %v4027 = vperm.slane %v4025, 0
  %v4029 = vadd.f32 %v4024, %v4027
  %v4030 = vmax.f32 %v4029, 0.0
  %v4031 = vpack.c.bf16 %v4030, %v4030
  %v4032 = vld [vmem:[%s7] sm:$0xff]
  %v4033 = vld [vmem:[%s7 + $0x8] sm:$0xff]
  %v4034 = vld [vmem:[%s7 + $0x10] sm:$0xff]
  %v4035 = vld [vmem:[%s7 + $0x18] sm:$0xff]
  %v4036 = vld [vmem:[%s7 + $0x20] sm:$0xff]
  %v4037 = vld [vmem:[%s7 + $0x28] sm:$0xff]
  %v4038 = vld [vmem:[%s7 + $0x30] sm:$0xff]
  %v4039 = vld [vmem:[%s7 + $0x38] sm:$0xff]
  %v4040 = vld [vmem:[%s7 + $0x40] sm:$0xff]
  %v4041 = vld [vmem:[%s7 + $0x48] sm:$0xff]
  %v4042 = vld [vmem:[%s7 + $0x50] sm:$0xff]
  %v4043 = vld [vmem:[%s7 + $0x58] sm:$0xff]
  %v4044 = vld [vmem:[%s7 + $0x60] sm:$0xff]
  %v4045 = vld [vmem:[%s7 + $0x68] sm:$0xff]
  %v4046 = vld [vmem:[%s7 + $0x70] sm:$0xff]
  %v4047 = vld [vmem:[%s7 + $0x78] sm:$0xff]
  %v4048 = vld [vmem:[%s7 + $0x80] sm:$0xff]
  %v4049 = vld [vmem:[%s7 + $0x88] sm:$0xff]
  %v4050 = vld [vmem:[%s7 + $0x90] sm:$0xff]
  %v4051 = vld [vmem:[%s7 + $0x98] sm:$0xff]
  %v4052 = vld [vmem:[%s7 + $0xa0] sm:$0xff]
  %v4053 = vld [vmem:[%s7 + $0xa8] sm:$0xff]
  %v4054 = vld [vmem:[%s7 + $0xb0] sm:$0xff]
  %v4055 = vld [vmem:[%s7 + $0xb8] sm:$0xff]
  %v4056 = vld [vmem:[%s7 + $0xc0] sm:$0xff]
  %v4057 = vld [vmem:[%s7 + $0xc8] sm:$0xff]
  %v4058 = vld [vmem:[%s7 + $0xd0] sm:$0xff]
  %v4059 = vld [vmem:[%s7 + $0xd8] sm:$0xff]
  %v4060 = vld [vmem:[%s7 + $0xe0] sm:$0xff]
  %v4061 = vld [vmem:[%s7 + $0xe8] sm:$0xff]
  %v4062 = vld [vmem:[%s7 + $0xf0] sm:$0xff]
  %v4063 = vld [vmem:[%s7 + $0xf8] sm:$0xff]
  %v4064 = vld [vmem:[%s8] sm:$0xff]
  %v4066 = vperm.slane %v4064, 0
  %v4067 = vperm.slane %v4064, 1
  %v4068 = vperm.slane %v4064, 2
  %v4069 = vperm.slane %v4064, 3
  %v4070 = vperm.slane %v4064, 4
  %v4071 = vperm.slane %v4064, 5
  %v4072 = vperm.slane %v4064, 6
  %v4073 = vperm.slane %v4064, 7
  %v4114 = vunpack.c.l.b16 %v4032
  %v4115 = vunpack.c.h.b16 %v4032
  %v4116 = vunpack.c.l.b16 %v4033
  %v4117 = vunpack.c.h.b16 %v4033
  %v4118 = vunpack.c.l.b16 %v4034
  %v4119 = vunpack.c.h.b16 %v4034
  %v4120 = vunpack.c.l.b16 %v4035
  %v4121 = vunpack.c.h.b16 %v4035
  %v4122 = vunpack.c.l.b16 %v4036
  %v4123 = vunpack.c.h.b16 %v4036
  %v4124 = vunpack.c.l.b16 %v4037
  %v4125 = vunpack.c.h.b16 %v4037
  %v4126 = vunpack.c.l.b16 %v4038
  %v4127 = vunpack.c.h.b16 %v4038
  %v4128 = vunpack.c.l.b16 %v4039
  %v4129 = vunpack.c.h.b16 %v4039
  %v4130 = vunpack.c.l.b16 %v4040
  %v4131 = vunpack.c.h.b16 %v4040
  %v4132 = vunpack.c.l.b16 %v4041
  %v4133 = vunpack.c.h.b16 %v4041
  %v4134 = vunpack.c.l.b16 %v4042
  %v4135 = vunpack.c.h.b16 %v4042
  %v4136 = vunpack.c.l.b16 %v4043
  %v4137 = vunpack.c.h.b16 %v4043
  %v4138 = vunpack.c.l.b16 %v4044
  %v4139 = vunpack.c.h.b16 %v4044
  %v4140 = vunpack.c.l.b16 %v4045
  %v4141 = vunpack.c.h.b16 %v4045
  %v4142 = vunpack.c.l.b16 %v4046
  %v4143 = vunpack.c.h.b16 %v4046
  %v4144 = vunpack.c.l.b16 %v4047
  %v4145 = vunpack.c.h.b16 %v4047
  %v4146 = vunpack.c.l.b16 %v4048
  %v4147 = vunpack.c.h.b16 %v4048
  %v4148 = vunpack.c.l.b16 %v4049
  %v4149 = vunpack.c.h.b16 %v4049
  %v4150 = vunpack.c.l.b16 %v4050
  %v4151 = vunpack.c.h.b16 %v4050
  %v4152 = vunpack.c.l.b16 %v4051
  %v4153 = vunpack.c.h.b16 %v4051
  %v4154 = vunpack.c.l.b16 %v4052
  %v4155 = vunpack.c.h.b16 %v4052
  %v4156 = vunpack.c.l.b16 %v4053
  %v4157 = vunpack.c.h.b16 %v4053
  %v4158 = vunpack.c.l.b16 %v4054
  %v4159 = vunpack.c.h.b16 %v4054
  %v4160 = vunpack.c.l.b16 %v4055
  %v4161 = vunpack.c.h.b16 %v4055
  %v4162 = vunpack.c.l.b16 %v4056
  %v4163 = vunpack.c.h.b16 %v4056
  %v4164 = vunpack.c.l.b16 %v4057
  %v4165 = vunpack.c.h.b16 %v4057
  %v4166 = vunpack.c.l.b16 %v4058
  %v4167 = vunpack.c.h.b16 %v4058
  %v4168 = vunpack.c.l.b16 %v4059
  %v4169 = vunpack.c.h.b16 %v4059
  %v4170 = vunpack.c.l.b16 %v4060
  %v4171 = vunpack.c.h.b16 %v4060
  %v4172 = vunpack.c.l.b16 %v4061
  %v4173 = vunpack.c.h.b16 %v4061
  %v4174 = vunpack.c.l.b16 %v4062
  %v4175 = vunpack.c.h.b16 %v4062
  %v4176 = vunpack.c.l.b16 %v4063
  %v4177 = vunpack.c.h.b16 %v4063
  %v4178 = vpack.c.b16 %v4122, %v4114
  %v4179 = vpack.c.b16 %v4123, %v4115
  %v4180 = vpack.c.b16 %v4124, %v4116
  %v4181 = vpack.c.b16 %v4125, %v4117
  %v4182 = vpack.c.b16 %v4126, %v4118
  %v4183 = vpack.c.b16 %v4127, %v4119
  %v4184 = vpack.c.b16 %v4128, %v4120
  %v4185 = vpack.c.b16 %v4129, %v4121
  %v4186 = vpack.c.b16 %v4138, %v4130
  %v4187 = vpack.c.b16 %v4139, %v4131
  %v4188 = vpack.c.b16 %v4140, %v4132
  %v4189 = vpack.c.b16 %v4141, %v4133
  %v4190 = vpack.c.b16 %v4142, %v4134
  %v4191 = vpack.c.b16 %v4143, %v4135
  %v4192 = vpack.c.b16 %v4144, %v4136
  %v4193 = vpack.c.b16 %v4145, %v4137
  %v4194 = vpack.c.b16 %v4154, %v4146
  %v4195 = vpack.c.b16 %v4155, %v4147
  %v4196 = vpack.c.b16 %v4156, %v4148
  %v4197 = vpack.c.b16 %v4157, %v4149
  %v4198 = vpack.c.b16 %v4158, %v4150
  %v4199 = vpack.c.b16 %v4159, %v4151
  %v4200 = vpack.c.b16 %v4160, %v4152
  %v4201 = vpack.c.b16 %v4161, %v4153
  %v4202 = vpack.c.b16 %v4170, %v4162
  %v4203 = vpack.c.b16 %v4171, %v4163
  %v4204 = vpack.c.b16 %v4172, %v4164
  %v4205 = vpack.c.b16 %v4173, %v4165
  %v4206 = vpack.c.b16 %v4174, %v4166
  %v4207 = vpack.c.b16 %v4175, %v4167
  %v4208 = vpack.c.b16 %v4176, %v4168
  %v4209 = vpack.c.b16 %v4177, %v4169
  %v4243 = vsel %vm3550, %v4031, 0
  %4245 = vmatpush.bf16.msra.mxu0 0
  %4246 = vmatpush.bf16.msra.mxu0 0
  %4247 = vmatpush.bf16.msra.mxu0 0
  %4248 = vmatpush.bf16.msra.mxu0 0
  %4249 = vmatpush.bf16.msra.mxu0 %v4202
  %4250 = vmatpush.bf16.msra.mxu0 %v4194
  %4251 = vmatpush.bf16.msra.mxu0 %v4186
  %4252 = vmatpush.bf16.msra.mxu0 %v4178
  %4253 = vmatmul.bf16.gmra.mxu0 %v4243
  %v4254 = vpop.f32.mrf.mxu0
  %v4255 = vadd.f32 %v4066, %v4254
  %v4256 = vpop.f32.mrf.mxu0
  %4257 = vdwg.mxu0
  %4258 = vmatpush.bf16.msra.mxu0 0
  %4259 = vmatpush.bf16.msra.mxu0 0
  %4260 = vmatpush.bf16.msra.mxu0 0
  %4261 = vmatpush.bf16.msra.mxu0 0
  %4262 = vmatpush.bf16.msra.mxu0 %v4203
  %4263 = vmatpush.bf16.msra.mxu0 %v4195
  %4264 = vmatpush.bf16.msra.mxu0 %v4187
  %4265 = vmatpush.bf16.msra.mxu0 %v4179
  %4266 = vmatmul.bf16.gmra.mxu0 %v4243
  %v4267 = vpop.f32.mrf.mxu0
  %v4268 = vadd.f32 %v4067, %v4267
  %v4269 = vpop.f32.mrf.mxu0
  %4270 = vdwg.mxu0
  %4271 = vmatpush.bf16.msra.mxu0 0
  %4272 = vmatpush.bf16.msra.mxu0 0
  %4273 = vmatpush.bf16.msra.mxu0 0
  %4274 = vmatpush.bf16.msra.mxu0 0
  %4275 = vmatpush.bf16.msra.mxu0 %v4204
  %4276 = vmatpush.bf16.msra.mxu0 %v4196
  %4277 = vmatpush.bf16.msra.mxu0 %v4188
  %4278 = vmatpush.bf16.msra.mxu0 %v4180
  %4279 = vmatmul.bf16.gmra.mxu0 %v4243
  %v4280 = vpop.f32.mrf.mxu0
  %v4281 = vadd.f32 %v4068, %v4280
  %v4282 = vpop.f32.mrf.mxu0
  %4283 = vdwg.mxu0
  %4284 = vmatpush.bf16.msra.mxu0 0
  %4285 = vmatpush.bf16.msra.mxu0 0
  %4286 = vmatpush.bf16.msra.mxu0 0
  %4287 = vmatpush.bf16.msra.mxu0 0
  %4288 = vmatpush.bf16.msra.mxu0 %v4205
  %4289 = vmatpush.bf16.msra.mxu0 %v4197
  %4290 = vmatpush.bf16.msra.mxu0 %v4189
  %4291 = vmatpush.bf16.msra.mxu0 %v4181
  %4292 = vmatmul.bf16.gmra.mxu0 %v4243
  %v4293 = vpop.f32.mrf.mxu0
  %v4294 = vadd.f32 %v4069, %v4293
  %v4295 = vpop.f32.mrf.mxu0
  %4296 = vdwg.mxu0
  %4297 = vmatpush.bf16.msra.mxu0 0
  %4298 = vmatpush.bf16.msra.mxu0 0
  %4299 = vmatpush.bf16.msra.mxu0 0
  %4300 = vmatpush.bf16.msra.mxu0 0
  %4301 = vmatpush.bf16.msra.mxu0 %v4206
  %4302 = vmatpush.bf16.msra.mxu0 %v4198
  %4303 = vmatpush.bf16.msra.mxu0 %v4190
  %4304 = vmatpush.bf16.msra.mxu0 %v4182
  %4305 = vmatmul.bf16.gmra.mxu0 %v4243
  %v4306 = vpop.f32.mrf.mxu0
  %v4307 = vadd.f32 %v4070, %v4306
  %v4308 = vpop.f32.mrf.mxu0
  %4309 = vdwg.mxu0
  %4310 = vmatpush.bf16.msra.mxu0 0
  %4311 = vmatpush.bf16.msra.mxu0 0
  %4312 = vmatpush.bf16.msra.mxu0 0
  %4313 = vmatpush.bf16.msra.mxu0 0
  %4314 = vmatpush.bf16.msra.mxu0 %v4207
  %4315 = vmatpush.bf16.msra.mxu0 %v4199
  %4316 = vmatpush.bf16.msra.mxu0 %v4191
  %4317 = vmatpush.bf16.msra.mxu0 %v4183
  %4318 = vmatmul.bf16.gmra.mxu0 %v4243
  %v4319 = vpop.f32.mrf.mxu0
  %v4320 = vadd.f32 %v4071, %v4319
  %v4321 = vpop.f32.mrf.mxu0
  %4322 = vdwg.mxu0
  %4323 = vmatpush.bf16.msra.mxu0 0
  %4324 = vmatpush.bf16.msra.mxu0 0
  %4325 = vmatpush.bf16.msra.mxu0 0
  %4326 = vmatpush.bf16.msra.mxu0 0
  %4327 = vmatpush.bf16.msra.mxu0 %v4208
  %4328 = vmatpush.bf16.msra.mxu0 %v4200
  %4329 = vmatpush.bf16.msra.mxu0 %v4192
  %4330 = vmatpush.bf16.msra.mxu0 %v4184
  %4331 = vmatmul.bf16.gmra.mxu0 %v4243
  %v4332 = vpop.f32.mrf.mxu0
  %v4333 = vadd.f32 %v4072, %v4332
  %v4334 = vpop.f32.mrf.mxu0
  %4335 = vdwg.mxu0
  %4336 = vmatpush.bf16.msra.mxu0 0
  %4337 = vmatpush.bf16.msra.mxu0 0
  %4338 = vmatpush.bf16.msra.mxu0 0
  %4339 = vmatpush.bf16.msra.mxu0 0
  %4340 = vmatpush.bf16.msra.mxu0 %v4209
  %4341 = vmatpush.bf16.msra.mxu0 %v4201
  %4342 = vmatpush.bf16.msra.mxu0 %v4193
  %4343 = vmatpush.bf16.msra.mxu0 %v4185
  %4344 = vmatmul.bf16.gmra.mxu0 %v4243
  %v4345 = vpop.f32.mrf.mxu0
  %v4346 = vadd.f32 %v4073, %v4345
  %v4347 = vpop.f32.mrf.mxu0
  %4348 = vdwg.mxu0
  %v4349 = vmax.f32 %v4255, 0.0
  %v4350 = vmax.f32 %v4268, 0.0
  %v4351 = vmax.f32 %v4281, 0.0
  %v4352 = vmax.f32 %v4294, 0.0
  %v4353 = vmax.f32 %v4307, 0.0
  %v4354 = vmax.f32 %v4320, 0.0
  %v4355 = vmax.f32 %v4333, 0.0
  %v4356 = vmax.f32 %v4346, 0.0
  %v4357 = vpack.c.bf16 %v4349, %v4349
  %v4358 = vpack.c.bf16 %v4350, %v4350
  %v4359 = vpack.c.bf16 %v4351, %v4351
  %v4360 = vpack.c.bf16 %v4352, %v4352
  %v4361 = vpack.c.bf16 %v4353, %v4353
  %v4362 = vpack.c.bf16 %v4354, %v4354
  %v4363 = vpack.c.bf16 %v4355, %v4355
  %v4364 = vpack.c.bf16 %v4356, %v4356
  %v4365 = vld [vmem:[%s9] sm:$0xf]
  %v4366 = vld [vmem:[%s9 + $0x4] sm:$0xf]
  %v4367 = vld [vmem:[%s9 + $0x8] sm:$0xf]
  %v4368 = vld [vmem:[%s9 + $0xc] sm:$0xf]
  %v4369 = vld [vmem:[%s9 + $0x10] sm:$0xf]
  %v4370 = vld [vmem:[%s9 + $0x14] sm:$0xf]
  %v4371 = vld [vmem:[%s9 + $0x18] sm:$0xf]
  %v4372 = vld [vmem:[%s9 + $0x1c] sm:$0xf]
  %v4373 = vld [vmem:[%s9 + $0x20] sm:$0xf]
  %v4374 = vld [vmem:[%s9 + $0x24] sm:$0xf]
  %v4375 = vld [vmem:[%s9 + $0x28] sm:$0xf]
  %v4376 = vld [vmem:[%s9 + $0x2c] sm:$0xf]
  %v4377 = vld [vmem:[%s9 + $0x30] sm:$0xf]
  %v4378 = vld [vmem:[%s9 + $0x34] sm:$0xf]
  %v4379 = vld [vmem:[%s9 + $0x38] sm:$0xf]
  %v4380 = vld [vmem:[%s9 + $0x3c] sm:$0xf]
  %v4381 = vld [vmem:[%s9 + $0x40] sm:$0xf]
  %v4382 = vld [vmem:[%s9 + $0x44] sm:$0xf]
  %v4383 = vld [vmem:[%s9 + $0x48] sm:$0xf]
  %v4384 = vld [vmem:[%s9 + $0x4c] sm:$0xf]
  %v4385 = vld [vmem:[%s9 + $0x50] sm:$0xf]
  %v4386 = vld [vmem:[%s9 + $0x54] sm:$0xf]
  %v4387 = vld [vmem:[%s9 + $0x58] sm:$0xf]
  %v4388 = vld [vmem:[%s9 + $0x5c] sm:$0xf]
  %v4389 = vld [vmem:[%s9 + $0x60] sm:$0xf]
  %v4390 = vld [vmem:[%s9 + $0x64] sm:$0xf]
  %v4391 = vld [vmem:[%s9 + $0x68] sm:$0xf]
  %v4392 = vld [vmem:[%s9 + $0x6c] sm:$0xf]
  %v4393 = vld [vmem:[%s9 + $0x70] sm:$0xf]
  %v4394 = vld [vmem:[%s9 + $0x74] sm:$0xf]
  %v4395 = vld [vmem:[%s9 + $0x78] sm:$0xf]
  %v4396 = vld [vmem:[%s9 + $0x7c] sm:$0xf]
  %v4397 = vld [vmem:[%s9 + $0x80] sm:$0xf]
  %v4398 = vld [vmem:[%s9 + $0x84] sm:$0xf]
  %v4399 = vld [vmem:[%s9 + $0x88] sm:$0xf]
  %v4400 = vld [vmem:[%s9 + $0x8c] sm:$0xf]
  %v4401 = vld [vmem:[%s9 + $0x90] sm:$0xf]
  %v4402 = vld [vmem:[%s9 + $0x94] sm:$0xf]
  %v4403 = vld [vmem:[%s9 + $0x98] sm:$0xf]
  %v4404 = vld [vmem:[%s9 + $0x9c] sm:$0xf]
  %v4405 = vld [vmem:[%s9 + $0xa0] sm:$0xf]
  %v4406 = vld [vmem:[%s9 + $0xa4] sm:$0xf]
  %v4407 = vld [vmem:[%s9 + $0xa8] sm:$0xf]
  %v4408 = vld [vmem:[%s9 + $0xac] sm:$0xf]
  %v4409 = vld [vmem:[%s9 + $0xb0] sm:$0xf]
  %v4410 = vld [vmem:[%s9 + $0xb4] sm:$0xf]
  %v4411 = vld [vmem:[%s9 + $0xb8] sm:$0xf]
  %v4412 = vld [vmem:[%s9 + $0xbc] sm:$0xf]
  %v4413 = vld [vmem:[%s9 + $0xc0] sm:$0xf]
  %v4414 = vld [vmem:[%s9 + $0xc4] sm:$0xf]
  %v4415 = vld [vmem:[%s9 + $0xc8] sm:$0xf]
  %v4416 = vld [vmem:[%s9 + $0xcc] sm:$0xf]
  %v4417 = vld [vmem:[%s9 + $0xd0] sm:$0xf]
  %v4418 = vld [vmem:[%s9 + $0xd4] sm:$0xf]
  %v4419 = vld [vmem:[%s9 + $0xd8] sm:$0xf]
  %v4420 = vld [vmem:[%s9 + $0xdc] sm:$0xf]
  %v4421 = vld [vmem:[%s9 + $0xe0] sm:$0xf]
  %v4422 = vld [vmem:[%s9 + $0xe4] sm:$0xf]
  %v4423 = vld [vmem:[%s9 + $0xe8] sm:$0xf]
  %v4424 = vld [vmem:[%s9 + $0xec] sm:$0xf]
  %v4425 = vld [vmem:[%s9 + $0xf0] sm:$0xf]
  %v4426 = vld [vmem:[%s9 + $0xf4] sm:$0xf]
  %v4427 = vld [vmem:[%s9 + $0xf8] sm:$0xf]
  %v4428 = vld [vmem:[%s9 + $0xfc] sm:$0xf]
  %v4429 = vld [vmem:[%s9 + $0x100] sm:$0xf]
  %v4430 = vld [vmem:[%s9 + $0x104] sm:$0xf]
  %v4431 = vld [vmem:[%s9 + $0x108] sm:$0xf]
  %v4432 = vld [vmem:[%s9 + $0x10c] sm:$0xf]
  %v4433 = vld [vmem:[%s9 + $0x110] sm:$0xf]
  %v4434 = vld [vmem:[%s9 + $0x114] sm:$0xf]
  %v4435 = vld [vmem:[%s9 + $0x118] sm:$0xf]
  %v4436 = vld [vmem:[%s9 + $0x11c] sm:$0xf]
  %v4437 = vld [vmem:[%s9 + $0x120] sm:$0xf]
  %v4438 = vld [vmem:[%s9 + $0x124] sm:$0xf]
  %v4439 = vld [vmem:[%s9 + $0x128] sm:$0xf]
  %v4440 = vld [vmem:[%s9 + $0x12c] sm:$0xf]
  %v4441 = vld [vmem:[%s9 + $0x130] sm:$0xf]
  %v4442 = vld [vmem:[%s9 + $0x134] sm:$0xf]
  %v4443 = vld [vmem:[%s9 + $0x138] sm:$0xf]
  %v4444 = vld [vmem:[%s9 + $0x13c] sm:$0xf]
  %v4445 = vld [vmem:[%s9 + $0x140] sm:$0xf]
  %v4446 = vld [vmem:[%s9 + $0x144] sm:$0xf]
  %v4447 = vld [vmem:[%s9 + $0x148] sm:$0xf]
  %v4448 = vld [vmem:[%s9 + $0x14c] sm:$0xf]
  %v4449 = vld [vmem:[%s9 + $0x150] sm:$0xf]
  %v4450 = vld [vmem:[%s9 + $0x154] sm:$0xf]
  %v4451 = vld [vmem:[%s9 + $0x158] sm:$0xf]
  %v4452 = vld [vmem:[%s9 + $0x15c] sm:$0xf]
  %v4453 = vld [vmem:[%s9 + $0x160] sm:$0xf]
  %v4454 = vld [vmem:[%s9 + $0x164] sm:$0xf]
  %v4455 = vld [vmem:[%s9 + $0x168] sm:$0xf]
  %v4456 = vld [vmem:[%s9 + $0x16c] sm:$0xf]
  %v4457 = vld [vmem:[%s9 + $0x170] sm:$0xf]
  %v4458 = vld [vmem:[%s9 + $0x174] sm:$0xf]
  %v4459 = vld [vmem:[%s9 + $0x178] sm:$0xf]
  %v4460 = vld [vmem:[%s9 + $0x17c] sm:$0xf]
  %v4461 = vld [vmem:[%s9 + $0x180] sm:$0xf]
  %v4462 = vld [vmem:[%s9 + $0x184] sm:$0xf]
  %v4463 = vld [vmem:[%s9 + $0x188] sm:$0xf]
  %v4464 = vld [vmem:[%s9 + $0x18c] sm:$0xf]
  %v4465 = vld [vmem:[%s9 + $0x190] sm:$0xf]
  %v4466 = vld [vmem:[%s9 + $0x194] sm:$0xf]
  %v4467 = vld [vmem:[%s9 + $0x198] sm:$0xf]
  %v4468 = vld [vmem:[%s9 + $0x19c] sm:$0xf]
  %v4469 = vld [vmem:[%s9 + $0x1a0] sm:$0xf]
  %v4470 = vld [vmem:[%s9 + $0x1a4] sm:$0xf]
  %v4471 = vld [vmem:[%s9 + $0x1a8] sm:$0xf]
  %v4472 = vld [vmem:[%s9 + $0x1ac] sm:$0xf]
  %v4473 = vld [vmem:[%s9 + $0x1b0] sm:$0xf]
  %v4474 = vld [vmem:[%s9 + $0x1b4] sm:$0xf]
  %v4475 = vld [vmem:[%s9 + $0x1b8] sm:$0xf]
  %v4476 = vld [vmem:[%s9 + $0x1bc] sm:$0xf]
  %v4477 = vld [vmem:[%s9 + $0x1c0] sm:$0xf]
  %v4478 = vld [vmem:[%s9 + $0x1c4] sm:$0xf]
  %v4479 = vld [vmem:[%s9 + $0x1c8] sm:$0xf]
  %v4480 = vld [vmem:[%s9 + $0x1cc] sm:$0xf]
  %v4481 = vld [vmem:[%s9 + $0x1d0] sm:$0xf]
  %v4482 = vld [vmem:[%s9 + $0x1d4] sm:$0xf]
  %v4483 = vld [vmem:[%s9 + $0x1d8] sm:$0xf]
  %v4484 = vld [vmem:[%s9 + $0x1dc] sm:$0xf]
  %v4485 = vld [vmem:[%s9 + $0x1e0] sm:$0xf]
  %v4486 = vld [vmem:[%s9 + $0x1e4] sm:$0xf]
  %v4487 = vld [vmem:[%s9 + $0x1e8] sm:$0xf]
  %v4488 = vld [vmem:[%s9 + $0x1ec] sm:$0xf]
  %v4489 = vld [vmem:[%s9 + $0x1f0] sm:$0xf]
  %v4490 = vld [vmem:[%s9 + $0x1f4] sm:$0xf]
  %v4491 = vld [vmem:[%s9 + $0x1f8] sm:$0xf]
  %v4492 = vld [vmem:[%s9 + $0x1fc] sm:$0xf]
  %v4493 = vld [vmem:[%s10] sm:$0x1]
  %v4495 = vperm.slane %v4493, 0
  %v4625 = vunpack.c.l.b16 %v4365
  %v4626 = vunpack.c.l.b16 %v4366
  %v4627 = vunpack.c.l.b16 %v4367
  %v4628 = vunpack.c.l.b16 %v4368
  %v4629 = vunpack.c.l.b16 %v4369
  %v4630 = vunpack.c.l.b16 %v4370
  %v4631 = vunpack.c.l.b16 %v4371
  %v4632 = vunpack.c.l.b16 %v4372
  %v4633 = vunpack.c.l.b16 %v4373
  %v4634 = vunpack.c.l.b16 %v4374
  %v4635 = vunpack.c.l.b16 %v4375
  %v4636 = vunpack.c.l.b16 %v4376
  %v4637 = vunpack.c.l.b16 %v4377
  %v4638 = vunpack.c.l.b16 %v4378
  %v4639 = vunpack.c.l.b16 %v4379
  %v4640 = vunpack.c.l.b16 %v4380
  %v4641 = vunpack.c.l.b16 %v4381
  %v4642 = vunpack.c.l.b16 %v4382
  %v4643 = vunpack.c.l.b16 %v4383
  %v4644 = vunpack.c.l.b16 %v4384
  %v4645 = vunpack.c.l.b16 %v4385
  %v4646 = vunpack.c.l.b16 %v4386
  %v4647 = vunpack.c.l.b16 %v4387
  %v4648 = vunpack.c.l.b16 %v4388
  %v4649 = vunpack.c.l.b16 %v4389
  %v4650 = vunpack.c.l.b16 %v4390
  %v4651 = vunpack.c.l.b16 %v4391
  %v4652 = vunpack.c.l.b16 %v4392
  %v4653 = vunpack.c.l.b16 %v4393
  %v4654 = vunpack.c.l.b16 %v4394
  %v4655 = vunpack.c.l.b16 %v4395
  %v4656 = vunpack.c.l.b16 %v4396
  %v4657 = vunpack.c.l.b16 %v4397
  %v4658 = vunpack.c.l.b16 %v4398
  %v4659 = vunpack.c.l.b16 %v4399
  %v4660 = vunpack.c.l.b16 %v4400
  %v4661 = vunpack.c.l.b16 %v4401
  %v4662 = vunpack.c.l.b16 %v4402
  %v4663 = vunpack.c.l.b16 %v4403
  %v4664 = vunpack.c.l.b16 %v4404
  %v4665 = vunpack.c.l.b16 %v4405
  %v4666 = vunpack.c.l.b16 %v4406
  %v4667 = vunpack.c.l.b16 %v4407
  %v4668 = vunpack.c.l.b16 %v4408
  %v4669 = vunpack.c.l.b16 %v4409
  %v4670 = vunpack.c.l.b16 %v4410
  %v4671 = vunpack.c.l.b16 %v4411
  %v4672 = vunpack.c.l.b16 %v4412
  %v4673 = vunpack.c.l.b16 %v4413
  %v4674 = vunpack.c.l.b16 %v4414
  %v4675 = vunpack.c.l.b16 %v4415
  %v4676 = vunpack.c.l.b16 %v4416
  %v4677 = vunpack.c.l.b16 %v4417
  %v4678 = vunpack.c.l.b16 %v4418
  %v4679 = vunpack.c.l.b16 %v4419
  %v4680 = vunpack.c.l.b16 %v4420
  %v4681 = vunpack.c.l.b16 %v4421
  %v4682 = vunpack.c.l.b16 %v4422
  %v4683 = vunpack.c.l.b16 %v4423
  %v4684 = vunpack.c.l.b16 %v4424
  %v4685 = vunpack.c.l.b16 %v4425
  %v4686 = vunpack.c.l.b16 %v4426
  %v4687 = vunpack.c.l.b16 %v4427
  %v4688 = vunpack.c.l.b16 %v4428
  %v4689 = vunpack.c.l.b16 %v4429
  %v4690 = vunpack.c.l.b16 %v4430
  %v4691 = vunpack.c.l.b16 %v4431
  %v4692 = vunpack.c.l.b16 %v4432
  %v4693 = vunpack.c.l.b16 %v4433
  %v4694 = vunpack.c.l.b16 %v4434
  %v4695 = vunpack.c.l.b16 %v4435
  %v4696 = vunpack.c.l.b16 %v4436
  %v4697 = vunpack.c.l.b16 %v4437
  %v4698 = vunpack.c.l.b16 %v4438
  %v4699 = vunpack.c.l.b16 %v4439
  %v4700 = vunpack.c.l.b16 %v4440
  %v4701 = vunpack.c.l.b16 %v4441
  %v4702 = vunpack.c.l.b16 %v4442
  %v4703 = vunpack.c.l.b16 %v4443
  %v4704 = vunpack.c.l.b16 %v4444
  %v4705 = vunpack.c.l.b16 %v4445
  %v4706 = vunpack.c.l.b16 %v4446
  %v4707 = vunpack.c.l.b16 %v4447
  %v4708 = vunpack.c.l.b16 %v4448
  %v4709 = vunpack.c.l.b16 %v4449
  %v4710 = vunpack.c.l.b16 %v4450
  %v4711 = vunpack.c.l.b16 %v4451
  %v4712 = vunpack.c.l.b16 %v4452
  %v4713 = vunpack.c.l.b16 %v4453
  %v4714 = vunpack.c.l.b16 %v4454
  %v4715 = vunpack.c.l.b16 %v4455
  %v4716 = vunpack.c.l.b16 %v4456
  %v4717 = vunpack.c.l.b16 %v4457
  %v4718 = vunpack.c.l.b16 %v4458
  %v4719 = vunpack.c.l.b16 %v4459
  %v4720 = vunpack.c.l.b16 %v4460
  %v4721 = vunpack.c.l.b16 %v4461
  %v4722 = vunpack.c.l.b16 %v4462
  %v4723 = vunpack.c.l.b16 %v4463
  %v4724 = vunpack.c.l.b16 %v4464
  %v4725 = vunpack.c.l.b16 %v4465
  %v4726 = vunpack.c.l.b16 %v4466
  %v4727 = vunpack.c.l.b16 %v4467
  %v4728 = vunpack.c.l.b16 %v4468
  %v4729 = vunpack.c.l.b16 %v4469
  %v4730 = vunpack.c.l.b16 %v4470
  %v4731 = vunpack.c.l.b16 %v4471
  %v4732 = vunpack.c.l.b16 %v4472
  %v4733 = vunpack.c.l.b16 %v4473
  %v4734 = vunpack.c.l.b16 %v4474
  %v4735 = vunpack.c.l.b16 %v4475
  %v4736 = vunpack.c.l.b16 %v4476
  %v4737 = vunpack.c.l.b16 %v4477
  %v4738 = vunpack.c.l.b16 %v4478
  %v4739 = vunpack.c.l.b16 %v4479
  %v4740 = vunpack.c.l.b16 %v4480
  %v4741 = vunpack.c.l.b16 %v4481
  %v4742 = vunpack.c.l.b16 %v4482
  %v4743 = vunpack.c.l.b16 %v4483
  %v4744 = vunpack.c.l.b16 %v4484
  %v4745 = vunpack.c.l.b16 %v4485
  %v4746 = vunpack.c.l.b16 %v4486
  %v4747 = vunpack.c.l.b16 %v4487
  %v4748 = vunpack.c.l.b16 %v4488
  %v4749 = vunpack.c.l.b16 %v4489
  %v4750 = vunpack.c.l.b16 %v4490
  %v4751 = vunpack.c.l.b16 %v4491
  %v4752 = vunpack.c.l.b16 %v4492
  %v4753 = vpack.c.b16 %v4626, %v4625
  %v4754 = vpack.c.b16 %v4628, %v4627
  %v4755 = vpack.c.b16 %v4630, %v4629
  %v4756 = vpack.c.b16 %v4632, %v4631
  %v4757 = vpack.c.b16 %v4634, %v4633
  %v4758 = vpack.c.b16 %v4636, %v4635
  %v4759 = vpack.c.b16 %v4638, %v4637
  %v4760 = vpack.c.b16 %v4640, %v4639
  %v4761 = vpack.c.b16 %v4642, %v4641
  %v4762 = vpack.c.b16 %v4644, %v4643
  %v4763 = vpack.c.b16 %v4646, %v4645
  %v4764 = vpack.c.b16 %v4648, %v4647
  %v4765 = vpack.c.b16 %v4650, %v4649
  %v4766 = vpack.c.b16 %v4652, %v4651
  %v4767 = vpack.c.b16 %v4654, %v4653
  %v4768 = vpack.c.b16 %v4656, %v4655
  %v4769 = vpack.c.b16 %v4658, %v4657
  %v4770 = vpack.c.b16 %v4660, %v4659
  %v4771 = vpack.c.b16 %v4662, %v4661
  %v4772 = vpack.c.b16 %v4664, %v4663
  %v4773 = vpack.c.b16 %v4666, %v4665
  %v4774 = vpack.c.b16 %v4668, %v4667
  %v4775 = vpack.c.b16 %v4670, %v4669
  %v4776 = vpack.c.b16 %v4672, %v4671
  %v4777 = vpack.c.b16 %v4674, %v4673
  %v4778 = vpack.c.b16 %v4676, %v4675
  %v4779 = vpack.c.b16 %v4678, %v4677
  %v4780 = vpack.c.b16 %v4680, %v4679
  %v4781 = vpack.c.b16 %v4682, %v4681
  %v4782 = vpack.c.b16 %v4684, %v4683
  %v4783 = vpack.c.b16 %v4686, %v4685
  %v4784 = vpack.c.b16 %v4688, %v4687
  %v4785 = vpack.c.b16 %v4690, %v4689
  %v4786 = vpack.c.b16 %v4692, %v4691
  %v4787 = vpack.c.b16 %v4694, %v4693
  %v4788 = vpack.c.b16 %v4696, %v4695
  %v4789 = vpack.c.b16 %v4698, %v4697
  %v4790 = vpack.c.b16 %v4700, %v4699
  %v4791 = vpack.c.b16 %v4702, %v4701
  %v4792 = vpack.c.b16 %v4704, %v4703
  %v4793 = vpack.c.b16 %v4706, %v4705
  %v4794 = vpack.c.b16 %v4708, %v4707
  %v4795 = vpack.c.b16 %v4710, %v4709
  %v4796 = vpack.c.b16 %v4712, %v4711
  %v4797 = vpack.c.b16 %v4714, %v4713
  %v4798 = vpack.c.b16 %v4716, %v4715
  %v4799 = vpack.c.b16 %v4718, %v4717
  %v4800 = vpack.c.b16 %v4720, %v4719
  %v4801 = vpack.c.b16 %v4722, %v4721
  %v4802 = vpack.c.b16 %v4724, %v4723
  %v4803 = vpack.c.b16 %v4726, %v4725
  %v4804 = vpack.c.b16 %v4728, %v4727
  %v4805 = vpack.c.b16 %v4730, %v4729
  %v4806 = vpack.c.b16 %v4732, %v4731
  %v4807 = vpack.c.b16 %v4734, %v4733
  %v4808 = vpack.c.b16 %v4736, %v4735
  %v4809 = vpack.c.b16 %v4738, %v4737
  %v4810 = vpack.c.b16 %v4740, %v4739
  %v4811 = vpack.c.b16 %v4742, %v4741
  %v4812 = vpack.c.b16 %v4744, %v4743
  %v4813 = vpack.c.b16 %v4746, %v4745
  %v4814 = vpack.c.b16 %v4748, %v4747
  %v4815 = vpack.c.b16 %v4750, %v4749
  %v4816 = vpack.c.b16 %v4752, %v4751
  %4881 = vmatpush.bf16.msra.mxu0 %v4760
  %4882 = vmatpush.bf16.msra.mxu0 %v4759
  %4883 = vmatpush.bf16.msra.mxu0 %v4758
  %4884 = vmatpush.bf16.msra.mxu0 %v4757
  %4885 = vmatpush.bf16.msra.mxu0 %v4756
  %4886 = vmatpush.bf16.msra.mxu0 %v4755
  %4887 = vmatpush.bf16.msra.mxu0 %v4754
  %4888 = vmatpush.bf16.msra.mxu0 %v4753
  %4889 = vmatmul.bf16.gmra.mxu0 %v4357
  %v4890 = vpop.f32.mrf.mxu0
  %v4891 = vadd.f32 %v4495, %v4890
  %v4892 = vpop.f32.mrf.mxu0
  %4893 = vdwg.mxu0
  %4894 = vmatpush.bf16.msra.mxu0 %v4768
  %4895 = vmatpush.bf16.msra.mxu0 %v4767
  %4896 = vmatpush.bf16.msra.mxu0 %v4766
  %4897 = vmatpush.bf16.msra.mxu0 %v4765
  %4898 = vmatpush.bf16.msra.mxu0 %v4764
  %4899 = vmatpush.bf16.msra.mxu0 %v4763
  %4900 = vmatpush.bf16.msra.mxu0 %v4762
  %4901 = vmatpush.bf16.msra.mxu0 %v4761
  %4902 = vmatmul.bf16.gmra.mxu0 %v4358
  %v4903 = vpop.f32.mrf.mxu0
  %v4904 = vadd.f32 %v4891, %v4903
  %v4905 = vpop.f32.mrf.mxu0
  %4906 = vdwg.mxu0
  %4907 = vmatpush.bf16.msra.mxu0 %v4776
  %4908 = vmatpush.bf16.msra.mxu0 %v4775
  %4909 = vmatpush.bf16.msra.mxu0 %v4774
  %4910 = vmatpush.bf16.msra.mxu0 %v4773
  %4911 = vmatpush.bf16.msra.mxu0 %v4772
  %4912 = vmatpush.bf16.msra.mxu0 %v4771
  %4913 = vmatpush.bf16.msra.mxu0 %v4770
  %4914 = vmatpush.bf16.msra.mxu0 %v4769
  %4915 = vmatmul.bf16.gmra.mxu0 %v4359
  %v4916 = vpop.f32.mrf.mxu0
  %v4917 = vadd.f32 %v4904, %v4916
  %v4918 = vpop.f32.mrf.mxu0
  %4919 = vdwg.mxu0
  %4920 = vmatpush.bf16.msra.mxu0 %v4784
  %4921 = vmatpush.bf16.msra.mxu0 %v4783
  %4922 = vmatpush.bf16.msra.mxu0 %v4782
  %4923 = vmatpush.bf16.msra.mxu0 %v4781
  %4924 = vmatpush.bf16.msra.mxu0 %v4780
  %4925 = vmatpush.bf16.msra.mxu0 %v4779
  %4926 = vmatpush.bf16.msra.mxu0 %v4778
  %4927 = vmatpush.bf16.msra.mxu0 %v4777
  %4928 = vmatmul.bf16.gmra.mxu0 %v4360
  %v4929 = vpop.f32.mrf.mxu0
  %v4930 = vadd.f32 %v4917, %v4929
  %v4931 = vpop.f32.mrf.mxu0
  %4932 = vdwg.mxu0
  %4933 = vmatpush.bf16.msra.mxu0 %v4792
  %4934 = vmatpush.bf16.msra.mxu0 %v4791
  %4935 = vmatpush.bf16.msra.mxu0 %v4790
  %4936 = vmatpush.bf16.msra.mxu0 %v4789
  %4937 = vmatpush.bf16.msra.mxu0 %v4788
  %4938 = vmatpush.bf16.msra.mxu0 %v4787
  %4939 = vmatpush.bf16.msra.mxu0 %v4786
  %4940 = vmatpush.bf16.msra.mxu0 %v4785
  %4941 = vmatmul.bf16.gmra.mxu0 %v4361
  %v4942 = vpop.f32.mrf.mxu0
  %v4943 = vadd.f32 %v4930, %v4942
  %v4944 = vpop.f32.mrf.mxu0
  %4945 = vdwg.mxu0
  %4946 = vmatpush.bf16.msra.mxu0 %v4800
  %4947 = vmatpush.bf16.msra.mxu0 %v4799
  %4948 = vmatpush.bf16.msra.mxu0 %v4798
  %4949 = vmatpush.bf16.msra.mxu0 %v4797
  %4950 = vmatpush.bf16.msra.mxu0 %v4796
  %4951 = vmatpush.bf16.msra.mxu0 %v4795
  %4952 = vmatpush.bf16.msra.mxu0 %v4794
  %4953 = vmatpush.bf16.msra.mxu0 %v4793
  %4954 = vmatmul.bf16.gmra.mxu0 %v4362
  %v4955 = vpop.f32.mrf.mxu0
  %v4956 = vadd.f32 %v4943, %v4955
  %v4957 = vpop.f32.mrf.mxu0
  %4958 = vdwg.mxu0
  %4959 = vmatpush.bf16.msra.mxu0 %v4808
  %4960 = vmatpush.bf16.msra.mxu0 %v4807
  %4961 = vmatpush.bf16.msra.mxu0 %v4806
  %4962 = vmatpush.bf16.msra.mxu0 %v4805
  %4963 = vmatpush.bf16.msra.mxu0 %v4804
  %4964 = vmatpush.bf16.msra.mxu0 %v4803
  %4965 = vmatpush.bf16.msra.mxu0 %v4802
  %4966 = vmatpush.bf16.msra.mxu0 %v4801
  %4967 = vmatmul.bf16.gmra.mxu0 %v4363
  %v4968 = vpop.f32.mrf.mxu0
  %v4969 = vadd.f32 %v4956, %v4968
  %v4970 = vpop.f32.mrf.mxu0
  %4971 = vdwg.mxu0
  %4972 = vmatpush.bf16.msra.mxu0 %v4816
  %4973 = vmatpush.bf16.msra.mxu0 %v4815
  %4974 = vmatpush.bf16.msra.mxu0 %v4814
  %4975 = vmatpush.bf16.msra.mxu0 %v4813
  %4976 = vmatpush.bf16.msra.mxu0 %v4812
  %4977 = vmatpush.bf16.msra.mxu0 %v4811
  %4978 = vmatpush.bf16.msra.mxu0 %v4810
  %4979 = vmatpush.bf16.msra.mxu0 %v4809
  %4980 = vmatmul.bf16.gmra.mxu0 %v4364
  %v4981 = vpop.f32.mrf.mxu0
  %v4982 = vadd.f32 %v4969, %v4981
  %v4983 = vpop.f32.mrf.mxu0
  %4984 = vdwg.mxu0
  %v4985 = vlaneseq
  %v4986 = vshrl.u32 %v4985, 7
  %vm4987 = vcmp.lt.s32.totalorder %v4986, 2
  %v4988 = vsel %vm4987, %v4982, 0.0
  %vm4989 = vcmask 48128
  %v4990 = vsel %vm4989, %v4988, 0.0
  %4991 = vadd.xlane.f32.xlu0 %v4990
  %v4992 = vpop.xlane.xlu0 %4991
  %v4993 = vrot.slane %v4992, 4
  %v4994 = vadd.f32 %v4992, %v4993
  %v4995 = vrot.slane %v4994, 2
  %v4996 = vadd.f32 %v4994, %v4995
  %v4997 = vrot.slane %v4996, 1
  %v4998 = vadd.f32 %v4996, %v4997
  %s4999 = vtos %v4998
  %s5000 = smul.f32 %s4999, 0.083333336
  %5002 = vset.pattern.permute.xlu0 6
  %5003 = vperm.xlu0 %5002, %v4982
  %v5004 = vpop.permute.xlu0 %5003
  %v5006 = vadd.f32 %v5004, %v4982
  %v5007 = vstv %s5000
  %v5008 = vsub.f32 %v5006, %v5007
  %5009 = vst.msk [vmem:[%s11] sm:$0xff] %vm4989, %v5008
  // Predicated region
  $region46: #{dueling_dqn_forward.1} parent=0 // pred_check
    _
  $region47: #{dueling_dqn_forward.1} parent=0 // pred_check_branch
    %5011 = sbr.rel (0) target = $region49
  $region48: #{dueling_dqn_forward.1} parent=0 // pred_region
    _
  $region49: #{dueling_dqn_forward.1} parent=0 // pred_fallthru
    _
  // Predicated region
  $region50: #{dueling_dqn_forward.1} parent=0 // pred_check
    _
  $region51: #{dueling_dqn_forward.1} parent=0 // pred_check_branch
    %5013 = sbr.rel (0) target = $region53
  $region52: #{dueling_dqn_forward.1} parent=0 // pred_region
    _
  $region53: #{dueling_dqn_forward.1} parent=0 // pred_fallthru
    _

</llo_original>
